<compile_context>
chip_gen: v7x
topology: tpu7x:2x2x1
jax: 0.10.0
libtpu: 0.0.40
codegen_flags: <defaults>
</compile_context>

<pallas_src>
import math
from functools import partial

import jax
import jax.numpy as jnp
from jax.experimental import pallas as pl
from jax.experimental.pallas import tpu as pltpu


def _layernorm(x, g, b, eps=1e-5):
    mu = jnp.mean(x, axis=-1, keepdims=True)
    var = jnp.mean(jnp.square(x - mu), axis=-1, keepdims=True)
    return (x - mu) * jax.lax.rsqrt(var + eps) * g + b


def _sa_epi_kernel(tok_ref,
                   w_sa_ref, w_epi_ref,
                   g_sa_ref, b_sa_ref, g_epi_ref, b_epi_ref,
                   wq_ref, wk_ref, wv_ref, wo_ref,
                   g_ff_ref, b_ff_ref, w_ff1_ref, w_ff2_ref,
                   w_out_ref,
                   out_ref, *, num_heads, head_dim, c2, compute_dtype):
    f32 = jnp.float32
    cd = compute_dtype
    TN, L, _ = tok_ref.shape
    M = TN * L
    E = wq_ref.shape[1]

    tok = tok_ref[...]                              # (TN, L, c)
    epi_raw = tok[:, :, c2:]                        # pass-through half

    x_sa = tok[:, :, :c2].reshape(M, c2).astype(cd)
    x_epi = epi_raw.reshape(M, c2).astype(cd)

    # --- linear-in over the whole (TN*L, .) slab (bf16 MXU, f32 accumulate) ---
    sa = jnp.dot(x_sa, w_sa_ref[...], preferred_element_type=f32)      # (M, E)
    epi = jnp.dot(x_epi, w_epi_ref[...], preferred_element_type=f32)   # (M, E)

    sa_n = _layernorm(sa, g_sa_ref[...], b_sa_ref[...])                # f32 stats
    epi_n = _layernorm(epi, g_epi_ref[...], b_epi_ref[...])

    # --- cross attention: query = epi_norm, key = sa_norm, value = sa (pre-norm) ---
    scale = 1.0 / math.sqrt(head_dim)
    q = jnp.dot(epi_n.astype(cd), wq_ref[...], preferred_element_type=f32) * scale
    k = jnp.dot(sa_n.astype(cd), wk_ref[...], preferred_element_type=f32)
    v = jnp.dot(sa.astype(cd), wv_ref[...], preferred_element_type=f32)

    q3 = q.reshape(TN, L, E).astype(cd)
    k3 = k.reshape(TN, L, E).astype(cd)
    v3 = v.reshape(TN, L, E).astype(cd)

    # Per-head attention, batched over TN via dot_general batch dims (static
    # unrolled head loop).  Head outputs are collected and lane-concatenated so
    # the output projection is a single full-E-contraction matmul.
    o_heads = []
    for hh in range(num_heads):
        sl = slice(hh * head_dim, (hh + 1) * head_dim)
        qh, kh, vh = q3[:, :, sl], k3[:, :, sl], v3[:, :, sl]
        s = jnp.einsum('bqd,bkd->bqk', qh, kh,
                       preferred_element_type=f32)                     # (TN,L,L)
        s = s - jnp.max(s, axis=-1, keepdims=True)                     # f32 max
        p = jnp.exp(s)
        denom = jnp.sum(p, axis=-1, keepdims=True)                     # f32 sum
        p = p * pl.reciprocal(denom, approx=True)                      # EUP divide
        o = jnp.einsum('bqk,bkd->bqd', p.astype(cd), vh,
                       preferred_element_type=f32)                     # (TN,L,hd)
        o_heads.append(o.astype(cd))

    o_all = jnp.concatenate(o_heads, axis=-1).reshape(M, E)            # (M, E)
    attn = jnp.dot(o_all, wo_ref[...], preferred_element_type=f32)     # (M, E)

    sa = attn + sa                                                     # residual 1

    # --- feed-forward: LayerNorm -> Linear -> ReLU -> Linear, + residual ---
    ff = _layernorm(sa, g_ff_ref[...], b_ff_ref[...])
    ff = jnp.maximum(jnp.dot(ff.astype(cd), w_ff1_ref[...],
                             preferred_element_type=f32), 0.0)
    ff = jnp.dot(ff.astype(cd), w_ff2_ref[...], preferred_element_type=f32)
    sa = ff + sa                                                       # residual 2

    out_sa = jnp.dot(sa.astype(cd), w_out_ref[...], preferred_element_type=f32)
    out_sa = out_sa.reshape(TN, L, c2).astype(out_ref.dtype)

    # Single full-block store: processed half + pass-through half concatenated
    # in-register (avoids two masked half-lane store streams).
    out_ref[...] = jnp.concatenate([out_sa, epi_raw.astype(out_ref.dtype)],
                                   axis=-1)


def _choose_tn(N, L, c, E, act_budget_bytes=4 << 20):
    """Largest divisor of N whose per-step f32 activation slab fits the budget."""
    per_n = 4 * (L * (2 * c + 15 * E) + 3 * L * L)   # rough f32 bytes per batch item
    cap = max(1, act_budget_bytes // max(per_n, 1))
    tn = 1
    for t in range(1, N + 1):
        if N % t == 0 and t <= cap:
            tn = t
    if tn == N and N > 1:   # keep >= 2 grid steps so v7x's two TensorCores get work
        for t in range(tn - 1, 0, -1):
            if N % t == 0:
                tn = t
                break
    return tn


def sa_epi_cross_attention_trans(buffer, params, num_heads,
                                 compute_dtype=jnp.bfloat16):
    b, c, u, v, h, w = buffer.shape
    c2 = c // 2
    E = params["w_sa"].shape[1]
    head_dim = E // num_heads
    N, L = b * u * h, v * w

    # Single input layout pass: (b,c,u,v,h,w) -> (N, L, c) tokens.
    tok = jnp.transpose(buffer, (0, 2, 4, 3, 5, 1)).reshape(N, L, c)

    TN = _choose_tn(N, L, c, E)
    grid = (N // TN,)

    # Matmul weights in bf16 (f32 accumulation on the MXU); LN params stay f32.
    def to_cd(x):
        return x.astype(compute_dtype)

    weights = [
        to_cd(params["w_sa"]), to_cd(params["w_epi"]),
        params["g_sa"], params["b_sa"], params["g_epi"], params["b_epi"],
        to_cd(params["wq"]), to_cd(params["wk"]), to_cd(params["wv"]),
        to_cd(params["wo"]),
        params["g_ff"], params["b_ff"],
        to_cd(params["w_ff1"]), to_cd(params["w_ff2"]),
        to_cd(params["w_out"]),
    ]

    def full_spec(arr):
        nd = arr.ndim
        return pl.BlockSpec(arr.shape, lambda n, _nd=nd: (0,) * _nd)

    tok_spec = pl.BlockSpec((TN, L, c), lambda n: (n, 0, 0))

    # Explicit VMEM budget so v7x's 64 MiB doesn't silently spill.
    weight_bytes = sum(int(x.size) * x.dtype.itemsize for x in weights)
    block_bytes = TN * L * c * buffer.dtype.itemsize
    act_bytes = 4 * TN * (L * (2 * c + 15 * E) + 3 * L * L)
    vmem_limit = int(min(max(2 * (weight_bytes + 4 * block_bytes) + act_bytes,
                             16 << 20), 48 << 20))

    kernel = partial(_sa_epi_kernel, num_heads=num_heads, head_dim=head_dim,
                     c2=c2, compute_dtype=compute_dtype)

    out_tok = pl.pallas_call(
        kernel,
        grid_spec=pltpu.PrefetchScalarGridSpec(
            num_scalar_prefetch=0,
            grid=grid,
            in_specs=[tok_spec] + [full_spec(wt) for wt in weights],
            out_specs=pl.BlockSpec((TN, L, c), lambda n: (n, 0, 0)),
        ),
        out_shape=jax.ShapeDtypeStruct((N, L, c), buffer.dtype),
        compiler_params=pltpu.CompilerParams(
            dimension_semantics=("parallel",),
            vmem_limit_bytes=vmem_limit),
    )(tok, *weights)

    # Single output layout pass back to (b, c, u, v, h, w).
    out = out_tok.reshape(b, u, h, v, w, c)
    return jnp.transpose(out, (0, 5, 1, 3, 2, 4))


def reference(buffer, params, num_heads):
    """Pure-JAX (f32) replica of the torch forward (eval mode) for verification."""
    b, c, u, v, h, w = buffer.shape
    c2 = c // 2
    E = params["w_sa"].shape[1]
    hd = E // num_heads

    token = jnp.transpose(buffer, (3, 5, 0, 2, 4, 1)).reshape(v * w, b * u * h, c)
    sa_t, epi_t = token[:, :, :c2], token[:, :, c2:]
    sa = sa_t @ params["w_sa"]
    epi = epi_t @ params["w_epi"]

    def ln(x, g, bb):
        mu = x.mean(-1, keepdims=True)
        var = ((x - mu) ** 2).mean(-1, keepdims=True)
        return (x - mu) / jnp.sqrt(var + 1e-5) * g + bb

    sa_n = ln(sa, params["g_sa"], params["b_sa"])
    epi_n = ln(epi, params["g_epi"], params["b_epi"])

    q = epi_n @ params["wq"]
    k = sa_n @ params["wk"]
    vv = sa @ params["wv"]
    L, N, _ = q.shape

    def split(x):  # (L, N, E) -> (N, H, L, hd)
        return x.reshape(L, N, num_heads, hd).transpose(1, 2, 0, 3)

    qh, kh, vh = split(q), split(k), split(vv)
    s = jnp.einsum('nhqd,nhkd->nhqk', qh, kh) / math.sqrt(hd)
    p = jax.nn.softmax(s, axis=-1)
    o = jnp.einsum('nhqk,nhkd->nhqd', p, vh)
    o = o.transpose(2, 0, 1, 3).reshape(L, N, E)
    attn = o @ params["wo"]

    sa = attn + sa
    ff = ln(sa, params["g_ff"], params["b_ff"])
    ff = jnp.maximum(ff @ params["w_ff1"], 0.0) @ params["w_ff2"]
    sa = ff + sa
    sa = sa @ params["w_out"]

    out_tok = jnp.concatenate([sa, epi_t], axis=2)
    out = out_tok.reshape(v, w, b, u, h, c)
    return jnp.transpose(out, (2, 5, 3, 0, 4, 1))


def init_params(key, channels, emb_dim):
    c2 = channels // 2
    ks = jax.random.split(key, 8)

    def lin(k, fan_in, fan_out):
        bound = 1.0 / math.sqrt(fan_in)
        # weights stored already transposed: (in_features, out_features), y = x @ W
        return jax.random.uniform(k, (fan_in, fan_out), jnp.float32, -bound, bound)

    kq, kk, kv = jax.random.split(ks[2], 3)
    return {
        "w_sa": lin(ks[0], c2, emb_dim),
        "w_epi": lin(ks[1], c2, emb_dim),
        "g_sa": jnp.ones((1, emb_dim), jnp.float32),
        "b_sa": jnp.zeros((1, emb_dim), jnp.float32),
        "g_epi": jnp.ones((1, emb_dim), jnp.float32),
        "b_epi": jnp.zeros((1, emb_dim), jnp.float32),
        "wq": lin(kq, emb_dim, emb_dim),
        "wk": lin(kk, emb_dim, emb_dim),
        "wv": lin(kv, emb_dim, emb_dim),
        "wo": lin(ks[3], emb_dim, emb_dim),
        "g_ff": jnp.ones((1, emb_dim), jnp.float32),
        "b_ff": jnp.zeros((1, emb_dim), jnp.float32),
        "w_ff1": lin(ks[4], emb_dim, emb_dim * 2),
        "w_ff2": lin(ks[5], emb_dim * 2, emb_dim),
        "w_out": lin(ks[6], emb_dim, c2),
    }


if __name__ == "__main__":
    key = jax.random.PRNGKey(0)
    # buffer shape (b, c, u, v, h, w); c must be even, emb_dim % num_heads == 0
    b, c, u, v, h, w = 2, 8, 2, 4, 2, 4
    emb_dim, num_heads = 32, 4

    k_buf, k_par = jax.random.split(key)
    buffer = jax.random.normal(k_buf, (b, c, u, v, h, w), jnp.float32)
    params = init_params(k_par, c, emb_dim)

    fwd = jax.jit(partial(sa_epi_cross_attention_trans, num_heads=num_heads))
    out = fwd(buffer, params)
    out = jax.block_until_ready(out)

    ref = reference(buffer, params, num_heads)
    assert out.shape == (b, c, u, v, h, w)
    max_err = float(jnp.max(jnp.abs(out - ref)))
    # bf16 matmul operands (f32 MXU accumulation) + approx softmax reciprocal
    # vs. an f32 reference -> relaxed tolerance.
    if max_err > 5e-2:
        raise SystemExit(f"mismatch vs reference: max abs err = {max_err}")
    print("KERNEL_OK")
</pallas_src>

<mosaic_0001>
module attributes {stable_mosaic.version = 11 : i64} {
  func.func @_sa_epi_kernel(%arg0: i32, %arg1: memref<4x16x8xf32, #tpu.memory_space<vmem>>, %arg2: memref<4x32xbf16, #tpu.memory_space<vmem>>, %arg3: memref<4x32xbf16, #tpu.memory_space<vmem>>, %arg4: memref<1x32xf32, #tpu.memory_space<vmem>>, %arg5: memref<1x32xf32, #tpu.memory_space<vmem>>, %arg6: memref<1x32xf32, #tpu.memory_space<vmem>>, %arg7: memref<1x32xf32, #tpu.memory_space<vmem>>, %arg8: memref<32x32xbf16, #tpu.memory_space<vmem>>, %arg9: memref<32x32xbf16, #tpu.memory_space<vmem>>, %arg10: memref<32x32xbf16, #tpu.memory_space<vmem>>, %arg11: memref<32x32xbf16, #tpu.memory_space<vmem>>, %arg12: memref<1x32xf32, #tpu.memory_space<vmem>>, %arg13: memref<1x32xf32, #tpu.memory_space<vmem>>, %arg14: memref<32x64xbf16, #tpu.memory_space<vmem>>, %arg15: memref<64x32xbf16, #tpu.memory_space<vmem>>, %arg16: memref<32x4xbf16, #tpu.memory_space<vmem>>, %arg17: memref<4x16x8xf32, #tpu.memory_space<vmem>>) attributes {dimension_semantics = [#tpu.dimension_semantics<parallel>], iteration_bounds = array<i64: 2>, scalar_prefetch = 0 : i64, scratch_operands = 0 : i64, tpu.core_type = #tpu.core_type<tc>, window_params = [{transform_indices = @transform_0, window_bounds = array<i64: 4, 16, 8>}, {pipeline_mode = #tpu.pipeline_mode<synchronous>, transform_indices = @transform_1, window_bounds = array<i64: 4, 32>}, {pipeline_mode = #tpu.pipeline_mode<synchronous>, transform_indices = @transform_2, window_bounds = array<i64: 4, 32>}, {pipeline_mode = #tpu.pipeline_mode<synchronous>, transform_indices = @transform_3, window_bounds = array<i64: 1, 32>}, {pipeline_mode = #tpu.pipeline_mode<synchronous>, transform_indices = @transform_4, window_bounds = array<i64: 1, 32>}, {pipeline_mode = #tpu.pipeline_mode<synchronous>, transform_indices = @transform_5, window_bounds = array<i64: 1, 32>}, {pipeline_mode = #tpu.pipeline_mode<synchronous>, transform_indices = @transform_6, window_bounds = array<i64: 1, 32>}, {pipeline_mode = #tpu.pipeline_mode<synchronous>, transform_indices = @transform_7, window_bounds = array<i64: 32, 32>}, {pipeline_mode = #tpu.pipeline_mode<synchronous>, transform_indices = @transform_8, window_bounds = array<i64: 32, 32>}, {pipeline_mode = #tpu.pipeline_mode<synchronous>, transform_indices = @transform_9, window_bounds = array<i64: 32, 32>}, {pipeline_mode = #tpu.pipeline_mode<synchronous>, transform_indices = @transform_10, window_bounds = array<i64: 32, 32>}, {pipeline_mode = #tpu.pipeline_mode<synchronous>, transform_indices = @transform_11, window_bounds = array<i64: 1, 32>}, {pipeline_mode = #tpu.pipeline_mode<synchronous>, transform_indices = @transform_12, window_bounds = array<i64: 1, 32>}, {pipeline_mode = #tpu.pipeline_mode<synchronous>, transform_indices = @transform_13, window_bounds = array<i64: 32, 64>}, {pipeline_mode = #tpu.pipeline_mode<synchronous>, transform_indices = @transform_14, window_bounds = array<i64: 64, 32>}, {pipeline_mode = #tpu.pipeline_mode<synchronous>, transform_indices = @transform_15, window_bounds = array<i64: 32, 4>}, {transform_indices = @transform_16, window_bounds = array<i64: 4, 16, 8>}]} {
    %c0 = arith.constant 0 : index
    %c0_0 = arith.constant 0 : index
    %c0_1 = arith.constant 0 : index
    %0 = vector.load %arg1[%c0, %c0_0, %c0_1] : memref<4x16x8xf32, #tpu.memory_space<vmem>>, vector<4x16x8xf32>
    %1 = vector.extract_strided_slice %0 {offsets = [0, 0, 4], sizes = [4, 16, 4], strides = [1, 1, 1]} : vector<4x16x8xf32> to vector<4x16x4xf32>
    %2 = vector.extract_strided_slice %0 {offsets = [0, 0, 0], sizes = [4, 16, 4], strides = [1, 1, 1]} : vector<4x16x8xf32> to vector<4x16x4xf32>
    %3 = vector.shape_cast %2 : vector<4x16x4xf32> to vector<64x4xf32>
    %4 = arith.truncf %3 : vector<64x4xf32> to vector<64x4xbf16>
    %5 = vector.shape_cast %1 : vector<4x16x4xf32> to vector<64x4xf32>
    %6 = arith.truncf %5 : vector<64x4xf32> to vector<64x4xbf16>
    %c0_2 = arith.constant 0 : index
    %c0_3 = arith.constant 0 : index
    %7 = vector.load %arg2[%c0_2, %c0_3] : memref<4x32xbf16, #tpu.memory_space<vmem>>, vector<4x32xbf16>
    %cst = arith.constant dense<0.000000e+00> : vector<64x32xf32>
    %8 = tpu.matmul %4, %7, %cst {dimension_numbers = #tpu.dot_dimension_numbers<[1], [0], [0], [1], [0, 0, 1, 1], [], []>} : vector<64x4xbf16>, vector<4x32xbf16>, vector<64x32xf32> -> vector<64x32xf32>
    %c0_4 = arith.constant 0 : index
    %c0_5 = arith.constant 0 : index
    %9 = vector.load %arg3[%c0_4, %c0_5] : memref<4x32xbf16, #tpu.memory_space<vmem>>, vector<4x32xbf16>
    %cst_6 = arith.constant dense<0.000000e+00> : vector<64x32xf32>
    %10 = tpu.matmul %6, %9, %cst_6 {dimension_numbers = #tpu.dot_dimension_numbers<[1], [0], [0], [1], [0, 0, 1, 1], [], []>} : vector<64x4xbf16>, vector<4x32xbf16>, vector<64x32xf32> -> vector<64x32xf32>
    %c0_7 = arith.constant 0 : index
    %c0_8 = arith.constant 0 : index
    %11 = vector.load %arg4[%c0_7, %c0_8] : memref<1x32xf32, #tpu.memory_space<vmem>>, vector<1x32xf32>
    %c0_9 = arith.constant 0 : index
    %c0_10 = arith.constant 0 : index
    %12 = vector.load %arg5[%c0_9, %c0_10] : memref<1x32xf32, #tpu.memory_space<vmem>>, vector<1x32xf32>
    %cst_11 = arith.constant dense<0.000000e+00> : vector<64xf32>
    %13 = vector.multi_reduction <add>, %8, %cst_11 [1] : vector<64x32xf32> to vector<64xf32>
    %14 = vector.shape_cast %13 : vector<64xf32> to vector<64x1xf32>
    %cst_12 = arith.constant 3.200000e+01 : f32
    %15 = vector.broadcast %cst_12 : f32 to vector<64x1xf32>
    %16 = arith.divf %14, %15 : vector<64x1xf32>
    %17 = vector.broadcast %16 : vector<64x1xf32> to vector<64x32xf32>
    %18 = arith.subf %8, %17 : vector<64x32xf32>
    %19 = arith.mulf %18, %18 : vector<64x32xf32>
    %cst_13 = arith.constant dense<0.000000e+00> : vector<64xf32>
    %20 = vector.multi_reduction <add>, %19, %cst_13 [1] : vector<64x32xf32> to vector<64xf32>
    %21 = vector.shape_cast %20 : vector<64xf32> to vector<64x1xf32>
    %cst_14 = arith.constant 3.200000e+01 : f32
    %22 = vector.broadcast %cst_14 : f32 to vector<64x1xf32>
    %23 = arith.divf %21, %22 : vector<64x1xf32>
    %24 = vector.broadcast %16 : vector<64x1xf32> to vector<64x32xf32>
    %25 = arith.subf %8, %24 : vector<64x32xf32>
    %cst_15 = arith.constant 9.99999974E-6 : f32
    %26 = vector.broadcast %cst_15 : f32 to vector<64x1xf32>
    %27 = arith.addf %23, %26 : vector<64x1xf32>
    %28 = math.rsqrt %27 : vector<64x1xf32>
    %29 = vector.broadcast %28 : vector<64x1xf32> to vector<64x32xf32>
    %30 = arith.mulf %25, %29 : vector<64x32xf32>
    %31 = vector.broadcast %11 : vector<1x32xf32> to vector<64x32xf32>
    %32 = arith.mulf %30, %31 : vector<64x32xf32>
    %33 = vector.broadcast %12 : vector<1x32xf32> to vector<64x32xf32>
    %34 = arith.addf %32, %33 : vector<64x32xf32>
    %c0_16 = arith.constant 0 : index
    %c0_17 = arith.constant 0 : index
    %35 = vector.load %arg6[%c0_16, %c0_17] : memref<1x32xf32, #tpu.memory_space<vmem>>, vector<1x32xf32>
    %c0_18 = arith.constant 0 : index
    %c0_19 = arith.constant 0 : index
    %36 = vector.load %arg7[%c0_18, %c0_19] : memref<1x32xf32, #tpu.memory_space<vmem>>, vector<1x32xf32>
    %cst_20 = arith.constant dense<0.000000e+00> : vector<64xf32>
    %37 = vector.multi_reduction <add>, %10, %cst_20 [1] : vector<64x32xf32> to vector<64xf32>
    %38 = vector.shape_cast %37 : vector<64xf32> to vector<64x1xf32>
    %cst_21 = arith.constant 3.200000e+01 : f32
    %39 = vector.broadcast %cst_21 : f32 to vector<64x1xf32>
    %40 = arith.divf %38, %39 : vector<64x1xf32>
    %41 = vector.broadcast %40 : vector<64x1xf32> to vector<64x32xf32>
    %42 = arith.subf %10, %41 : vector<64x32xf32>
    %43 = arith.mulf %42, %42 : vector<64x32xf32>
    %cst_22 = arith.constant dense<0.000000e+00> : vector<64xf32>
    %44 = vector.multi_reduction <add>, %43, %cst_22 [1] : vector<64x32xf32> to vector<64xf32>
    %45 = vector.shape_cast %44 : vector<64xf32> to vector<64x1xf32>
    %cst_23 = arith.constant 3.200000e+01 : f32
    %46 = vector.broadcast %cst_23 : f32 to vector<64x1xf32>
    %47 = arith.divf %45, %46 : vector<64x1xf32>
    %48 = vector.broadcast %40 : vector<64x1xf32> to vector<64x32xf32>
    %49 = arith.subf %10, %48 : vector<64x32xf32>
    %cst_24 = arith.constant 9.99999974E-6 : f32
    %50 = vector.broadcast %cst_24 : f32 to vector<64x1xf32>
    %51 = arith.addf %47, %50 : vector<64x1xf32>
    %52 = math.rsqrt %51 : vector<64x1xf32>
    %53 = vector.broadcast %52 : vector<64x1xf32> to vector<64x32xf32>
    %54 = arith.mulf %49, %53 : vector<64x32xf32>
    %55 = vector.broadcast %35 : vector<1x32xf32> to vector<64x32xf32>
    %56 = arith.mulf %54, %55 : vector<64x32xf32>
    %57 = vector.broadcast %36 : vector<1x32xf32> to vector<64x32xf32>
    %58 = arith.addf %56, %57 : vector<64x32xf32>
    %59 = arith.truncf %58 : vector<64x32xf32> to vector<64x32xbf16>
    %c0_25 = arith.constant 0 : index
    %c0_26 = arith.constant 0 : index
    %60 = vector.load %arg8[%c0_25, %c0_26] : memref<32x32xbf16, #tpu.memory_space<vmem>>, vector<32x32xbf16>
    %cst_27 = arith.constant dense<0.000000e+00> : vector<64x32xf32>
    %61 = tpu.matmul %59, %60, %cst_27 {dimension_numbers = #tpu.dot_dimension_numbers<[1], [0], [0], [1], [0, 0, 1, 1], [], []>} : vector<64x32xbf16>, vector<32x32xbf16>, vector<64x32xf32> -> vector<64x32xf32>
    %cst_28 = arith.constant 0.353553385 : f32
    %62 = vector.broadcast %cst_28 : f32 to vector<64x32xf32>
    %63 = arith.mulf %61, %62 : vector<64x32xf32>
    %64 = arith.truncf %34 : vector<64x32xf32> to vector<64x32xbf16>
    %c0_29 = arith.constant 0 : index
    %c0_30 = arith.constant 0 : index
    %65 = vector.load %arg9[%c0_29, %c0_30] : memref<32x32xbf16, #tpu.memory_space<vmem>>, vector<32x32xbf16>
    %cst_31 = arith.constant dense<0.000000e+00> : vector<64x32xf32>
    %66 = tpu.matmul %64, %65, %cst_31 {dimension_numbers = #tpu.dot_dimension_numbers<[1], [0], [0], [1], [0, 0, 1, 1], [], []>} : vector<64x32xbf16>, vector<32x32xbf16>, vector<64x32xf32> -> vector<64x32xf32>
    %67 = arith.truncf %8 : vector<64x32xf32> to vector<64x32xbf16>
    %c0_32 = arith.constant 0 : index
    %c0_33 = arith.constant 0 : index
    %68 = vector.load %arg10[%c0_32, %c0_33] : memref<32x32xbf16, #tpu.memory_space<vmem>>, vector<32x32xbf16>
    %cst_34 = arith.constant dense<0.000000e+00> : vector<64x32xf32>
    %69 = tpu.matmul %67, %68, %cst_34 {dimension_numbers = #tpu.dot_dimension_numbers<[1], [0], [0], [1], [0, 0, 1, 1], [], []>} : vector<64x32xbf16>, vector<32x32xbf16>, vector<64x32xf32> -> vector<64x32xf32>
    %70 = vector.shape_cast %63 : vector<64x32xf32> to vector<4x16x32xf32>
    %71 = arith.truncf %70 : vector<4x16x32xf32> to vector<4x16x32xbf16>
    %72 = vector.shape_cast %66 : vector<64x32xf32> to vector<4x16x32xf32>
    %73 = arith.truncf %72 : vector<4x16x32xf32> to vector<4x16x32xbf16>
    %74 = vector.shape_cast %69 : vector<64x32xf32> to vector<4x16x32xf32>
    %75 = arith.truncf %74 : vector<4x16x32xf32> to vector<4x16x32xbf16>
    %76 = vector.extract_strided_slice %71 {offsets = [0, 0, 0], sizes = [4, 16, 8], strides = [1, 1, 1]} : vector<4x16x32xbf16> to vector<4x16x8xbf16>
    %77 = vector.extract_strided_slice %73 {offsets = [0, 0, 0], sizes = [4, 16, 8], strides = [1, 1, 1]} : vector<4x16x32xbf16> to vector<4x16x8xbf16>
    %78 = vector.extract_strided_slice %75 {offsets = [0, 0, 0], sizes = [4, 16, 8], strides = [1, 1, 1]} : vector<4x16x32xbf16> to vector<4x16x8xbf16>
    "tpu.trace_start"() <{level = 10 : i32, message = "bqd,bkd->bqk"}> : () -> ()
    %cst_35 = arith.constant dense<0.000000e+00> : vector<4x16x16xf32>
    %79 = tpu.matmul %76, %77, %cst_35 {dimension_numbers = #tpu.dot_dimension_numbers<[2], [2], [1], [1], [0, 0, 0, 1, 1, 1], [0], [0]>} : vector<4x16x8xbf16>, vector<4x16x8xbf16>, vector<4x16x16xf32> -> vector<4x16x16xf32>
    "tpu.trace_stop"() : () -> ()
    %cst_36 = arith.constant dense<0xFF800000> : vector<4x16xf32>
    %80 = vector.multi_reduction <maximumf>, %79, %cst_36 [2] : vector<4x16x16xf32> to vector<4x16xf32>
    %81 = vector.shape_cast %80 : vector<4x16xf32> to vector<4x16x1xf32>
    %82 = vector.broadcast %81 : vector<4x16x1xf32> to vector<4x16x16xf32>
    %83 = arith.subf %79, %82 : vector<4x16x16xf32>
    %84 = math.exp %83 : vector<4x16x16xf32>
    %cst_37 = arith.constant dense<0.000000e+00> : vector<4x16xf32>
    %85 = vector.multi_reduction <add>, %84, %cst_37 [2] : vector<4x16x16xf32> to vector<4x16xf32>
    %86 = vector.shape_cast %85 : vector<4x16xf32> to vector<4x16x1xf32>
    %87 = tpu.reciprocal %86 {approx = true} : vector<4x16x1xf32> -> vector<4x16x1xf32>
    %88 = vector.broadcast %87 : vector<4x16x1xf32> to vector<4x16x16xf32>
    %89 = arith.mulf %84, %88 : vector<4x16x16xf32>
    %90 = arith.truncf %89 : vector<4x16x16xf32> to vector<4x16x16xbf16>
    "tpu.trace_start"() <{level = 10 : i32, message = "bqk,bkd->bqd"}> : () -> ()
    %cst_38 = arith.constant dense<0.000000e+00> : vector<4x16x8xf32>
    %91 = tpu.matmul %90, %78, %cst_38 {dimension_numbers = #tpu.dot_dimension_numbers<[2], [1], [1], [2], [0, 0, 0, 1, 1, 2], [0], [0]>} : vector<4x16x16xbf16>, vector<4x16x8xbf16>, vector<4x16x8xf32> -> vector<4x16x8xf32>
    "tpu.trace_stop"() : () -> ()
    %92 = arith.truncf %91 : vector<4x16x8xf32> to vector<4x16x8xbf16>
    %93 = vector.extract_strided_slice %71 {offsets = [0, 0, 8], sizes = [4, 16, 8], strides = [1, 1, 1]} : vector<4x16x32xbf16> to vector<4x16x8xbf16>
    %94 = vector.extract_strided_slice %73 {offsets = [0, 0, 8], sizes = [4, 16, 8], strides = [1, 1, 1]} : vector<4x16x32xbf16> to vector<4x16x8xbf16>
    %95 = vector.extract_strided_slice %75 {offsets = [0, 0, 8], sizes = [4, 16, 8], strides = [1, 1, 1]} : vector<4x16x32xbf16> to vector<4x16x8xbf16>
    "tpu.trace_start"() <{level = 10 : i32, message = "bqd,bkd->bqk"}> : () -> ()
    %cst_39 = arith.constant dense<0.000000e+00> : vector<4x16x16xf32>
    %96 = tpu.matmul %93, %94, %cst_39 {dimension_numbers = #tpu.dot_dimension_numbers<[2], [2], [1], [1], [0, 0, 0, 1, 1, 1], [0], [0]>} : vector<4x16x8xbf16>, vector<4x16x8xbf16>, vector<4x16x16xf32> -> vector<4x16x16xf32>
    "tpu.trace_stop"() : () -> ()
    %cst_40 = arith.constant dense<0xFF800000> : vector<4x16xf32>
    %97 = vector.multi_reduction <maximumf>, %96, %cst_40 [2] : vector<4x16x16xf32> to vector<4x16xf32>
    %98 = vector.shape_cast %97 : vector<4x16xf32> to vector<4x16x1xf32>
    %99 = vector.broadcast %98 : vector<4x16x1xf32> to vector<4x16x16xf32>
    %100 = arith.subf %96, %99 : vector<4x16x16xf32>
    %101 = math.exp %100 : vector<4x16x16xf32>
    %cst_41 = arith.constant dense<0.000000e+00> : vector<4x16xf32>
    %102 = vector.multi_reduction <add>, %101, %cst_41 [2] : vector<4x16x16xf32> to vector<4x16xf32>
    %103 = vector.shape_cast %102 : vector<4x16xf32> to vector<4x16x1xf32>
    %104 = tpu.reciprocal %103 {approx = true} : vector<4x16x1xf32> -> vector<4x16x1xf32>
    %105 = vector.broadcast %104 : vector<4x16x1xf32> to vector<4x16x16xf32>
    %106 = arith.mulf %101, %105 : vector<4x16x16xf32>
    %107 = arith.truncf %106 : vector<4x16x16xf32> to vector<4x16x16xbf16>
    "tpu.trace_start"() <{level = 10 : i32, message = "bqk,bkd->bqd"}> : () -> ()
    %cst_42 = arith.constant dense<0.000000e+00> : vector<4x16x8xf32>
    %108 = tpu.matmul %107, %95, %cst_42 {dimension_numbers = #tpu.dot_dimension_numbers<[2], [1], [1], [2], [0, 0, 0, 1, 1, 2], [0], [0]>} : vector<4x16x16xbf16>, vector<4x16x8xbf16>, vector<4x16x8xf32> -> vector<4x16x8xf32>
    "tpu.trace_stop"() : () -> ()
    %109 = arith.truncf %108 : vector<4x16x8xf32> to vector<4x16x8xbf16>
    %110 = vector.extract_strided_slice %71 {offsets = [0, 0, 16], sizes = [4, 16, 8], strides = [1, 1, 1]} : vector<4x16x32xbf16> to vector<4x16x8xbf16>
    %111 = vector.extract_strided_slice %73 {offsets = [0, 0, 16], sizes = [4, 16, 8], strides = [1, 1, 1]} : vector<4x16x32xbf16> to vector<4x16x8xbf16>
    %112 = vector.extract_strided_slice %75 {offsets = [0, 0, 16], sizes = [4, 16, 8], strides = [1, 1, 1]} : vector<4x16x32xbf16> to vector<4x16x8xbf16>
    "tpu.trace_start"() <{level = 10 : i32, message = "bqd,bkd->bqk"}> : () -> ()
    %cst_43 = arith.constant dense<0.000000e+00> : vector<4x16x16xf32>
    %113 = tpu.matmul %110, %111, %cst_43 {dimension_numbers = #tpu.dot_dimension_numbers<[2], [2], [1], [1], [0, 0, 0, 1, 1, 1], [0], [0]>} : vector<4x16x8xbf16>, vector<4x16x8xbf16>, vector<4x16x16xf32> -> vector<4x16x16xf32>
    "tpu.trace_stop"() : () -> ()
    %cst_44 = arith.constant dense<0xFF800000> : vector<4x16xf32>
    %114 = vector.multi_reduction <maximumf>, %113, %cst_44 [2] : vector<4x16x16xf32> to vector<4x16xf32>
    %115 = vector.shape_cast %114 : vector<4x16xf32> to vector<4x16x1xf32>
    %116 = vector.broadcast %115 : vector<4x16x1xf32> to vector<4x16x16xf32>
    %117 = arith.subf %113, %116 : vector<4x16x16xf32>
    %118 = math.exp %117 : vector<4x16x16xf32>
    %cst_45 = arith.constant dense<0.000000e+00> : vector<4x16xf32>
    %119 = vector.multi_reduction <add>, %118, %cst_45 [2] : vector<4x16x16xf32> to vector<4x16xf32>
    %120 = vector.shape_cast %119 : vector<4x16xf32> to vector<4x16x1xf32>
    %121 = tpu.reciprocal %120 {approx = true} : vector<4x16x1xf32> -> vector<4x16x1xf32>
    %122 = vector.broadcast %121 : vector<4x16x1xf32> to vector<4x16x16xf32>
    %123 = arith.mulf %118, %122 : vector<4x16x16xf32>
    %124 = arith.truncf %123 : vector<4x16x16xf32> to vector<4x16x16xbf16>
    "tpu.trace_start"() <{level = 10 : i32, message = "bqk,bkd->bqd"}> : () -> ()
    %cst_46 = arith.constant dense<0.000000e+00> : vector<4x16x8xf32>
    %125 = tpu.matmul %124, %112, %cst_46 {dimension_numbers = #tpu.dot_dimension_numbers<[2], [1], [1], [2], [0, 0, 0, 1, 1, 2], [0], [0]>} : vector<4x16x16xbf16>, vector<4x16x8xbf16>, vector<4x16x8xf32> -> vector<4x16x8xf32>
    "tpu.trace_stop"() : () -> ()
    %126 = arith.truncf %125 : vector<4x16x8xf32> to vector<4x16x8xbf16>
    %127 = vector.extract_strided_slice %71 {offsets = [0, 0, 24], sizes = [4, 16, 8], strides = [1, 1, 1]} : vector<4x16x32xbf16> to vector<4x16x8xbf16>
    %128 = vector.extract_strided_slice %73 {offsets = [0, 0, 24], sizes = [4, 16, 8], strides = [1, 1, 1]} : vector<4x16x32xbf16> to vector<4x16x8xbf16>
    %129 = vector.extract_strided_slice %75 {offsets = [0, 0, 24], sizes = [4, 16, 8], strides = [1, 1, 1]} : vector<4x16x32xbf16> to vector<4x16x8xbf16>
    "tpu.trace_start"() <{level = 10 : i32, message = "bqd,bkd->bqk"}> : () -> ()
    %cst_47 = arith.constant dense<0.000000e+00> : vector<4x16x16xf32>
    %130 = tpu.matmul %127, %128, %cst_47 {dimension_numbers = #tpu.dot_dimension_numbers<[2], [2], [1], [1], [0, 0, 0, 1, 1, 1], [0], [0]>} : vector<4x16x8xbf16>, vector<4x16x8xbf16>, vector<4x16x16xf32> -> vector<4x16x16xf32>
    "tpu.trace_stop"() : () -> ()
    %cst_48 = arith.constant dense<0xFF800000> : vector<4x16xf32>
    %131 = vector.multi_reduction <maximumf>, %130, %cst_48 [2] : vector<4x16x16xf32> to vector<4x16xf32>
    %132 = vector.shape_cast %131 : vector<4x16xf32> to vector<4x16x1xf32>
    %133 = vector.broadcast %132 : vector<4x16x1xf32> to vector<4x16x16xf32>
    %134 = arith.subf %130, %133 : vector<4x16x16xf32>
    %135 = math.exp %134 : vector<4x16x16xf32>
    %cst_49 = arith.constant dense<0.000000e+00> : vector<4x16xf32>
    %136 = vector.multi_reduction <add>, %135, %cst_49 [2] : vector<4x16x16xf32> to vector<4x16xf32>
    %137 = vector.shape_cast %136 : vector<4x16xf32> to vector<4x16x1xf32>
    %138 = tpu.reciprocal %137 {approx = true} : vector<4x16x1xf32> -> vector<4x16x1xf32>
    %139 = vector.broadcast %138 : vector<4x16x1xf32> to vector<4x16x16xf32>
    %140 = arith.mulf %135, %139 : vector<4x16x16xf32>
    %141 = arith.truncf %140 : vector<4x16x16xf32> to vector<4x16x16xbf16>
    "tpu.trace_start"() <{level = 10 : i32, message = "bqk,bkd->bqd"}> : () -> ()
    %cst_50 = arith.constant dense<0.000000e+00> : vector<4x16x8xf32>
    %142 = tpu.matmul %141, %129, %cst_50 {dimension_numbers = #tpu.dot_dimension_numbers<[2], [1], [1], [2], [0, 0, 0, 1, 1, 2], [0], [0]>} : vector<4x16x16xbf16>, vector<4x16x8xbf16>, vector<4x16x8xf32> -> vector<4x16x8xf32>
    "tpu.trace_stop"() : () -> ()
    %143 = arith.truncf %142 : vector<4x16x8xf32> to vector<4x16x8xbf16>
    %144 = tpu.concatenate %92, %109, %126, %143 in 2 : vector<4x16x8xbf16>, vector<4x16x8xbf16>, vector<4x16x8xbf16>, vector<4x16x8xbf16> -> vector<4x16x32xbf16>
    %145 = vector.shape_cast %144 : vector<4x16x32xbf16> to vector<64x32xbf16>
    %c0_51 = arith.constant 0 : index
    %c0_52 = arith.constant 0 : index
    %146 = vector.load %arg11[%c0_51, %c0_52] : memref<32x32xbf16, #tpu.memory_space<vmem>>, vector<32x32xbf16>
    %cst_53 = arith.constant dense<0.000000e+00> : vector<64x32xf32>
    %147 = tpu.matmul %145, %146, %cst_53 {dimension_numbers = #tpu.dot_dimension_numbers<[1], [0], [0], [1], [0, 0, 1, 1], [], []>} : vector<64x32xbf16>, vector<32x32xbf16>, vector<64x32xf32> -> vector<64x32xf32>
    %148 = arith.addf %147, %8 : vector<64x32xf32>
    %c0_54 = arith.constant 0 : index
    %c0_55 = arith.constant 0 : index
    %149 = vector.load %arg12[%c0_54, %c0_55] : memref<1x32xf32, #tpu.memory_space<vmem>>, vector<1x32xf32>
    %c0_56 = arith.constant 0 : index
    %c0_57 = arith.constant 0 : index
    %150 = vector.load %arg13[%c0_56, %c0_57] : memref<1x32xf32, #tpu.memory_space<vmem>>, vector<1x32xf32>
    %cst_58 = arith.constant dense<0.000000e+00> : vector<64xf32>
    %151 = vector.multi_reduction <add>, %148, %cst_58 [1] : vector<64x32xf32> to vector<64xf32>
    %152 = vector.shape_cast %151 : vector<64xf32> to vector<64x1xf32>
    %cst_59 = arith.constant 3.200000e+01 : f32
    %153 = vector.broadcast %cst_59 : f32 to vector<64x1xf32>
    %154 = arith.divf %152, %153 : vector<64x1xf32>
    %155 = vector.broadcast %154 : vector<64x1xf32> to vector<64x32xf32>
    %156 = arith.subf %148, %155 : vector<64x32xf32>
    %157 = arith.mulf %156, %156 : vector<64x32xf32>
    %cst_60 = arith.constant dense<0.000000e+00> : vector<64xf32>
    %158 = vector.multi_reduction <add>, %157, %cst_60 [1] : vector<64x32xf32> to vector<64xf32>
    %159 = vector.shape_cast %158 : vector<64xf32> to vector<64x1xf32>
    %cst_61 = arith.constant 3.200000e+01 : f32
    %160 = vector.broadcast %cst_61 : f32 to vector<64x1xf32>
    %161 = arith.divf %159, %160 : vector<64x1xf32>
    %162 = vector.broadcast %154 : vector<64x1xf32> to vector<64x32xf32>
    %163 = arith.subf %148, %162 : vector<64x32xf32>
    %cst_62 = arith.constant 9.99999974E-6 : f32
    %164 = vector.broadcast %cst_62 : f32 to vector<64x1xf32>
    %165 = arith.addf %161, %164 : vector<64x1xf32>
    %166 = math.rsqrt %165 : vector<64x1xf32>
    %167 = vector.broadcast %166 : vector<64x1xf32> to vector<64x32xf32>
    %168 = arith.mulf %163, %167 : vector<64x32xf32>
    %169 = vector.broadcast %149 : vector<1x32xf32> to vector<64x32xf32>
    %170 = arith.mulf %168, %169 : vector<64x32xf32>
    %171 = vector.broadcast %150 : vector<1x32xf32> to vector<64x32xf32>
    %172 = arith.addf %170, %171 : vector<64x32xf32>
    %173 = arith.truncf %172 : vector<64x32xf32> to vector<64x32xbf16>
    %c0_63 = arith.constant 0 : index
    %c0_64 = arith.constant 0 : index
    %174 = vector.load %arg14[%c0_63, %c0_64] : memref<32x64xbf16, #tpu.memory_space<vmem>>, vector<32x64xbf16>
    %cst_65 = arith.constant dense<0.000000e+00> : vector<64x64xf32>
    %175 = tpu.matmul %173, %174, %cst_65 {dimension_numbers = #tpu.dot_dimension_numbers<[1], [0], [0], [1], [0, 0, 1, 1], [], []>} : vector<64x32xbf16>, vector<32x64xbf16>, vector<64x64xf32> -> vector<64x64xf32>
    %cst_66 = arith.constant 0.000000e+00 : f32
    %176 = vector.broadcast %cst_66 : f32 to vector<64x64xf32>
    %177 = arith.maximumf %175, %176 : vector<64x64xf32>
    %178 = arith.truncf %177 : vector<64x64xf32> to vector<64x64xbf16>
    %c0_67 = arith.constant 0 : index
    %c0_68 = arith.constant 0 : index
    %179 = vector.load %arg15[%c0_67, %c0_68] : memref<64x32xbf16, #tpu.memory_space<vmem>>, vector<64x32xbf16>
    %cst_69 = arith.constant dense<0.000000e+00> : vector<64x32xf32>
    %180 = tpu.matmul %178, %179, %cst_69 {dimension_numbers = #tpu.dot_dimension_numbers<[1], [0], [0], [1], [0, 0, 1, 1], [], []>} : vector<64x64xbf16>, vector<64x32xbf16>, vector<64x32xf32> -> vector<64x32xf32>
    %181 = arith.addf %180, %148 : vector<64x32xf32>
    %182 = arith.truncf %181 : vector<64x32xf32> to vector<64x32xbf16>
    %c0_70 = arith.constant 0 : index
    %c0_71 = arith.constant 0 : index
    %183 = vector.load %arg16[%c0_70, %c0_71] : memref<32x4xbf16, #tpu.memory_space<vmem>>, vector<32x4xbf16>
    %cst_72 = arith.constant dense<0.000000e+00> : vector<64x4xf32>
    %184 = tpu.matmul %182, %183, %cst_72 {dimension_numbers = #tpu.dot_dimension_numbers<[1], [0], [0], [1], [0, 0, 1, 1], [], []>} : vector<64x32xbf16>, vector<32x4xbf16>, vector<64x4xf32> -> vector<64x4xf32>
    %185 = vector.shape_cast %184 : vector<64x4xf32> to vector<4x16x4xf32>
    %186 = tpu.concatenate %185, %1 in 2 : vector<4x16x4xf32>, vector<4x16x4xf32> -> vector<4x16x8xf32>
    %c0_73 = arith.constant 0 : index
    %c0_74 = arith.constant 0 : index
    %c0_75 = arith.constant 0 : index
    %187 = vector.load %arg17[%c0_73, %c0_74, %c0_75] : memref<4x16x8xf32, #tpu.memory_space<vmem>>, vector<4x16x8xf32>
    tpu.vector_store %arg17[%c0_73, %c0_74, %c0_75], %186 {strides = array<i32>} : memref<4x16x8xf32, #tpu.memory_space<vmem>>, vector<4x16x8xf32>,
    return
  }
  func.func @transform_0(%arg0: i32) -> (i32, i32, i32) {
    %c0_i32 = arith.constant 0 : i32
    %c0_i32_0 = arith.constant 0 : i32
    %c0_i32_1 = arith.constant 0 : i32
    return %arg0, %c0_i32, %c0_i32_0 : i32, i32, i32
  }
  func.func @transform_1(%arg0: i32) -> (i32, i32) {
    %c0_i32 = arith.constant 0 : i32
    %c0_i32_0 = arith.constant 0 : i32
    %c0_i32_1 = arith.constant 0 : i32
    return %c0_i32, %c0_i32_0 : i32, i32
  }
  func.func @transform_2(%arg0: i32) -> (i32, i32) {
    %c0_i32 = arith.constant 0 : i32
    %c0_i32_0 = arith.constant 0 : i32
    %c0_i32_1 = arith.constant 0 : i32
    return %c0_i32, %c0_i32_0 : i32, i32
  }
  func.func @transform_3(%arg0: i32) -> (i32, i32) {
    %c0_i32 = arith.constant 0 : i32
    %c0_i32_0 = arith.constant 0 : i32
    %c0_i32_1 = arith.constant 0 : i32
    return %c0_i32, %c0_i32_0 : i32, i32
  }
  func.func @transform_4(%arg0: i32) -> (i32, i32) {
    %c0_i32 = arith.constant 0 : i32
    %c0_i32_0 = arith.constant 0 : i32
    %c0_i32_1 = arith.constant 0 : i32
    return %c0_i32, %c0_i32_0 : i32, i32
  }
  func.func @transform_5(%arg0: i32) -> (i32, i32) {
    %c0_i32 = arith.constant 0 : i32
    %c0_i32_0 = arith.constant 0 : i32
    %c0_i32_1 = arith.constant 0 : i32
    return %c0_i32, %c0_i32_0 : i32, i32
  }
  func.func @transform_6(%arg0: i32) -> (i32, i32) {
    %c0_i32 = arith.constant 0 : i32
    %c0_i32_0 = arith.constant 0 : i32
    %c0_i32_1 = arith.constant 0 : i32
    return %c0_i32, %c0_i32_0 : i32, i32
  }
  func.func @transform_7(%arg0: i32) -> (i32, i32) {
    %c0_i32 = arith.constant 0 : i32
    %c0_i32_0 = arith.constant 0 : i32
    %c0_i32_1 = arith.constant 0 : i32
    return %c0_i32, %c0_i32_0 : i32, i32
  }
  func.func @transform_8(%arg0: i32) -> (i32, i32) {
    %c0_i32 = arith.constant 0 : i32
    %c0_i32_0 = arith.constant 0 : i32
    %c0_i32_1 = arith.constant 0 : i32
    return %c0_i32, %c0_i32_0 : i32, i32
  }
  func.func @transform_9(%arg0: i32) -> (i32, i32) {
    %c0_i32 = arith.constant 0 : i32
    %c0_i32_0 = arith.constant 0 : i32
    %c0_i32_1 = arith.constant 0 : i32
    return %c0_i32, %c0_i32_0 : i32, i32
  }
  func.func @transform_10(%arg0: i32) -> (i32, i32) {
    %c0_i32 = arith.constant 0 : i32
    %c0_i32_0 = arith.constant 0 : i32
    %c0_i32_1 = arith.constant 0 : i32
    return %c0_i32, %c0_i32_0 : i32, i32
  }
  func.func @transform_11(%arg0: i32) -> (i32, i32) {
    %c0_i32 = arith.constant 0 : i32
    %c0_i32_0 = arith.constant 0 : i32
    %c0_i32_1 = arith.constant 0 : i32
    return %c0_i32, %c0_i32_0 : i32, i32
  }
  func.func @transform_12(%arg0: i32) -> (i32, i32) {
    %c0_i32 = arith.constant 0 : i32
    %c0_i32_0 = arith.constant 0 : i32
    %c0_i32_1 = arith.constant 0 : i32
    return %c0_i32, %c0_i32_0 : i32, i32
  }
  func.func @transform_13(%arg0: i32) -> (i32, i32) {
    %c0_i32 = arith.constant 0 : i32
    %c0_i32_0 = arith.constant 0 : i32
    %c0_i32_1 = arith.constant 0 : i32
    return %c0_i32, %c0_i32_0 : i32, i32
  }
  func.func @transform_14(%arg0: i32) -> (i32, i32) {
    %c0_i32 = arith.constant 0 : i32
    %c0_i32_0 = arith.constant 0 : i32
    %c0_i32_1 = arith.constant 0 : i32
    return %c0_i32, %c0_i32_0 : i32, i32
  }
  func.func @transform_15(%arg0: i32) -> (i32, i32) {
    %c0_i32 = arith.constant 0 : i32
    %c0_i32_0 = arith.constant 0 : i32
    %c0_i32_1 = arith.constant 0 : i32
    return %c0_i32, %c0_i32_0 : i32, i32
  }
  func.func @transform_16(%arg0: i32) -> (i32, i32, i32) {
    %c0_i32 = arith.constant 0 : i32
    %c0_i32_0 = arith.constant 0 : i32
    %c0_i32_1 = arith.constant 0 : i32
    return %arg0, %c0_i32, %c0_i32_0 : i32, i32, i32
  }
}

</mosaic_0001>

<llo_original>
// kernel: sa_epi_cross_attention_trans.1
$region0: #{sa_epi_cross_attention_trans.1}
  #allocation0 [shape = 'u32[]', space=smem, size = 0x4, offset = 0x4, fixed_abs, tag = 'smem constant byte address 0x4 - core index']
  #allocation1 [shape = 'u32[144,128]{1,0:T(1,128)}', space=vmem, size = 0x12000, scoped, tag = 'internal scratch']
  %s0 = inlined_call_operand.vmem [shape: f32[8,16,8], index: 0, kind: input, shape index: {}]
  %s1 = inlined_call_operand.vmem [shape: bf16[4,32], index: 1, kind: input, shape index: {}]
  %s2 = inlined_call_operand.vmem [shape: bf16[4,32], index: 2, kind: input, shape index: {}]
  %s3 = inlined_call_operand.vmem [shape: f32[1,32], index: 3, kind: input, shape index: {}]
  %s4 = inlined_call_operand.vmem [shape: f32[1,32], index: 4, kind: input, shape index: {}]
  %s5 = inlined_call_operand.vmem [shape: f32[1,32], index: 5, kind: input, shape index: {}]
  %s6 = inlined_call_operand.vmem [shape: f32[1,32], index: 6, kind: input, shape index: {}]
  %s7 = inlined_call_operand.vmem [shape: bf16[32,32], index: 7, kind: input, shape index: {}]
  %s8 = inlined_call_operand.vmem [shape: bf16[32,32], index: 8, kind: input, shape index: {}]
  %s9 = inlined_call_operand.vmem [shape: bf16[32,32], index: 9, kind: input, shape index: {}]
  %s10 = inlined_call_operand.vmem [shape: bf16[32,32], index: 10, kind: input, shape index: {}]
  %s11 = inlined_call_operand.vmem [shape: f32[1,32], index: 11, kind: input, shape index: {}]
  %s12 = inlined_call_operand.vmem [shape: f32[1,32], index: 12, kind: input, shape index: {}]
  %s13 = inlined_call_operand.vmem [shape: bf16[32,64], index: 13, kind: input, shape index: {}]
  %s14 = inlined_call_operand.vmem [shape: bf16[64,32], index: 14, kind: input, shape index: {}]
  %s15 = inlined_call_operand.vmem [shape: bf16[32,4], index: 15, kind: input, shape index: {}]
  %s16 = inlined_call_operand.vmem [shape: f32[8,16,8], index: 16, kind: output, shape index: {}]
  %s17 = sld [smem:[#allocation0]]
  $region97: #{sa_epi_cross_attention_trans.1} parent=0
    _
  %s19 = ssub.s32 1, %s17
  %s20 = scalar_select 0, %s19, %s17
  loop: start=0, step=1, limit=4
  $region2: #{sa_epi_cross_attention_trans.1} parent=0 // loop_pre_header
    _
  $region3: #{sa_epi_cross_attention_trans.1} parent=0 // loop_header
    %s22 = sphi 0, %s26
    %p23 = scmp.ge.s32.totalorder %s22, 4
    %s32 = sphi 0, %s34
    %s35 = sphi 0, %s32
    %s36 = sphi 0, %s35
    %s52 = sphi 0, %s36
    %s56 = sphi 0, %s56
    %s58 = sphi 0, %s56
    %s59 = sphi 0, %s58
    %s73 = sphi 0, %s59
    %s77 = sphi 0, %s77
    %s79 = sphi 0, %s77
    %s80 = sphi 0, %s79
    %s94 = sphi 0, %s80
    %s98 = sphi 0, %s98
    %s100 = sphi 0, %s98
    %s101 = sphi 0, %s100
    %s115 = sphi 0, %s101
    %s119 = sphi 0, %s119
    %s121 = sphi 0, %s119
    %s122 = sphi 0, %s121
    %s136 = sphi 0, %s122
    %s140 = sphi 0, %s140
    %s142 = sphi 0, %s140
    %s143 = sphi 0, %s142
    %s157 = sphi 0, %s143
    %s161 = sphi 0, %s161
    %s163 = sphi 0, %s161
    %s164 = sphi 0, %s163
    %s178 = sphi 0, %s164
    %s182 = sphi 0, %s182
    %s184 = sphi 0, %s182
    %s185 = sphi 0, %s184
    %s199 = sphi 0, %s185
    %s203 = sphi 0, %s203
    %s205 = sphi 0, %s203
    %s206 = sphi 0, %s205
    %s220 = sphi 0, %s206
    %s224 = sphi 0, %s224
    %s226 = sphi 0, %s224
    %s227 = sphi 0, %s226
    %s241 = sphi 0, %s227
    %s245 = sphi 0, %s245
    %s247 = sphi 0, %s245
    %s248 = sphi 0, %s247
    %s262 = sphi 0, %s248
    %s266 = sphi 0, %s266
    %s268 = sphi 0, %s266
    %s269 = sphi 0, %s268
    %s283 = sphi 0, %s269
    %s287 = sphi 0, %s287
    %s289 = sphi 0, %s287
    %s290 = sphi 0, %s289
    %s304 = sphi 0, %s290
    %s308 = sphi 0, %s308
    %s310 = sphi 0, %s308
    %s311 = sphi 0, %s310
    %s325 = sphi 0, %s311
    %s329 = sphi 0, %s329
    %s331 = sphi 0, %s329
    %s332 = sphi 0, %s331
    %s346 = sphi 0, %s332
    %s350 = sphi 0, %s350
    %s352 = sphi 0, %s350
    %s353 = sphi 0, %s352
    %s367 = sphi 0, %s353
    %s373 = sphi 0, %s375
    %s376 = sphi 0, %s373
    %s377 = sphi 0, %s376
    %s393 = sphi 0, %s377
  $region4: #{sa_epi_cross_attention_trans.1} parent=0 // loop_header_branch
    %25 = sbr.rel (%p23) target = $region8
  $region5: #{sa_epi_cross_attention_trans.1} parent=0 // loop_body
    %s27 = ssub.s32 %s22, 1
    %s28 = ssub.s32 %s22, 2
    %s29 = sadd.s32 %s22, 1
    %s30 = ssub.s32 %s22, %s29
    %p31 = scmp.eq.s32.totalorder %s30, 0
    %s33 = sadd.s32 %s32, 1
    %s34 = scalar_select %p31, %s32, %s33
    %p37 = pneg %p31
    %p38 = scmp.eq.s32.totalorder %s22, 1
    %p39 = por %p37, %p38
    %p40 = scmp.ne.s32.totalorder %s32, %s35
    %p41 = scmp.eq.s32.totalorder %s22, 0
    %p42 = por %p40, %p41
    %p43 = scmp.ne.s32.totalorder %s32, %s35
    %p44 = scmp.eq.s32.totalorder %s27, 1
    %p45 = por %p43, %p44
    %p46 = scmp.ne.s32.totalorder %s35, %s36
    %p47 = scmp.eq.s32.totalorder %s27, 0
    %p48 = por %p46, %p47
    %p49 = scmp.ne.s32.totalorder %s35, %s36
    %p50 = scmp.eq.s32.totalorder %s28, 1
    %p51 = por %p49, %p50
    %p53 = scmp.ne.s32.totalorder %s36, %s52
    %p54 = scmp.eq.s32.totalorder %s28, 0
    %p55 = por %p53, %p54
    %s57 = sadd.s32 %s56, 1
    %p60 = scmp.eq.s32.totalorder %s22, 1
    %p61 = scmp.ne.s32.totalorder %s56, %s58
    %p62 = scmp.eq.s32.totalorder %s22, 0
    %p63 = por %p61, %p62
    %p64 = scmp.ne.s32.totalorder %s56, %s58
    %p65 = scmp.eq.s32.totalorder %s27, 1
    %p66 = por %p64, %p65
    %p67 = scmp.ne.s32.totalorder %s58, %s59
    %p68 = scmp.eq.s32.totalorder %s27, 0
    %p69 = por %p67, %p68
    %p70 = scmp.ne.s32.totalorder %s58, %s59
    %p71 = scmp.eq.s32.totalorder %s28, 1
    %p72 = por %p70, %p71
    %p74 = scmp.ne.s32.totalorder %s59, %s73
    %p75 = scmp.eq.s32.totalorder %s28, 0
    %p76 = por %p74, %p75
    %s78 = sadd.s32 %s77, 1
    %p81 = scmp.eq.s32.totalorder %s22, 1
    %p82 = scmp.ne.s32.totalorder %s77, %s79
    %p83 = scmp.eq.s32.totalorder %s22, 0
    %p84 = por %p82, %p83
    %p85 = scmp.ne.s32.totalorder %s77, %s79
    %p86 = scmp.eq.s32.totalorder %s27, 1
    %p87 = por %p85, %p86
    %p88 = scmp.ne.s32.totalorder %s79, %s80
    %p89 = scmp.eq.s32.totalorder %s27, 0
    %p90 = por %p88, %p89
    %p91 = scmp.ne.s32.totalorder %s79, %s80
    %p92 = scmp.eq.s32.totalorder %s28, 1
    %p93 = por %p91, %p92
    %p95 = scmp.ne.s32.totalorder %s80, %s94
    %p96 = scmp.eq.s32.totalorder %s28, 0
    %p97 = por %p95, %p96
    %s99 = sadd.s32 %s98, 1
    %p102 = scmp.eq.s32.totalorder %s22, 1
    %p103 = scmp.ne.s32.totalorder %s98, %s100
    %p104 = scmp.eq.s32.totalorder %s22, 0
    %p105 = por %p103, %p104
    %p106 = scmp.ne.s32.totalorder %s98, %s100
    %p107 = scmp.eq.s32.totalorder %s27, 1
    %p108 = por %p106, %p107
    %p109 = scmp.ne.s32.totalorder %s100, %s101
    %p110 = scmp.eq.s32.totalorder %s27, 0
    %p111 = por %p109, %p110
    %p112 = scmp.ne.s32.totalorder %s100, %s101
    %p113 = scmp.eq.s32.totalorder %s28, 1
    %p114 = por %p112, %p113
    %p116 = scmp.ne.s32.totalorder %s101, %s115
    %p117 = scmp.eq.s32.totalorder %s28, 0
    %p118 = por %p116, %p117
    %s120 = sadd.s32 %s119, 1
    %p123 = scmp.eq.s32.totalorder %s22, 1
    %p124 = scmp.ne.s32.totalorder %s119, %s121
    %p125 = scmp.eq.s32.totalorder %s22, 0
    %p126 = por %p124, %p125
    %p127 = scmp.ne.s32.totalorder %s119, %s121
    %p128 = scmp.eq.s32.totalorder %s27, 1
    %p129 = por %p127, %p128
    %p130 = scmp.ne.s32.totalorder %s121, %s122
    %p131 = scmp.eq.s32.totalorder %s27, 0
    %p132 = por %p130, %p131
    %p133 = scmp.ne.s32.totalorder %s121, %s122
    %p134 = scmp.eq.s32.totalorder %s28, 1
    %p135 = por %p133, %p134
    %p137 = scmp.ne.s32.totalorder %s122, %s136
    %p138 = scmp.eq.s32.totalorder %s28, 0
    %p139 = por %p137, %p138
    %s141 = sadd.s32 %s140, 1
    %p144 = scmp.eq.s32.totalorder %s22, 1
    %p145 = scmp.ne.s32.totalorder %s140, %s142
    %p146 = scmp.eq.s32.totalorder %s22, 0
    %p147 = por %p145, %p146
    %p148 = scmp.ne.s32.totalorder %s140, %s142
    %p149 = scmp.eq.s32.totalorder %s27, 1
    %p150 = por %p148, %p149
    %p151 = scmp.ne.s32.totalorder %s142, %s143
    %p152 = scmp.eq.s32.totalorder %s27, 0
    %p153 = por %p151, %p152
    %p154 = scmp.ne.s32.totalorder %s142, %s143
    %p155 = scmp.eq.s32.totalorder %s28, 1
    %p156 = por %p154, %p155
    %p158 = scmp.ne.s32.totalorder %s143, %s157
    %p159 = scmp.eq.s32.totalorder %s28, 0
    %p160 = por %p158, %p159
    %s162 = sadd.s32 %s161, 1
    %p165 = scmp.eq.s32.totalorder %s22, 1
    %p166 = scmp.ne.s32.totalorder %s161, %s163
    %p167 = scmp.eq.s32.totalorder %s22, 0
    %p168 = por %p166, %p167
    %p169 = scmp.ne.s32.totalorder %s161, %s163
    %p170 = scmp.eq.s32.totalorder %s27, 1
    %p171 = por %p169, %p170
    %p172 = scmp.ne.s32.totalorder %s163, %s164
    %p173 = scmp.eq.s32.totalorder %s27, 0
    %p174 = por %p172, %p173
    %p175 = scmp.ne.s32.totalorder %s163, %s164
    %p176 = scmp.eq.s32.totalorder %s28, 1
    %p177 = por %p175, %p176
    %p179 = scmp.ne.s32.totalorder %s164, %s178
    %p180 = scmp.eq.s32.totalorder %s28, 0
    %p181 = por %p179, %p180
    %s183 = sadd.s32 %s182, 1
    %p186 = scmp.eq.s32.totalorder %s22, 1
    %p187 = scmp.ne.s32.totalorder %s182, %s184
    %p188 = scmp.eq.s32.totalorder %s22, 0
    %p189 = por %p187, %p188
    %p190 = scmp.ne.s32.totalorder %s182, %s184
    %p191 = scmp.eq.s32.totalorder %s27, 1
    %p192 = por %p190, %p191
    %p193 = scmp.ne.s32.totalorder %s184, %s185
    %p194 = scmp.eq.s32.totalorder %s27, 0
    %p195 = por %p193, %p194
    %p196 = scmp.ne.s32.totalorder %s184, %s185
    %p197 = scmp.eq.s32.totalorder %s28, 1
    %p198 = por %p196, %p197
    %p200 = scmp.ne.s32.totalorder %s185, %s199
    %p201 = scmp.eq.s32.totalorder %s28, 0
    %p202 = por %p200, %p201
    %s204 = sadd.s32 %s203, 1
    %p207 = scmp.eq.s32.totalorder %s22, 1
    %p208 = scmp.ne.s32.totalorder %s203, %s205
    %p209 = scmp.eq.s32.totalorder %s22, 0
    %p210 = por %p208, %p209
    %p211 = scmp.ne.s32.totalorder %s203, %s205
    %p212 = scmp.eq.s32.totalorder %s27, 1
    %p213 = por %p211, %p212
    %p214 = scmp.ne.s32.totalorder %s205, %s206
    %p215 = scmp.eq.s32.totalorder %s27, 0
    %p216 = por %p214, %p215
    %p217 = scmp.ne.s32.totalorder %s205, %s206
    %p218 = scmp.eq.s32.totalorder %s28, 1
    %p219 = por %p217, %p218
    %p221 = scmp.ne.s32.totalorder %s206, %s220
    %p222 = scmp.eq.s32.totalorder %s28, 0
    %p223 = por %p221, %p222
    %s225 = sadd.s32 %s224, 1
    %p228 = scmp.eq.s32.totalorder %s22, 1
    %p229 = scmp.ne.s32.totalorder %s224, %s226
    %p230 = scmp.eq.s32.totalorder %s22, 0
    %p231 = por %p229, %p230
    %p232 = scmp.ne.s32.totalorder %s224, %s226
    %p233 = scmp.eq.s32.totalorder %s27, 1
    %p234 = por %p232, %p233
    %p235 = scmp.ne.s32.totalorder %s226, %s227
    %p236 = scmp.eq.s32.totalorder %s27, 0
    %p237 = por %p235, %p236
    %p238 = scmp.ne.s32.totalorder %s226, %s227
    %p239 = scmp.eq.s32.totalorder %s28, 1
    %p240 = por %p238, %p239
    %p242 = scmp.ne.s32.totalorder %s227, %s241
    %p243 = scmp.eq.s32.totalorder %s28, 0
    %p244 = por %p242, %p243
    %s246 = sadd.s32 %s245, 1
    %p249 = scmp.eq.s32.totalorder %s22, 1
    %p250 = scmp.ne.s32.totalorder %s245, %s247
    %p251 = scmp.eq.s32.totalorder %s22, 0
    %p252 = por %p250, %p251
    %p253 = scmp.ne.s32.totalorder %s245, %s247
    %p254 = scmp.eq.s32.totalorder %s27, 1
    %p255 = por %p253, %p254
    %p256 = scmp.ne.s32.totalorder %s247, %s248
    %p257 = scmp.eq.s32.totalorder %s27, 0
    %p258 = por %p256, %p257
    %p259 = scmp.ne.s32.totalorder %s247, %s248
    %p260 = scmp.eq.s32.totalorder %s28, 1
    %p261 = por %p259, %p260
    %p263 = scmp.ne.s32.totalorder %s248, %s262
    %p264 = scmp.eq.s32.totalorder %s28, 0
    %p265 = por %p263, %p264
    %s267 = sadd.s32 %s266, 1
    %p270 = scmp.eq.s32.totalorder %s22, 1
    %p271 = scmp.ne.s32.totalorder %s266, %s268
    %p272 = scmp.eq.s32.totalorder %s22, 0
    %p273 = por %p271, %p272
    %p274 = scmp.ne.s32.totalorder %s266, %s268
    %p275 = scmp.eq.s32.totalorder %s27, 1
    %p276 = por %p274, %p275
    %p277 = scmp.ne.s32.totalorder %s268, %s269
    %p278 = scmp.eq.s32.totalorder %s27, 0
    %p279 = por %p277, %p278
    %p280 = scmp.ne.s32.totalorder %s268, %s269
    %p281 = scmp.eq.s32.totalorder %s28, 1
    %p282 = por %p280, %p281
    %p284 = scmp.ne.s32.totalorder %s269, %s283
    %p285 = scmp.eq.s32.totalorder %s28, 0
    %p286 = por %p284, %p285
    %s288 = sadd.s32 %s287, 1
    %p291 = scmp.eq.s32.totalorder %s22, 1
    %p292 = scmp.ne.s32.totalorder %s287, %s289
    %p293 = scmp.eq.s32.totalorder %s22, 0
    %p294 = por %p292, %p293
    %p295 = scmp.ne.s32.totalorder %s287, %s289
    %p296 = scmp.eq.s32.totalorder %s27, 1
    %p297 = por %p295, %p296
    %p298 = scmp.ne.s32.totalorder %s289, %s290
    %p299 = scmp.eq.s32.totalorder %s27, 0
    %p300 = por %p298, %p299
    %p301 = scmp.ne.s32.totalorder %s289, %s290
    %p302 = scmp.eq.s32.totalorder %s28, 1
    %p303 = por %p301, %p302
    %p305 = scmp.ne.s32.totalorder %s290, %s304
    %p306 = scmp.eq.s32.totalorder %s28, 0
    %p307 = por %p305, %p306
    %s309 = sadd.s32 %s308, 1
    %p312 = scmp.eq.s32.totalorder %s22, 1
    %p313 = scmp.ne.s32.totalorder %s308, %s310
    %p314 = scmp.eq.s32.totalorder %s22, 0
    %p315 = por %p313, %p314
    %p316 = scmp.ne.s32.totalorder %s308, %s310
    %p317 = scmp.eq.s32.totalorder %s27, 1
    %p318 = por %p316, %p317
    %p319 = scmp.ne.s32.totalorder %s310, %s311
    %p320 = scmp.eq.s32.totalorder %s27, 0
    %p321 = por %p319, %p320
    %p322 = scmp.ne.s32.totalorder %s310, %s311
    %p323 = scmp.eq.s32.totalorder %s28, 1
    %p324 = por %p322, %p323
    %p326 = scmp.ne.s32.totalorder %s311, %s325
    %p327 = scmp.eq.s32.totalorder %s28, 0
    %p328 = por %p326, %p327
    %s330 = sadd.s32 %s329, 1
    %p333 = scmp.eq.s32.totalorder %s22, 1
    %p334 = scmp.ne.s32.totalorder %s329, %s331
    %p335 = scmp.eq.s32.totalorder %s22, 0
    %p336 = por %p334, %p335
    %p337 = scmp.ne.s32.totalorder %s329, %s331
    %p338 = scmp.eq.s32.totalorder %s27, 1
    %p339 = por %p337, %p338
    %p340 = scmp.ne.s32.totalorder %s331, %s332
    %p341 = scmp.eq.s32.totalorder %s27, 0
    %p342 = por %p340, %p341
    %p343 = scmp.ne.s32.totalorder %s331, %s332
    %p344 = scmp.eq.s32.totalorder %s28, 1
    %p345 = por %p343, %p344
    %p347 = scmp.ne.s32.totalorder %s332, %s346
    %p348 = scmp.eq.s32.totalorder %s28, 0
    %p349 = por %p347, %p348
    %s351 = sadd.s32 %s350, 1
    %p354 = scmp.eq.s32.totalorder %s22, 1
    %p355 = scmp.ne.s32.totalorder %s350, %s352
    %p356 = scmp.eq.s32.totalorder %s22, 0
    %p357 = por %p355, %p356
    %p358 = scmp.ne.s32.totalorder %s350, %s352
    %p359 = scmp.eq.s32.totalorder %s27, 1
    %p360 = por %p358, %p359
    %p361 = scmp.ne.s32.totalorder %s352, %s353
    %p362 = scmp.eq.s32.totalorder %s27, 0
    %p363 = por %p361, %p362
    %p364 = scmp.ne.s32.totalorder %s352, %s353
    %p365 = scmp.eq.s32.totalorder %s28, 1
    %p366 = por %p364, %p365
    %p368 = scmp.ne.s32.totalorder %s353, %s367
    %p369 = scmp.eq.s32.totalorder %s28, 0
    %p370 = por %p368, %p369
    %s371 = ssub.s32 %s22, %s29
    %p372 = scmp.eq.s32.totalorder %s371, 0
    %s374 = sadd.s32 %s373, 1
    %s375 = scalar_select %p372, %s373, %s374
    %p378 = pneg %p372
    %p379 = scmp.eq.s32.totalorder %s22, 1
    %p380 = por %p378, %p379
    %p381 = scmp.ne.s32.totalorder %s373, %s376
    %p382 = scmp.eq.s32.totalorder %s22, 0
    %p383 = por %p381, %p382
    %p384 = scmp.ne.s32.totalorder %s373, %s376
    %p385 = scmp.eq.s32.totalorder %s27, 1
    %p386 = por %p384, %p385
    %p387 = scmp.ne.s32.totalorder %s376, %s377
    %p388 = scmp.eq.s32.totalorder %s27, 0
    %p389 = por %p387, %p388
    %p390 = scmp.ne.s32.totalorder %s376, %s377
    %p391 = scmp.eq.s32.totalorder %s28, 1
    %p392 = por %p390, %p391
    %p394 = scmp.ne.s32.totalorder %s377, %s393
    %p395 = scmp.eq.s32.totalorder %s28, 0
    %p396 = por %p394, %p395
    %p397 = scmp.le.s32.totalorder 1, %s22
    %p398 = scmp.lt.s32.totalorder %s22, 3
    %p399 = pnand %p397, %p398
    %p400 = pneg %p399
    // Predicated region
    $region9: #{sa_epi_cross_attention_trans.1} parent=5 // pred_check
      _
    $region10: #{sa_epi_cross_attention_trans.1} parent=5 // pred_check_branch
      %402 = sbr.rel (%p399) target = $region12
    $region11: #{sa_epi_cross_attention_trans.1} parent=5 // pred_region
      %s403 = ssub.s32 %s22, 1
      // Predicated region
      $region13: #{sa_epi_cross_attention_trans.1} parent=11 // pred_check
        %p404 = pneg %p69
      $region14: #{sa_epi_cross_attention_trans.1} parent=11 // pred_check_branch
        %406 = sbr.rel (%p404) target = $region16
      $region15: #{sa_epi_cross_attention_trans.1} parent=11 // pred_region
        _
      $region16: #{sa_epi_cross_attention_trans.1} parent=11 // pred_fallthru
        _
      // Predicated region
      $region17: #{sa_epi_cross_attention_trans.1} parent=11 // pred_check
        %p407 = pneg %p90
      $region18: #{sa_epi_cross_attention_trans.1} parent=11 // pred_check_branch
        %409 = sbr.rel (%p407) target = $region20
      $region19: #{sa_epi_cross_attention_trans.1} parent=11 // pred_region
        _
      $region20: #{sa_epi_cross_attention_trans.1} parent=11 // pred_fallthru
        _
      // Predicated region
      $region21: #{sa_epi_cross_attention_trans.1} parent=11 // pred_check
        %p410 = pneg %p111
      $region22: #{sa_epi_cross_attention_trans.1} parent=11 // pred_check_branch
        %412 = sbr.rel (%p410) target = $region24
      $region23: #{sa_epi_cross_attention_trans.1} parent=11 // pred_region
        _
      $region24: #{sa_epi_cross_attention_trans.1} parent=11 // pred_fallthru
        _
      // Predicated region
      $region25: #{sa_epi_cross_attention_trans.1} parent=11 // pred_check
        %p413 = pneg %p132
      $region26: #{sa_epi_cross_attention_trans.1} parent=11 // pred_check_branch
        %415 = sbr.rel (%p413) target = $region28
      $region27: #{sa_epi_cross_attention_trans.1} parent=11 // pred_region
        _
      $region28: #{sa_epi_cross_attention_trans.1} parent=11 // pred_fallthru
        _
      // Predicated region
      $region29: #{sa_epi_cross_attention_trans.1} parent=11 // pred_check
        %p416 = pneg %p153
      $region30: #{sa_epi_cross_attention_trans.1} parent=11 // pred_check_branch
        %418 = sbr.rel (%p416) target = $region32
      $region31: #{sa_epi_cross_attention_trans.1} parent=11 // pred_region
        _
      $region32: #{sa_epi_cross_attention_trans.1} parent=11 // pred_fallthru
        _
      // Predicated region
      $region33: #{sa_epi_cross_attention_trans.1} parent=11 // pred_check
        %p419 = pneg %p174
      $region34: #{sa_epi_cross_attention_trans.1} parent=11 // pred_check_branch
        %421 = sbr.rel (%p419) target = $region36
      $region35: #{sa_epi_cross_attention_trans.1} parent=11 // pred_region
        _
      $region36: #{sa_epi_cross_attention_trans.1} parent=11 // pred_fallthru
        _
      // Predicated region
      $region37: #{sa_epi_cross_attention_trans.1} parent=11 // pred_check
        %p422 = pneg %p195
      $region38: #{sa_epi_cross_attention_trans.1} parent=11 // pred_check_branch
        %424 = sbr.rel (%p422) target = $region40
      $region39: #{sa_epi_cross_attention_trans.1} parent=11 // pred_region
        _
      $region40: #{sa_epi_cross_attention_trans.1} parent=11 // pred_fallthru
        _
      // Predicated region
      $region41: #{sa_epi_cross_attention_trans.1} parent=11 // pred_check
        %p425 = pneg %p216
      $region42: #{sa_epi_cross_attention_trans.1} parent=11 // pred_check_branch
        %427 = sbr.rel (%p425) target = $region44
      $region43: #{sa_epi_cross_attention_trans.1} parent=11 // pred_region
        _
      $region44: #{sa_epi_cross_attention_trans.1} parent=11 // pred_fallthru
        _
      // Predicated region
      $region45: #{sa_epi_cross_attention_trans.1} parent=11 // pred_check
        %p428 = pneg %p237
      $region46: #{sa_epi_cross_attention_trans.1} parent=11 // pred_check_branch
        %430 = sbr.rel (%p428) target = $region48
      $region47: #{sa_epi_cross_attention_trans.1} parent=11 // pred_region
        _
      $region48: #{sa_epi_cross_attention_trans.1} parent=11 // pred_fallthru
        _
      // Predicated region
      $region49: #{sa_epi_cross_attention_trans.1} parent=11 // pred_check
        %p431 = pneg %p258
      $region50: #{sa_epi_cross_attention_trans.1} parent=11 // pred_check_branch
        %433 = sbr.rel (%p431) target = $region52
      $region51: #{sa_epi_cross_attention_trans.1} parent=11 // pred_region
        _
      $region52: #{sa_epi_cross_attention_trans.1} parent=11 // pred_fallthru
        _
      // Predicated region
      $region53: #{sa_epi_cross_attention_trans.1} parent=11 // pred_check
        %p434 = pneg %p279
      $region54: #{sa_epi_cross_attention_trans.1} parent=11 // pred_check_branch
        %436 = sbr.rel (%p434) target = $region56
      $region55: #{sa_epi_cross_attention_trans.1} parent=11 // pred_region
        _
      $region56: #{sa_epi_cross_attention_trans.1} parent=11 // pred_fallthru
        _
      // Predicated region
      $region57: #{sa_epi_cross_attention_trans.1} parent=11 // pred_check
        %p437 = pneg %p300
      $region58: #{sa_epi_cross_attention_trans.1} parent=11 // pred_check_branch
        %439 = sbr.rel (%p437) target = $region60
      $region59: #{sa_epi_cross_attention_trans.1} parent=11 // pred_region
        _
      $region60: #{sa_epi_cross_attention_trans.1} parent=11 // pred_fallthru
        _
      // Predicated region
      $region61: #{sa_epi_cross_attention_trans.1} parent=11 // pred_check
        %p440 = pneg %p321
      $region62: #{sa_epi_cross_attention_trans.1} parent=11 // pred_check_branch
        %442 = sbr.rel (%p440) target = $region64
      $region63: #{sa_epi_cross_attention_trans.1} parent=11 // pred_region
        _
      $region64: #{sa_epi_cross_attention_trans.1} parent=11 // pred_fallthru
        _
      // Predicated region
      $region65: #{sa_epi_cross_attention_trans.1} parent=11 // pred_check
        %p443 = pneg %p342
      $region66: #{sa_epi_cross_attention_trans.1} parent=11 // pred_check_branch
        %445 = sbr.rel (%p443) target = $region68
      $region67: #{sa_epi_cross_attention_trans.1} parent=11 // pred_region
        _
      $region68: #{sa_epi_cross_attention_trans.1} parent=11 // pred_fallthru
        _
      // Predicated region
      $region69: #{sa_epi_cross_attention_trans.1} parent=11 // pred_check
        %p446 = pneg %p363
      $region70: #{sa_epi_cross_attention_trans.1} parent=11 // pred_check_branch
        %448 = sbr.rel (%p446) target = $region72
      $region71: #{sa_epi_cross_attention_trans.1} parent=11 // pred_region
        _
      $region72: #{sa_epi_cross_attention_trans.1} parent=11 // pred_fallthru
        _
    $region12: #{sa_epi_cross_attention_trans.1} parent=5 // pred_fallthru
      _
    %p449 = scmp.lt.s32.totalorder %s22, 2
    // Predicated region
    $region73: #{sa_epi_cross_attention_trans.1} parent=5 // pred_check
      %p450 = pneg %p449
    $region74: #{sa_epi_cross_attention_trans.1} parent=5 // pred_check_branch
      %452 = sbr.rel (%p450) target = $region76
    $region75: #{sa_epi_cross_attention_trans.1} parent=5 // pred_region
      // Predicated region
      $region77: #{sa_epi_cross_attention_trans.1} parent=75 // pred_check
        %p453 = pneg %p42
      $region78: #{sa_epi_cross_attention_trans.1} parent=75 // pred_check_branch
        %455 = sbr.rel (%p453) target = $region80
      $region79: #{sa_epi_cross_attention_trans.1} parent=75 // pred_region
        %s456 = smul.u32 4, %s22
        %p457 = scmp.lt.s32.totalorder %s456, 7
        %s458 = scalar_select %p457, %s456, 7
        %s459 = smul.addr %s458, 2
        %s460 = smul.addr %s459, 8
        %s461 = scalar_lea.vmem %s0, %s460
        %s462 = smul.u32 4, %s22
      $region80: #{sa_epi_cross_attention_trans.1} parent=75 // pred_fallthru
        _
    $region76: #{sa_epi_cross_attention_trans.1} parent=5 // pred_fallthru
      _
    %p463 = scmp.le.s32.totalorder 1, %s22
    %p464 = scmp.lt.s32.totalorder %s22, 3
    %p465 = pnand %p463, %p464
    %p466 = pneg %p465
    // Predicated region
    $region81: #{sa_epi_cross_attention_trans.1} parent=5 // pred_check
      _
    $region82: #{sa_epi_cross_attention_trans.1} parent=5 // pred_check_branch
      %468 = sbr.rel (%p465) target = $region84
    $region83: #{sa_epi_cross_attention_trans.1} parent=5 // pred_region
      %s469 = ssub.s32 %s22, 1
      %s470 = smul.u32 4, %s27
      %p471 = scmp.lt.s32.totalorder %s470, 7
      %s472 = scalar_select %p471, %s470, 7
      %s473 = smul.addr %s472, 2
      %s474 = smul.addr %s473, 8
      %s475 = scalar_lea.vmem %s0, %s474
      %p476 = pneg %p48
      %p477 = pneg %p45
      %p478 = pneg %p69
      %p479 = pneg %p66
      %p480 = pneg %p90
      %p481 = pneg %p87
      %p482 = pneg %p111
      %p483 = pneg %p108
      %p484 = pneg %p132
      %p485 = pneg %p129
      %p486 = pneg %p153
      %p487 = pneg %p150
      %p488 = pneg %p174
      %p489 = pneg %p171
      %p490 = pneg %p195
      %p491 = pneg %p192
      %p492 = pneg %p216
      %p493 = pneg %p213
      %p494 = pneg %p237
      %p495 = pneg %p234
      %p496 = pneg %p258
      %p497 = pneg %p255
      %p498 = pneg %p279
      %p499 = pneg %p276
      %p500 = pneg %p300
      %p501 = pneg %p297
      %p502 = pneg %p321
      %p503 = pneg %p318
      %p504 = pneg %p342
      %p505 = pneg %p339
      %p506 = pneg %p363
      %p507 = pneg %p360
      %p508 = pneg %p389
      %p509 = pneg %p386
      %s510 = smul.u32 4, %s27
      %p511 = scmp.lt.s32.totalorder %s510, 7
      %s512 = scalar_select %p511, %s510, 7
      %s513 = smul.addr %s512, 2
      %s514 = smul.addr %s513, 8
      %s515 = scalar_lea.vmem %s16, %s514
      %s516 = smul.u32 4, %s27
      %p517 = scmp.lt.s32.totalorder %s516, 7
      %s518 = scalar_select %p517, %s516, 7
      %s519 = smul.addr %s518, 2
      %s520 = smul.addr %s519, 8
      %s521 = scalar_lea.vmem %s0, %s520
      %s522 = smul.u32 4, %s27
      %s523 = smul.u32 4, %s27
      %p524 = scmp.lt.s32.totalorder %s523, 7
      %s525 = scalar_select %p524, %s523, 7
      %s526 = smul.addr %s525, 2
      %s527 = smul.addr %s526, 8
      %s528 = scalar_lea.vmem %s16, %s527
      %s529 = smul.u32 4, %s27
      %v531 = vld [vmem:[%s521] sm:$0xff]
      %v532 = vld [vmem:[%s521 + $0x8] sm:$0xff]
      %v533 = vld [vmem:[%s521 + $0x10] sm:$0xff]
      %v534 = vld [vmem:[%s521 + $0x18] sm:$0xff]
      %v535 = vld [vmem:[%s521 + $0x20] sm:$0xff]
      %v536 = vld [vmem:[%s521 + $0x28] sm:$0xff]
      %v537 = vld [vmem:[%s521 + $0x30] sm:$0xff]
      %v538 = vld [vmem:[%s521 + $0x38] sm:$0xff]
      %v539 = vpack.c.bf16 %v532, %v531
      %v540 = vpack.c.bf16 %v534, %v533
      %v541 = vpack.c.bf16 %v536, %v535
      %v542 = vpack.c.bf16 %v538, %v537
      %v543 = vld [vmem:[%s1] sm:$0x3]
      %vm544 = vcmask 31744
      %v546 = vsel %vm544, %v539, 0
      %v549 = vsel %vm544, %v540, 0
      %v552 = vsel %vm544, %v541, 0
      %v555 = vsel %vm544, %v542, 0
      %vm557 = vcmask 1041408
      %v559 = vsel %vm557, %v543, 0
      %561 = vmatprep.subr.bf16.mxu0 0
      %562 = vmatpush1.bf16.msra.mxu0 %v559
      %563 = vmatprep.subr.bf16.mxu0 0
      %564 = vmatpush1.bf16.msra.mxu0 0
      %565 = vmatprep.subr.bf16.mxu0 0
      %566 = vmatpush1.bf16.msra.mxu0 0
      %567 = vmatprep.subr.bf16.mxu0 0
      %568 = vmatpush1.bf16.msra.mxu0 0
      %569 = vmatprep.subr.bf16.mxu0 0
      %570 = vmatpush1.bf16.msra.mxu0 0
      %571 = vmatprep.subr.bf16.mxu0 0
      %572 = vmatpush1.bf16.msra.mxu0 0
      %573 = vmatprep.subr.bf16.mxu0 0
      %574 = vmatpush1.bf16.msra.mxu0 0
      %575 = vmatprep.subr.bf16.mxu0 0
      %576 = vmatpush1.bf16.msra.mxu0 0
      %577 = vmatprep.subr.bf16.mxu0 0
      %578 = vmatpush1.bf16.msra.mxu0 0
      %579 = vmatprep.subr.bf16.mxu0 0
      %580 = vmatpush1.bf16.msra.mxu0 0
      %581 = vmatprep.subr.bf16.mxu0 0
      %582 = vmatpush1.bf16.msra.mxu0 0
      %583 = vmatprep.subr.bf16.mxu0 0
      %584 = vmatpush1.bf16.msra.mxu0 0
      %585 = vmatprep.subr.bf16.mxu0 0
      %586 = vmatpush1.bf16.msra.mxu0 0
      %587 = vmatprep.subr.bf16.mxu0 0
      %588 = vmatpush1.bf16.msra.mxu0 0
      %589 = vmatprep.subr.bf16.mxu0 0
      %590 = vmatpush1.bf16.msra.mxu0 0
      %591 = vmatprep.subr.bf16.mxu0 0
      %592 = vmatpush1.bf16.msra.mxu0 0
      %593 = vmatprep.mubr.bf16.mxu0 0
      %594 = vmatmul.mubr.bf16.gmra.mrb[0].mxu0 %v546
      %v595 = vpop.f32.mrb[0].mxu0
      %v596 = vadd.f32 0.0, %v595
      %v597 = vpop.f32.mrb[0].mxu0
      %v598 = vpop.f32.mrb[0].mxu0
      %v599 = vadd.f32 0.0, %v598
      %v600 = vpop.f32.mrb[0].mxu0
      %601 = vmatprep.mubr.bf16.mxu0 0
      %602 = vmatmul.mubr.bf16.gmra.mrb[0].mxu0 %v549
      %v603 = vpop.f32.mrb[0].mxu0
      %v604 = vadd.f32 0.0, %v603
      %v605 = vpop.f32.mrb[0].mxu0
      %v606 = vpop.f32.mrb[0].mxu0
      %v607 = vadd.f32 0.0, %v606
      %v608 = vpop.f32.mrb[0].mxu0
      %609 = vmatprep.mubr.bf16.mxu0 0
      %610 = vmatmul.mubr.bf16.gmra.mrb[0].mxu0 %v552
      %v611 = vpop.f32.mrb[0].mxu0
      %v612 = vadd.f32 0.0, %v611
      %v613 = vpop.f32.mrb[0].mxu0
      %v614 = vpop.f32.mrb[0].mxu0
      %v615 = vadd.f32 0.0, %v614
      %v616 = vpop.f32.mrb[0].mxu0
      %617 = vmatprep.mubr.bf16.mxu0 0
      %618 = vmatmul.mubr.bf16.gmra.mrb[0].mxu0 %v555
      %v619 = vpop.f32.mrb[0].mxu0
      %v620 = vadd.f32 0.0, %v619
      %v621 = vpop.f32.mrb[0].mxu0
      %v622 = vpop.f32.mrb[0].mxu0
      %v623 = vadd.f32 0.0, %v622
      %v624 = vpop.f32.mrb[0].mxu0
      %625 = vdwg.mxu0
      %v626 = vld [vmem:[%s2] sm:$0x3]
      %631 = vrot.lane.b32.xlu0 %v539, 124
      %v632 = vpop.permute.xlu0 %631
      %633 = vrot.lane.b32.xlu0 %v540, 124
      %v634 = vpop.permute.xlu0 %633
      %635 = vrot.lane.b32.xlu0 %v541, 124
      %v636 = vpop.permute.xlu0 %635
      %637 = vrot.lane.b32.xlu0 %v542, 124
      %v638 = vpop.permute.xlu0 %637
      %v640 = vsel %vm544, %v632, 0
      %v643 = vsel %vm544, %v634, 0
      %v646 = vsel %vm544, %v636, 0
      %v649 = vsel %vm544, %v638, 0
      %v652 = vsel %vm557, %v626, 0
      %654 = vmatprep.subr.bf16.mxu0 0
      %655 = vmatpush1.bf16.msra.mxu0 %v652
      %656 = vmatprep.subr.bf16.mxu0 0
      %657 = vmatpush1.bf16.msra.mxu0 0
      %658 = vmatprep.subr.bf16.mxu0 0
      %659 = vmatpush1.bf16.msra.mxu0 0
      %660 = vmatprep.subr.bf16.mxu0 0
      %661 = vmatpush1.bf16.msra.mxu0 0
      %662 = vmatprep.subr.bf16.mxu0 0
      %663 = vmatpush1.bf16.msra.mxu0 0
      %664 = vmatprep.subr.bf16.mxu0 0
      %665 = vmatpush1.bf16.msra.mxu0 0
      %666 = vmatprep.subr.bf16.mxu0 0
      %667 = vmatpush1.bf16.msra.mxu0 0
      %668 = vmatprep.subr.bf16.mxu0 0
      %669 = vmatpush1.bf16.msra.mxu0 0
      %670 = vmatprep.subr.bf16.mxu0 0
      %671 = vmatpush1.bf16.msra.mxu0 0
      %672 = vmatprep.subr.bf16.mxu0 0
      %673 = vmatpush1.bf16.msra.mxu0 0
      %674 = vmatprep.subr.bf16.mxu0 0
      %675 = vmatpush1.bf16.msra.mxu0 0
      %676 = vmatprep.subr.bf16.mxu0 0
      %677 = vmatpush1.bf16.msra.mxu0 0
      %678 = vmatprep.subr.bf16.mxu0 0
      %679 = vmatpush1.bf16.msra.mxu0 0
      %680 = vmatprep.subr.bf16.mxu0 0
      %681 = vmatpush1.bf16.msra.mxu0 0
      %682 = vmatprep.subr.bf16.mxu0 0
      %683 = vmatpush1.bf16.msra.mxu0 0
      %684 = vmatprep.subr.bf16.mxu0 0
      %685 = vmatpush1.bf16.msra.mxu0 0
      %686 = vmatprep.mubr.bf16.mxu0 0
      %687 = vmatmul.mubr.bf16.gmra.mrb[0].mxu0 %v640
      %v688 = vpop.f32.mrb[0].mxu0
      %v689 = vadd.f32 0.0, %v688
      %v690 = vpop.f32.mrb[0].mxu0
      %v691 = vpop.f32.mrb[0].mxu0
      %v692 = vadd.f32 0.0, %v691
      %v693 = vpop.f32.mrb[0].mxu0
      %694 = vmatprep.mubr.bf16.mxu0 0
      %695 = vmatmul.mubr.bf16.gmra.mrb[0].mxu0 %v643
      %v696 = vpop.f32.mrb[0].mxu0
      %v697 = vadd.f32 0.0, %v696
      %v698 = vpop.f32.mrb[0].mxu0
      %v699 = vpop.f32.mrb[0].mxu0
      %v700 = vadd.f32 0.0, %v699
      %v701 = vpop.f32.mrb[0].mxu0
      %702 = vmatprep.mubr.bf16.mxu0 0
      %703 = vmatmul.mubr.bf16.gmra.mrb[0].mxu0 %v646
      %v704 = vpop.f32.mrb[0].mxu0
      %v705 = vadd.f32 0.0, %v704
      %v706 = vpop.f32.mrb[0].mxu0
      %v707 = vpop.f32.mrb[0].mxu0
      %v708 = vadd.f32 0.0, %v707
      %v709 = vpop.f32.mrb[0].mxu0
      %710 = vmatprep.mubr.bf16.mxu0 0
      %711 = vmatmul.mubr.bf16.gmra.mrb[0].mxu0 %v649
      %v712 = vpop.f32.mrb[0].mxu0
      %v713 = vadd.f32 0.0, %v712
      %v714 = vpop.f32.mrb[0].mxu0
      %v715 = vpop.f32.mrb[0].mxu0
      %v716 = vadd.f32 0.0, %v715
      %v717 = vpop.f32.mrb[0].mxu0
      %718 = vdwg.mxu0
      %v719 = vld [vmem:[%s3] sm:$0x1]
      %v720 = vld [vmem:[%s4] sm:$0x1]
      %vm721 = vcmask 261120
      %v722 = vsel %vm721, %v596, 0.0
      %723 = vadd.xlane.f32.xlu0 %v722
      %v724 = vpop.xlane.xlu0 %723
      %v725 = vsel %vm721, %v599, 0.0
      %726 = vadd.xlane.f32.xlu0 %v725
      %v727 = vpop.xlane.xlu0 %726
      %v728 = vsel %vm721, %v604, 0.0
      %729 = vadd.xlane.f32.xlu0 %v728
      %v730 = vpop.xlane.xlu0 %729
      %v731 = vsel %vm721, %v607, 0.0
      %732 = vadd.xlane.f32.xlu0 %v731
      %v733 = vpop.xlane.xlu0 %732
      %v734 = vsel %vm721, %v612, 0.0
      %735 = vadd.xlane.f32.xlu0 %v734
      %v736 = vpop.xlane.xlu0 %735
      %v737 = vsel %vm721, %v615, 0.0
      %738 = vadd.xlane.f32.xlu0 %v737
      %v739 = vpop.xlane.xlu0 %738
      %v740 = vsel %vm721, %v620, 0.0
      %741 = vadd.xlane.f32.xlu0 %v740
      %v742 = vpop.xlane.xlu0 %741
      %v743 = vsel %vm721, %v623, 0.0
      %744 = vadd.xlane.f32.xlu0 %v743
      %v745 = vpop.xlane.xlu0 %744
      %v746 = vrcp.pop 32.0
      %v747 = vmul.f32 %v724, %v746
      %v748 = vmul.f32 %v727, %v746
      %v749 = vmul.f32 %v730, %v746
      %v750 = vmul.f32 %v733, %v746
      %v751 = vmul.f32 %v736, %v746
      %v752 = vmul.f32 %v739, %v746
      %v753 = vmul.f32 %v742, %v746
      %v754 = vmul.f32 %v745, %v746
      %v755 = vsub.f32 %v596, %v747
      %v756 = vsub.f32 %v599, %v748
      %v757 = vsub.f32 %v604, %v749
      %v758 = vsub.f32 %v607, %v750
      %v759 = vsub.f32 %v612, %v751
      %v760 = vsub.f32 %v615, %v752
      %v761 = vsub.f32 %v620, %v753
      %v762 = vsub.f32 %v623, %v754
      %v763 = vmul.f32 %v755, %v755
      %v764 = vmul.f32 %v756, %v756
      %v765 = vmul.f32 %v757, %v757
      %v766 = vmul.f32 %v758, %v758
      %v767 = vmul.f32 %v759, %v759
      %v768 = vmul.f32 %v760, %v760
      %v769 = vmul.f32 %v761, %v761
      %v770 = vmul.f32 %v762, %v762
      %v771 = vsel %vm721, %v763, 0.0
      %772 = vadd.xlane.f32.xlu0 %v771
      %v773 = vpop.xlane.xlu0 %772
      %v774 = vsel %vm721, %v764, 0.0
      %775 = vadd.xlane.f32.xlu0 %v774
      %v776 = vpop.xlane.xlu0 %775
      %v777 = vsel %vm721, %v765, 0.0
      %778 = vadd.xlane.f32.xlu0 %v777
      %v779 = vpop.xlane.xlu0 %778
      %v780 = vsel %vm721, %v766, 0.0
      %781 = vadd.xlane.f32.xlu0 %v780
      %v782 = vpop.xlane.xlu0 %781
      %v783 = vsel %vm721, %v767, 0.0
      %784 = vadd.xlane.f32.xlu0 %v783
      %v785 = vpop.xlane.xlu0 %784
      %v786 = vsel %vm721, %v768, 0.0
      %787 = vadd.xlane.f32.xlu0 %v786
      %v788 = vpop.xlane.xlu0 %787
      %v789 = vsel %vm721, %v769, 0.0
      %790 = vadd.xlane.f32.xlu0 %v789
      %v791 = vpop.xlane.xlu0 %790
      %v792 = vsel %vm721, %v770, 0.0
      %793 = vadd.xlane.f32.xlu0 %v792
      %v794 = vpop.xlane.xlu0 %793
      %v795 = vmul.f32 %v773, %v746
      %v796 = vmul.f32 %v776, %v746
      %v797 = vmul.f32 %v779, %v746
      %v798 = vmul.f32 %v782, %v746
      %v799 = vmul.f32 %v785, %v746
      %v800 = vmul.f32 %v788, %v746
      %v801 = vmul.f32 %v791, %v746
      %v802 = vmul.f32 %v794, %v746
      %v803 = vadd.f32 %v795, 1e-05
      %v804 = vadd.f32 %v796, 1e-05
      %v805 = vadd.f32 %v797, 1e-05
      %v806 = vadd.f32 %v798, 1e-05
      %v807 = vadd.f32 %v799, 1e-05
      %v808 = vadd.f32 %v800, 1e-05
      %v809 = vadd.f32 %v801, 1e-05
      %v810 = vadd.f32 %v802, 1e-05
      %v811 = vrsqrt.pop %v803
      %v812 = vrsqrt.pop %v804
      %v813 = vrsqrt.pop %v805
      %v814 = vrsqrt.pop %v806
      %v815 = vrsqrt.pop %v807
      %v816 = vrsqrt.pop %v808
      %v817 = vrsqrt.pop %v809
      %v818 = vrsqrt.pop %v810
      %v819 = vmul.f32 %v755, %v811
      %v820 = vmul.f32 %v756, %v812
      %v821 = vmul.f32 %v757, %v813
      %v822 = vmul.f32 %v758, %v814
      %v823 = vmul.f32 %v759, %v815
      %v824 = vmul.f32 %v760, %v816
      %v825 = vmul.f32 %v761, %v817
      %v826 = vmul.f32 %v762, %v818
      %v828 = vlaneseq
      %v829 = vshrl.u32 %v828, 7
      %v830 = vsub.s32 0, %v829
      %v831 = vrot.slane %v719, %v830
      %v833 = vmul.f32 %v819, %v831
      %v834 = vmul.f32 %v820, %v831
      %v835 = vmul.f32 %v821, %v831
      %v836 = vmul.f32 %v822, %v831
      %v837 = vmul.f32 %v823, %v831
      %v838 = vmul.f32 %v824, %v831
      %v839 = vmul.f32 %v825, %v831
      %v840 = vmul.f32 %v826, %v831
      %v842 = vlaneseq
      %v843 = vshrl.u32 %v842, 7
      %v844 = vsub.s32 0, %v843
      %v845 = vrot.slane %v720, %v844
      %v847 = vadd.f32 %v833, %v845
      %v848 = vadd.f32 %v834, %v845
      %v849 = vadd.f32 %v835, %v845
      %v850 = vadd.f32 %v836, %v845
      %v851 = vadd.f32 %v837, %v845
      %v852 = vadd.f32 %v838, %v845
      %v853 = vadd.f32 %v839, %v845
      %v854 = vadd.f32 %v840, %v845
      %v855 = vld [vmem:[%s5] sm:$0x1]
      %v856 = vld [vmem:[%s6] sm:$0x1]
      %v857 = vsel %vm721, %v689, 0.0
      %858 = vadd.xlane.f32.xlu0 %v857
      %v859 = vpop.xlane.xlu0 %858
      %v860 = vsel %vm721, %v692, 0.0
      %861 = vadd.xlane.f32.xlu0 %v860
      %v862 = vpop.xlane.xlu0 %861
      %v863 = vsel %vm721, %v697, 0.0
      %864 = vadd.xlane.f32.xlu0 %v863
      %v865 = vpop.xlane.xlu0 %864
      %v866 = vsel %vm721, %v700, 0.0
      %867 = vadd.xlane.f32.xlu0 %v866
      %v868 = vpop.xlane.xlu0 %867
      %v869 = vsel %vm721, %v705, 0.0
      %870 = vadd.xlane.f32.xlu0 %v869
      %v871 = vpop.xlane.xlu0 %870
      %v872 = vsel %vm721, %v708, 0.0
      %873 = vadd.xlane.f32.xlu0 %v872
      %v874 = vpop.xlane.xlu0 %873
      %v875 = vsel %vm721, %v713, 0.0
      %876 = vadd.xlane.f32.xlu0 %v875
      %v877 = vpop.xlane.xlu0 %876
      %v878 = vsel %vm721, %v716, 0.0
      %879 = vadd.xlane.f32.xlu0 %v878
      %v880 = vpop.xlane.xlu0 %879
      %v881 = vmul.f32 %v859, %v746
      %v882 = vmul.f32 %v862, %v746
      %v883 = vmul.f32 %v865, %v746
      %v884 = vmul.f32 %v868, %v746
      %v885 = vmul.f32 %v871, %v746
      %v886 = vmul.f32 %v874, %v746
      %v887 = vmul.f32 %v877, %v746
      %v888 = vmul.f32 %v880, %v746
      %v889 = vsub.f32 %v689, %v881
      %v890 = vsub.f32 %v692, %v882
      %v891 = vsub.f32 %v697, %v883
      %v892 = vsub.f32 %v700, %v884
      %v893 = vsub.f32 %v705, %v885
      %v894 = vsub.f32 %v708, %v886
      %v895 = vsub.f32 %v713, %v887
      %v896 = vsub.f32 %v716, %v888
      %v897 = vmul.f32 %v889, %v889
      %v898 = vmul.f32 %v890, %v890
      %v899 = vmul.f32 %v891, %v891
      %v900 = vmul.f32 %v892, %v892
      %v901 = vmul.f32 %v893, %v893
      %v902 = vmul.f32 %v894, %v894
      %v903 = vmul.f32 %v895, %v895
      %v904 = vmul.f32 %v896, %v896
      %v905 = vsel %vm721, %v897, 0.0
      %906 = vadd.xlane.f32.xlu0 %v905
      %v907 = vpop.xlane.xlu0 %906
      %v908 = vsel %vm721, %v898, 0.0
      %909 = vadd.xlane.f32.xlu0 %v908
      %v910 = vpop.xlane.xlu0 %909
      %v911 = vsel %vm721, %v899, 0.0
      %912 = vadd.xlane.f32.xlu0 %v911
      %v913 = vpop.xlane.xlu0 %912
      %v914 = vsel %vm721, %v900, 0.0
      %915 = vadd.xlane.f32.xlu0 %v914
      %v916 = vpop.xlane.xlu0 %915
      %v917 = vsel %vm721, %v901, 0.0
      %918 = vadd.xlane.f32.xlu0 %v917
      %v919 = vpop.xlane.xlu0 %918
      %v920 = vsel %vm721, %v902, 0.0
      %921 = vadd.xlane.f32.xlu0 %v920
      %v922 = vpop.xlane.xlu0 %921
      %v923 = vsel %vm721, %v903, 0.0
      %924 = vadd.xlane.f32.xlu0 %v923
      %v925 = vpop.xlane.xlu0 %924
      %v926 = vsel %vm721, %v904, 0.0
      %927 = vadd.xlane.f32.xlu0 %v926
      %v928 = vpop.xlane.xlu0 %927
      %v929 = vmul.f32 %v907, %v746
      %v930 = vmul.f32 %v910, %v746
      %v931 = vmul.f32 %v913, %v746
      %v932 = vmul.f32 %v916, %v746
      %v933 = vmul.f32 %v919, %v746
      %v934 = vmul.f32 %v922, %v746
      %v935 = vmul.f32 %v925, %v746
      %v936 = vmul.f32 %v928, %v746
      %v937 = vadd.f32 %v929, 1e-05
      %v938 = vadd.f32 %v930, 1e-05
      %v939 = vadd.f32 %v931, 1e-05
      %v940 = vadd.f32 %v932, 1e-05
      %v941 = vadd.f32 %v933, 1e-05
      %v942 = vadd.f32 %v934, 1e-05
      %v943 = vadd.f32 %v935, 1e-05
      %v944 = vadd.f32 %v936, 1e-05
      %v945 = vrsqrt.pop %v937
      %v946 = vrsqrt.pop %v938
      %v947 = vrsqrt.pop %v939
      %v948 = vrsqrt.pop %v940
      %v949 = vrsqrt.pop %v941
      %v950 = vrsqrt.pop %v942
      %v951 = vrsqrt.pop %v943
      %v952 = vrsqrt.pop %v944
      %v953 = vmul.f32 %v889, %v945
      %v954 = vmul.f32 %v890, %v946
      %v955 = vmul.f32 %v891, %v947
      %v956 = vmul.f32 %v892, %v948
      %v957 = vmul.f32 %v893, %v949
      %v958 = vmul.f32 %v894, %v950
      %v959 = vmul.f32 %v895, %v951
      %v960 = vmul.f32 %v896, %v952
      %v962 = vlaneseq
      %v963 = vshrl.u32 %v962, 7
      %v964 = vsub.s32 0, %v963
      %v965 = vrot.slane %v855, %v964
      %v967 = vmul.f32 %v953, %v965
      %v968 = vmul.f32 %v954, %v965
      %v969 = vmul.f32 %v955, %v965
      %v970 = vmul.f32 %v956, %v965
      %v971 = vmul.f32 %v957, %v965
      %v972 = vmul.f32 %v958, %v965
      %v973 = vmul.f32 %v959, %v965
      %v974 = vmul.f32 %v960, %v965
      %v976 = vlaneseq
      %v977 = vshrl.u32 %v976, 7
      %v978 = vsub.s32 0, %v977
      %v979 = vrot.slane %v856, %v978
      %v981 = vadd.f32 %v967, %v979
      %v982 = vadd.f32 %v968, %v979
      %v983 = vadd.f32 %v969, %v979
      %v984 = vadd.f32 %v970, %v979
      %v985 = vadd.f32 %v971, %v979
      %v986 = vadd.f32 %v972, %v979
      %v987 = vadd.f32 %v973, %v979
      %v988 = vadd.f32 %v974, %v979
      %v989 = vpack.c.bf16 %v982, %v981
      %v990 = vpack.c.bf16 %v984, %v983
      %v991 = vpack.c.bf16 %v986, %v985
      %v992 = vpack.c.bf16 %v988, %v987
      %v993 = vld [vmem:[%s7] sm:$0xf]
      %v994 = vld [vmem:[%s7 + $0x4] sm:$0xf]
      %v995 = vld [vmem:[%s7 + $0x8] sm:$0xf]
      %v996 = vld [vmem:[%s7 + $0xc] sm:$0xf]
      %v1001 = vunpack.c.l.b16 %v993
      %v1002 = vunpack.c.l.b16 %v994
      %v1003 = vunpack.c.l.b16 %v995
      %v1004 = vunpack.c.l.b16 %v996
      %v1005 = vpack.c.b16 %v1002, %v1001
      %v1006 = vpack.c.b16 %v1004, %v1003
      %v1010 = vsel %vm721, %v989, 0
      %v1013 = vsel %vm721, %v990, 0
      %v1016 = vsel %vm721, %v991, 0
      %v1019 = vsel %vm721, %v992, 0
      %1021 = vmatprep.subr.bf16.mxu0 0
      %1022 = vmatpush1.bf16.msra.mxu0 %v1005
      %1023 = vmatprep.subr.bf16.mxu0 0
      %1024 = vmatpush1.bf16.msra.mxu0 %v1006
      %1025 = vmatprep.subr.bf16.mxu0 0
      %1026 = vmatpush1.bf16.msra.mxu0 0
      %1027 = vmatprep.subr.bf16.mxu0 0
      %1028 = vmatpush1.bf16.msra.mxu0 0
      %1029 = vmatprep.subr.bf16.mxu0 0
      %1030 = vmatpush1.bf16.msra.mxu0 0
      %1031 = vmatprep.subr.bf16.mxu0 0
      %1032 = vmatpush1.bf16.msra.mxu0 0
      %1033 = vmatprep.subr.bf16.mxu0 0
      %1034 = vmatpush1.bf16.msra.mxu0 0
      %1035 = vmatprep.subr.bf16.mxu0 0
      %1036 = vmatpush1.bf16.msra.mxu0 0
      %1037 = vmatprep.subr.bf16.mxu0 0
      %1038 = vmatpush1.bf16.msra.mxu0 0
      %1039 = vmatprep.subr.bf16.mxu0 0
      %1040 = vmatpush1.bf16.msra.mxu0 0
      %1041 = vmatprep.subr.bf16.mxu0 0
      %1042 = vmatpush1.bf16.msra.mxu0 0
      %1043 = vmatprep.subr.bf16.mxu0 0
      %1044 = vmatpush1.bf16.msra.mxu0 0
      %1045 = vmatprep.subr.bf16.mxu0 0
      %1046 = vmatpush1.bf16.msra.mxu0 0
      %1047 = vmatprep.subr.bf16.mxu0 0
      %1048 = vmatpush1.bf16.msra.mxu0 0
      %1049 = vmatprep.subr.bf16.mxu0 0
      %1050 = vmatpush1.bf16.msra.mxu0 0
      %1051 = vmatprep.subr.bf16.mxu0 0
      %1052 = vmatpush1.bf16.msra.mxu0 0
      %1053 = vmatprep.mubr.bf16.mxu0 0
      %1054 = vmatmul.mubr.bf16.gmra.mrb[0].mxu0 %v1010
      %v1055 = vpop.f32.mrb[0].mxu0
      %v1056 = vadd.f32 0.0, %v1055
      %v1057 = vpop.f32.mrb[0].mxu0
      %v1058 = vpop.f32.mrb[0].mxu0
      %v1059 = vadd.f32 0.0, %v1058
      %v1060 = vpop.f32.mrb[0].mxu0
      %1061 = vmatprep.mubr.bf16.mxu0 0
      %1062 = vmatmul.mubr.bf16.gmra.mrb[0].mxu0 %v1013
      %v1063 = vpop.f32.mrb[0].mxu0
      %v1064 = vadd.f32 0.0, %v1063
      %v1065 = vpop.f32.mrb[0].mxu0
      %v1066 = vpop.f32.mrb[0].mxu0
      %v1067 = vadd.f32 0.0, %v1066
      %v1068 = vpop.f32.mrb[0].mxu0
      %1069 = vmatprep.mubr.bf16.mxu0 0
      %1070 = vmatmul.mubr.bf16.gmra.mrb[0].mxu0 %v1016
      %v1071 = vpop.f32.mrb[0].mxu0
      %v1072 = vadd.f32 0.0, %v1071
      %v1073 = vpop.f32.mrb[0].mxu0
      %v1074 = vpop.f32.mrb[0].mxu0
      %v1075 = vadd.f32 0.0, %v1074
      %v1076 = vpop.f32.mrb[0].mxu0
      %1077 = vmatprep.mubr.bf16.mxu0 0
      %1078 = vmatmul.mubr.bf16.gmra.mrb[0].mxu0 %v1019
      %v1079 = vpop.f32.mrb[0].mxu0
      %v1080 = vadd.f32 0.0, %v1079
      %v1081 = vpop.f32.mrb[0].mxu0
      %v1082 = vpop.f32.mrb[0].mxu0
      %v1083 = vadd.f32 0.0, %v1082
      %v1084 = vpop.f32.mrb[0].mxu0
      %1085 = vdwg.mxu0
      %v1086 = vmul.f32 %v1056, 0.35355338
      %v1087 = vmul.f32 %v1059, 0.35355338
      %v1088 = vmul.f32 %v1064, 0.35355338
      %v1089 = vmul.f32 %v1067, 0.35355338
      %v1090 = vmul.f32 %v1072, 0.35355338
      %v1091 = vmul.f32 %v1075, 0.35355338
      %v1092 = vmul.f32 %v1080, 0.35355338
      %v1093 = vmul.f32 %v1083, 0.35355338
      %v1094 = vpack.c.bf16 %v848, %v847
      %v1095 = vpack.c.bf16 %v850, %v849
      %v1096 = vpack.c.bf16 %v852, %v851
      %v1097 = vpack.c.bf16 %v854, %v853
      %v1098 = vld [vmem:[%s8] sm:$0xf]
      %v1099 = vld [vmem:[%s8 + $0x4] sm:$0xf]
      %v1100 = vld [vmem:[%s8 + $0x8] sm:$0xf]
      %v1101 = vld [vmem:[%s8 + $0xc] sm:$0xf]
      %v1106 = vunpack.c.l.b16 %v1098
      %v1107 = vunpack.c.l.b16 %v1099
      %v1108 = vunpack.c.l.b16 %v1100
      %v1109 = vunpack.c.l.b16 %v1101
      %v1110 = vpack.c.b16 %v1107, %v1106
      %v1111 = vpack.c.b16 %v1109, %v1108
      %v1115 = vsel %vm721, %v1094, 0
      %v1118 = vsel %vm721, %v1095, 0
      %v1121 = vsel %vm721, %v1096, 0
      %v1124 = vsel %vm721, %v1097, 0
      %1126 = vmatprep.subr.bf16.mxu0 0
      %1127 = vmatpush1.bf16.msra.mxu0 %v1110
      %1128 = vmatprep.subr.bf16.mxu0 0
      %1129 = vmatpush1.bf16.msra.mxu0 %v1111
      %1130 = vmatprep.subr.bf16.mxu0 0
      %1131 = vmatpush1.bf16.msra.mxu0 0
      %1132 = vmatprep.subr.bf16.mxu0 0
      %1133 = vmatpush1.bf16.msra.mxu0 0
      %1134 = vmatprep.subr.bf16.mxu0 0
      %1135 = vmatpush1.bf16.msra.mxu0 0
      %1136 = vmatprep.subr.bf16.mxu0 0
      %1137 = vmatpush1.bf16.msra.mxu0 0
      %1138 = vmatprep.subr.bf16.mxu0 0
      %1139 = vmatpush1.bf16.msra.mxu0 0
      %1140 = vmatprep.subr.bf16.mxu0 0
      %1141 = vmatpush1.bf16.msra.mxu0 0
      %1142 = vmatprep.subr.bf16.mxu0 0
      %1143 = vmatpush1.bf16.msra.mxu0 0
      %1144 = vmatprep.subr.bf16.mxu0 0
      %1145 = vmatpush1.bf16.msra.mxu0 0
      %1146 = vmatprep.subr.bf16.mxu0 0
      %1147 = vmatpush1.bf16.msra.mxu0 0
      %1148 = vmatprep.subr.bf16.mxu0 0
      %1149 = vmatpush1.bf16.msra.mxu0 0
      %1150 = vmatprep.subr.bf16.mxu0 0
      %1151 = vmatpush1.bf16.msra.mxu0 0
      %1152 = vmatprep.subr.bf16.mxu0 0
      %1153 = vmatpush1.bf16.msra.mxu0 0
      %1154 = vmatprep.subr.bf16.mxu0 0
      %1155 = vmatpush1.bf16.msra.mxu0 0
      %1156 = vmatprep.subr.bf16.mxu0 0
      %1157 = vmatpush1.bf16.msra.mxu0 0
      %1158 = vmatprep.mubr.bf16.mxu0 0
      %1159 = vmatmul.mubr.bf16.gmra.mrb[0].mxu0 %v1115
      %v1160 = vpop.f32.mrb[0].mxu0
      %v1161 = vadd.f32 0.0, %v1160
      %v1162 = vpop.f32.mrb[0].mxu0
      %v1163 = vpop.f32.mrb[0].mxu0
      %v1164 = vadd.f32 0.0, %v1163
      %v1165 = vpop.f32.mrb[0].mxu0
      %1166 = vmatprep.mubr.bf16.mxu0 0
      %1167 = vmatmul.mubr.bf16.gmra.mrb[0].mxu0 %v1118
      %v1168 = vpop.f32.mrb[0].mxu0
      %v1169 = vadd.f32 0.0, %v1168
      %v1170 = vpop.f32.mrb[0].mxu0
      %v1171 = vpop.f32.mrb[0].mxu0
      %v1172 = vadd.f32 0.0, %v1171
      %v1173 = vpop.f32.mrb[0].mxu0
      %1174 = vmatprep.mubr.bf16.mxu0 0
      %1175 = vmatmul.mubr.bf16.gmra.mrb[0].mxu0 %v1121
      %v1176 = vpop.f32.mrb[0].mxu0
      %v1177 = vadd.f32 0.0, %v1176
      %v1178 = vpop.f32.mrb[0].mxu0
      %v1179 = vpop.f32.mrb[0].mxu0
      %v1180 = vadd.f32 0.0, %v1179
      %v1181 = vpop.f32.mrb[0].mxu0
      %1182 = vmatprep.mubr.bf16.mxu0 0
      %1183 = vmatmul.mubr.bf16.gmra.mrb[0].mxu0 %v1124
      %v1184 = vpop.f32.mrb[0].mxu0
      %v1185 = vadd.f32 0.0, %v1184
      %v1186 = vpop.f32.mrb[0].mxu0
      %v1187 = vpop.f32.mrb[0].mxu0
      %v1188 = vadd.f32 0.0, %v1187
      %v1189 = vpop.f32.mrb[0].mxu0
      %1190 = vdwg.mxu0
      %v1191 = vpack.c.bf16 %v599, %v596
      %v1192 = vpack.c.bf16 %v607, %v604
      %v1193 = vpack.c.bf16 %v615, %v612
      %v1194 = vpack.c.bf16 %v623, %v620
      %v1195 = vld [vmem:[%s9] sm:$0xf]
      %v1196 = vld [vmem:[%s9 + $0x4] sm:$0xf]
      %v1197 = vld [vmem:[%s9 + $0x8] sm:$0xf]
      %v1198 = vld [vmem:[%s9 + $0xc] sm:$0xf]
      %v1203 = vunpack.c.l.b16 %v1195
      %v1204 = vunpack.c.l.b16 %v1196
      %v1205 = vunpack.c.l.b16 %v1197
      %v1206 = vunpack.c.l.b16 %v1198
      %v1207 = vpack.c.b16 %v1204, %v1203
      %v1208 = vpack.c.b16 %v1206, %v1205
      %v1212 = vsel %vm721, %v1191, 0
      %v1215 = vsel %vm721, %v1192, 0
      %v1218 = vsel %vm721, %v1193, 0
      %v1221 = vsel %vm721, %v1194, 0
      %1223 = vmatprep.subr.bf16.mxu0 0
      %1224 = vmatpush1.bf16.msra.mxu0 %v1207
      %1225 = vmatprep.subr.bf16.mxu0 0
      %1226 = vmatpush1.bf16.msra.mxu0 %v1208
      %1227 = vmatprep.subr.bf16.mxu0 0
      %1228 = vmatpush1.bf16.msra.mxu0 0
      %1229 = vmatprep.subr.bf16.mxu0 0
      %1230 = vmatpush1.bf16.msra.mxu0 0
      %1231 = vmatprep.subr.bf16.mxu0 0
      %1232 = vmatpush1.bf16.msra.mxu0 0
      %1233 = vmatprep.subr.bf16.mxu0 0
      %1234 = vmatpush1.bf16.msra.mxu0 0
      %1235 = vmatprep.subr.bf16.mxu0 0
      %1236 = vmatpush1.bf16.msra.mxu0 0
      %1237 = vmatprep.subr.bf16.mxu0 0
      %1238 = vmatpush1.bf16.msra.mxu0 0
      %1239 = vmatprep.subr.bf16.mxu0 0
      %1240 = vmatpush1.bf16.msra.mxu0 0
      %1241 = vmatprep.subr.bf16.mxu0 0
      %1242 = vmatpush1.bf16.msra.mxu0 0
      %1243 = vmatprep.subr.bf16.mxu0 0
      %1244 = vmatpush1.bf16.msra.mxu0 0
      %1245 = vmatprep.subr.bf16.mxu0 0
      %1246 = vmatpush1.bf16.msra.mxu0 0
      %1247 = vmatprep.subr.bf16.mxu0 0
      %1248 = vmatpush1.bf16.msra.mxu0 0
      %1249 = vmatprep.subr.bf16.mxu0 0
      %1250 = vmatpush1.bf16.msra.mxu0 0
      %1251 = vmatprep.subr.bf16.mxu0 0
      %1252 = vmatpush1.bf16.msra.mxu0 0
      %1253 = vmatprep.subr.bf16.mxu0 0
      %1254 = vmatpush1.bf16.msra.mxu0 0
      %1255 = vmatprep.mubr.bf16.mxu0 0
      %1256 = vmatmul.mubr.bf16.gmra.mrb[0].mxu0 %v1212
      %v1257 = vpop.f32.mrb[0].mxu0
      %v1258 = vadd.f32 0.0, %v1257
      %v1259 = vpop.f32.mrb[0].mxu0
      %v1260 = vpop.f32.mrb[0].mxu0
      %v1261 = vadd.f32 0.0, %v1260
      %v1262 = vpop.f32.mrb[0].mxu0
      %1263 = vmatprep.mubr.bf16.mxu0 0
      %1264 = vmatmul.mubr.bf16.gmra.mrb[0].mxu0 %v1215
      %v1265 = vpop.f32.mrb[0].mxu0
      %v1266 = vadd.f32 0.0, %v1265
      %v1267 = vpop.f32.mrb[0].mxu0
      %v1268 = vpop.f32.mrb[0].mxu0
      %v1269 = vadd.f32 0.0, %v1268
      %v1270 = vpop.f32.mrb[0].mxu0
      %1271 = vmatprep.mubr.bf16.mxu0 0
      %1272 = vmatmul.mubr.bf16.gmra.mrb[0].mxu0 %v1218
      %v1273 = vpop.f32.mrb[0].mxu0
      %v1274 = vadd.f32 0.0, %v1273
      %v1275 = vpop.f32.mrb[0].mxu0
      %v1276 = vpop.f32.mrb[0].mxu0
      %v1277 = vadd.f32 0.0, %v1276
      %v1278 = vpop.f32.mrb[0].mxu0
      %1279 = vmatprep.mubr.bf16.mxu0 0
      %1280 = vmatmul.mubr.bf16.gmra.mrb[0].mxu0 %v1221
      %v1281 = vpop.f32.mrb[0].mxu0
      %v1282 = vadd.f32 0.0, %v1281
      %v1283 = vpop.f32.mrb[0].mxu0
      %v1284 = vpop.f32.mrb[0].mxu0
      %v1285 = vadd.f32 0.0, %v1284
      %v1286 = vpop.f32.mrb[0].mxu0
      %1287 = vdwg.mxu0
      %v1288 = vpack.c.bf16 %v1087, %v1086
      %v1289 = vpack.c.bf16 %v1089, %v1088
      %v1290 = vpack.c.bf16 %v1091, %v1090
      %v1291 = vpack.c.bf16 %v1093, %v1092
      %v1292 = vpack.c.bf16 %v1164, %v1161
      %v1293 = vpack.c.bf16 %v1172, %v1169
      %v1294 = vpack.c.bf16 %v1180, %v1177
      %v1295 = vpack.c.bf16 %v1188, %v1185
      %v1296 = vpack.c.bf16 %v1261, %v1258
      %v1297 = vpack.c.bf16 %v1269, %v1266
      %v1298 = vpack.c.bf16 %v1277, %v1274
      %v1299 = vpack.c.bf16 %v1285, %v1282
      %vm1300 = vcmask 64512
      %v1302 = vsel %vm1300, %v1288, 0
      %v1305 = vsel %vm1300, %v1292, 0
      %1307 = vmatprep.subr.bf16.mxu0 0
      %1308 = vmatpush1.bf16.xpose.msra.mxu0 %v1305
      %1309 = vmatprep.subr.bf16.mxu0 0
      %1310 = vmatpush1.bf16.xpose.msra.mxu0 0
      %1311 = vmatprep.subr.bf16.mxu0 0
      %1312 = vmatpush1.bf16.xpose.msra.mxu0 0
      %1313 = vmatprep.subr.bf16.mxu0 0
      %1314 = vmatpush1.bf16.xpose.msra.mxu0 0
      %1315 = vmatprep.subr.bf16.mxu0 0
      %1316 = vmatpush1.bf16.xpose.msra.mxu0 0
      %1317 = vmatprep.subr.bf16.mxu0 0
      %1318 = vmatpush1.bf16.xpose.msra.mxu0 0
      %1319 = vmatprep.subr.bf16.mxu0 0
      %1320 = vmatpush1.bf16.xpose.msra.mxu0 0
      %1321 = vmatprep.subr.bf16.mxu0 0
      %1322 = vmatpush1.bf16.xpose.msra.mxu0 0
      %1323 = vmatprep.subr.bf16.mxu0 0
      %1324 = vmatpush1.bf16.xpose.msra.mxu0 0
      %1325 = vmatprep.subr.bf16.mxu0 0
      %1326 = vmatpush1.bf16.xpose.msra.mxu0 0
      %1327 = vmatprep.subr.bf16.mxu0 0
      %1328 = vmatpush1.bf16.xpose.msra.mxu0 0
      %1329 = vmatprep.subr.bf16.mxu0 0
      %1330 = vmatpush1.bf16.xpose.msra.mxu0 0
      %1331 = vmatprep.subr.bf16.mxu0 0
      %1332 = vmatpush1.bf16.xpose.msra.mxu0 0
      %1333 = vmatprep.subr.bf16.mxu0 0
      %1334 = vmatpush1.bf16.xpose.msra.mxu0 0
      %1335 = vmatprep.subr.bf16.mxu0 0
      %1336 = vmatpush1.bf16.xpose.msra.mxu0 0
      %1337 = vmatprep.subr.bf16.mxu0 0
      %1338 = vmatpush1.bf16.xpose.msra.mxu0 0
      %1339 = vmatprep.mubr.bf16.mxu0 0
      %1340 = vmatmul.mubr.bf16.gmra.mrb[0].mxu0 %v1302
      %v1341 = vpop.f32.mrb[0].mxu0
      %v1342 = vadd.f32 0.0, %v1341
      %v1343 = vpop.f32.mrb[0].mxu0
      %v1344 = vpop.f32.mrb[0].mxu0
      %v1345 = vadd.f32 0.0, %v1344
      %v1346 = vpop.f32.mrb[0].mxu0
      %1347 = vdwg.mxu0
      %v1349 = vsel %vm1300, %v1289, 0
      %v1352 = vsel %vm1300, %v1293, 0
      %1354 = vmatprep.subr.bf16.mxu0 0
      %1355 = vmatpush1.bf16.xpose.msra.mxu0 %v1352
      %1356 = vmatprep.subr.bf16.mxu0 0
      %1357 = vmatpush1.bf16.xpose.msra.mxu0 0
      %1358 = vmatprep.subr.bf16.mxu0 0
      %1359 = vmatpush1.bf16.xpose.msra.mxu0 0
      %1360 = vmatprep.subr.bf16.mxu0 0
      %1361 = vmatpush1.bf16.xpose.msra.mxu0 0
      %1362 = vmatprep.subr.bf16.mxu0 0
      %1363 = vmatpush1.bf16.xpose.msra.mxu0 0
      %1364 = vmatprep.subr.bf16.mxu0 0
      %1365 = vmatpush1.bf16.xpose.msra.mxu0 0
      %1366 = vmatprep.subr.bf16.mxu0 0
      %1367 = vmatpush1.bf16.xpose.msra.mxu0 0
      %1368 = vmatprep.subr.bf16.mxu0 0
      %1369 = vmatpush1.bf16.xpose.msra.mxu0 0
      %1370 = vmatprep.subr.bf16.mxu0 0
      %1371 = vmatpush1.bf16.xpose.msra.mxu0 0
      %1372 = vmatprep.subr.bf16.mxu0 0
      %1373 = vmatpush1.bf16.xpose.msra.mxu0 0
      %1374 = vmatprep.subr.bf16.mxu0 0
      %1375 = vmatpush1.bf16.xpose.msra.mxu0 0
      %1376 = vmatprep.subr.bf16.mxu0 0
      %1377 = vmatpush1.bf16.xpose.msra.mxu0 0
      %1378 = vmatprep.subr.bf16.mxu0 0
      %1379 = vmatpush1.bf16.xpose.msra.mxu0 0
      %1380 = vmatprep.subr.bf16.mxu0 0
      %1381 = vmatpush1.bf16.xpose.msra.mxu0 0
      %1382 = vmatprep.subr.bf16.mxu0 0
      %1383 = vmatpush1.bf16.xpose.msra.mxu0 0
      %1384 = vmatprep.subr.bf16.mxu0 0
      %1385 = vmatpush1.bf16.xpose.msra.mxu0 0
      %1386 = vmatprep.mubr.bf16.mxu0 0
      %1387 = vmatmul.mubr.bf16.gmra.mrb[0].mxu0 %v1349
      %v1388 = vpop.f32.mrb[0].mxu0
      %v1389 = vadd.f32 0.0, %v1388
      %v1390 = vpop.f32.mrb[0].mxu0
      %v1391 = vpop.f32.mrb[0].mxu0
      %v1392 = vadd.f32 0.0, %v1391
      %v1393 = vpop.f32.mrb[0].mxu0
      %1394 = vdwg.mxu0
      %v1396 = vsel %vm1300, %v1290, 0
      %v1399 = vsel %vm1300, %v1294, 0
      %1401 = vmatprep.subr.bf16.mxu0 0
      %1402 = vmatpush1.bf16.xpose.msra.mxu0 %v1399
      %1403 = vmatprep.subr.bf16.mxu0 0
      %1404 = vmatpush1.bf16.xpose.msra.mxu0 0
      %1405 = vmatprep.subr.bf16.mxu0 0
      %1406 = vmatpush1.bf16.xpose.msra.mxu0 0
      %1407 = vmatprep.subr.bf16.mxu0 0
      %1408 = vmatpush1.bf16.xpose.msra.mxu0 0
      %1409 = vmatprep.subr.bf16.mxu0 0
      %1410 = vmatpush1.bf16.xpose.msra.mxu0 0
      %1411 = vmatprep.subr.bf16.mxu0 0
      %1412 = vmatpush1.bf16.xpose.msra.mxu0 0
      %1413 = vmatprep.subr.bf16.mxu0 0
      %1414 = vmatpush1.bf16.xpose.msra.mxu0 0
      %1415 = vmatprep.subr.bf16.mxu0 0
      %1416 = vmatpush1.bf16.xpose.msra.mxu0 0
      %1417 = vmatprep.subr.bf16.mxu0 0
      %1418 = vmatpush1.bf16.xpose.msra.mxu0 0
      %1419 = vmatprep.subr.bf16.mxu0 0
      %1420 = vmatpush1.bf16.xpose.msra.mxu0 0
      %1421 = vmatprep.subr.bf16.mxu0 0
      %1422 = vmatpush1.bf16.xpose.msra.mxu0 0
      %1423 = vmatprep.subr.bf16.mxu0 0
      %1424 = vmatpush1.bf16.xpose.msra.mxu0 0
      %1425 = vmatprep.subr.bf16.mxu0 0
      %1426 = vmatpush1.bf16.xpose.msra.mxu0 0
      %1427 = vmatprep.subr.bf16.mxu0 0
      %1428 = vmatpush1.bf16.xpose.msra.mxu0 0
      %1429 = vmatprep.subr.bf16.mxu0 0
      %1430 = vmatpush1.bf16.xpose.msra.mxu0 0
      %1431 = vmatprep.subr.bf16.mxu0 0
      %1432 = vmatpush1.bf16.xpose.msra.mxu0 0
      %1433 = vmatprep.mubr.bf16.mxu0 0
      %1434 = vmatmul.mubr.bf16.gmra.mrb[0].mxu0 %v1396
      %v1435 = vpop.f32.mrb[0].mxu0
      %v1436 = vadd.f32 0.0, %v1435
      %v1437 = vpop.f32.mrb[0].mxu0
      %v1438 = vpop.f32.mrb[0].mxu0
      %v1439 = vadd.f32 0.0, %v1438
      %v1440 = vpop.f32.mrb[0].mxu0
      %1441 = vdwg.mxu0
      %v1443 = vsel %vm1300, %v1291, 0
      %v1446 = vsel %vm1300, %v1295, 0
      %1448 = vmatprep.subr.bf16.mxu0 0
      %1449 = vmatpush1.bf16.xpose.msra.mxu0 %v1446
      %1450 = vmatprep.subr.bf16.mxu0 0
      %1451 = vmatpush1.bf16.xpose.msra.mxu0 0
      %1452 = vmatprep.subr.bf16.mxu0 0
      %1453 = vmatpush1.bf16.xpose.msra.mxu0 0
      %1454 = vmatprep.subr.bf16.mxu0 0
      %1455 = vmatpush1.bf16.xpose.msra.mxu0 0
      %1456 = vmatprep.subr.bf16.mxu0 0
      %1457 = vmatpush1.bf16.xpose.msra.mxu0 0
      %1458 = vmatprep.subr.bf16.mxu0 0
      %1459 = vmatpush1.bf16.xpose.msra.mxu0 0
      %1460 = vmatprep.subr.bf16.mxu0 0
      %1461 = vmatpush1.bf16.xpose.msra.mxu0 0
      %1462 = vmatprep.subr.bf16.mxu0 0
      %1463 = vmatpush1.bf16.xpose.msra.mxu0 0
      %1464 = vmatprep.subr.bf16.mxu0 0
      %1465 = vmatpush1.bf16.xpose.msra.mxu0 0
      %1466 = vmatprep.subr.bf16.mxu0 0
      %1467 = vmatpush1.bf16.xpose.msra.mxu0 0
      %1468 = vmatprep.subr.bf16.mxu0 0
      %1469 = vmatpush1.bf16.xpose.msra.mxu0 0
      %1470 = vmatprep.subr.bf16.mxu0 0
      %1471 = vmatpush1.bf16.xpose.msra.mxu0 0
      %1472 = vmatprep.subr.bf16.mxu0 0
      %1473 = vmatpush1.bf16.xpose.msra.mxu0 0
      %1474 = vmatprep.subr.bf16.mxu0 0
      %1475 = vmatpush1.bf16.xpose.msra.mxu0 0
      %1476 = vmatprep.subr.bf16.mxu0 0
      %1477 = vmatpush1.bf16.xpose.msra.mxu0 0
      %1478 = vmatprep.subr.bf16.mxu0 0
      %1479 = vmatpush1.bf16.xpose.msra.mxu0 0
      %1480 = vmatprep.mubr.bf16.mxu0 0
      %1481 = vmatmul.mubr.bf16.gmra.mrb[0].mxu0 %v1443
      %v1482 = vpop.f32.mrb[0].mxu0
      %v1483 = vadd.f32 0.0, %v1482
      %v1484 = vpop.f32.mrb[0].mxu0
      %v1485 = vpop.f32.mrb[0].mxu0
      %v1486 = vadd.f32 0.0, %v1485
      %v1487 = vpop.f32.mrb[0].mxu0
      %1488 = vdwg.mxu0
      %vm1489 = vcmask 130048
      %v1490 = vsel %vm1489, %v1342, -inf
      %1491 = vmax.xlane.f32.xlu0 %v1490
      %v1492 = vpop.xlane.xlu0 %1491
      %v1493 = vsel %vm1489, %v1345, -inf
      %1494 = vmax.xlane.f32.xlu0 %v1493
      %v1495 = vpop.xlane.xlu0 %1494
      %v1496 = vsel %vm1489, %v1389, -inf
      %1497 = vmax.xlane.f32.xlu0 %v1496
      %v1498 = vpop.xlane.xlu0 %1497
      %v1499 = vsel %vm1489, %v1392, -inf
      %1500 = vmax.xlane.f32.xlu0 %v1499
      %v1501 = vpop.xlane.xlu0 %1500
      %v1502 = vsel %vm1489, %v1436, -inf
      %1503 = vmax.xlane.f32.xlu0 %v1502
      %v1504 = vpop.xlane.xlu0 %1503
      %v1505 = vsel %vm1489, %v1439, -inf
      %1506 = vmax.xlane.f32.xlu0 %v1505
      %v1507 = vpop.xlane.xlu0 %1506
      %v1508 = vsel %vm1489, %v1483, -inf
      %1509 = vmax.xlane.f32.xlu0 %v1508
      %v1510 = vpop.xlane.xlu0 %1509
      %v1511 = vsel %vm1489, %v1486, -inf
      %1512 = vmax.xlane.f32.xlu0 %v1511
      %v1513 = vpop.xlane.xlu0 %1512
      %v1514 = vsub.f32 %v1342, %v1492
      %v1515 = vsub.f32 %v1345, %v1495
      %v1516 = vsub.f32 %v1389, %v1498
      %v1517 = vsub.f32 %v1392, %v1501
      %v1518 = vsub.f32 %v1436, %v1504
      %v1519 = vsub.f32 %v1439, %v1507
      %v1520 = vsub.f32 %v1483, %v1510
      %v1521 = vsub.f32 %v1486, %v1513
      %v1522 = vmul.f32 %v1514, 1.442695
      %v1523 = vpow.pop %v1522
      %v1524 = vmul.f32 %v1515, 1.442695
      %v1525 = vpow.pop %v1524
      %v1526 = vmul.f32 %v1516, 1.442695
      %v1527 = vpow.pop %v1526
      %v1528 = vmul.f32 %v1517, 1.442695
      %v1529 = vpow.pop %v1528
      %v1530 = vmul.f32 %v1518, 1.442695
      %v1531 = vpow.pop %v1530
      %v1532 = vmul.f32 %v1519, 1.442695
      %v1533 = vpow.pop %v1532
      %v1534 = vmul.f32 %v1520, 1.442695
      %v1535 = vpow.pop %v1534
      %v1536 = vmul.f32 %v1521, 1.442695
      %v1537 = vpow.pop %v1536
      %v1538 = vsel %vm1489, %v1523, 0.0
      %1539 = vadd.xlane.f32.xlu0 %v1538
      %v1540 = vpop.xlane.xlu0 %1539
      %v1541 = vsel %vm1489, %v1525, 0.0
      %1542 = vadd.xlane.f32.xlu0 %v1541
      %v1543 = vpop.xlane.xlu0 %1542
      %v1544 = vsel %vm1489, %v1527, 0.0
      %1545 = vadd.xlane.f32.xlu0 %v1544
      %v1546 = vpop.xlane.xlu0 %1545
      %v1547 = vsel %vm1489, %v1529, 0.0
      %1548 = vadd.xlane.f32.xlu0 %v1547
      %v1549 = vpop.xlane.xlu0 %1548
      %v1550 = vsel %vm1489, %v1531, 0.0
      %1551 = vadd.xlane.f32.xlu0 %v1550
      %v1552 = vpop.xlane.xlu0 %1551
      %v1553 = vsel %vm1489, %v1533, 0.0
      %1554 = vadd.xlane.f32.xlu0 %v1553
      %v1555 = vpop.xlane.xlu0 %1554
      %v1556 = vsel %vm1489, %v1535, 0.0
      %1557 = vadd.xlane.f32.xlu0 %v1556
      %v1558 = vpop.xlane.xlu0 %1557
      %v1559 = vsel %vm1489, %v1537, 0.0
      %1560 = vadd.xlane.f32.xlu0 %v1559
      %v1561 = vpop.xlane.xlu0 %1560
      %v1562 = vrcp.pop %v1540
      %v1563 = vrcp.pop %v1543
      %v1564 = vrcp.pop %v1546
      %v1565 = vrcp.pop %v1549
      %v1566 = vrcp.pop %v1552
      %v1567 = vrcp.pop %v1555
      %v1568 = vrcp.pop %v1558
      %v1569 = vrcp.pop %v1561
      %v1570 = vmul.f32 %v1523, %v1562
      %v1571 = vmul.f32 %v1525, %v1563
      %v1572 = vmul.f32 %v1527, %v1564
      %v1573 = vmul.f32 %v1529, %v1565
      %v1574 = vmul.f32 %v1531, %v1566
      %v1575 = vmul.f32 %v1533, %v1567
      %v1576 = vmul.f32 %v1535, %v1568
      %v1577 = vmul.f32 %v1537, %v1569
      %v1578 = vpack.c.bf16 %v1571, %v1570
      %v1579 = vpack.c.bf16 %v1573, %v1572
      %v1580 = vpack.c.bf16 %v1575, %v1574
      %v1581 = vpack.c.bf16 %v1577, %v1576
      %v1583 = vsel %vm1489, %v1578, 0
      %1585 = vmatprep.subr.bf16.mxu0 0
      %1586 = vmatpush1.bf16.msra.mxu0 %v1296
      %1587 = vmatprep.subr.bf16.mxu0 0
      %1588 = vmatpush1.bf16.msra.mxu0 0
      %1589 = vmatprep.subr.bf16.mxu0 0
      %1590 = vmatpush1.bf16.msra.mxu0 0
      %1591 = vmatprep.subr.bf16.mxu0 0
      %1592 = vmatpush1.bf16.msra.mxu0 0
      %1593 = vmatprep.subr.bf16.mxu0 0
      %1594 = vmatpush1.bf16.msra.mxu0 0
      %1595 = vmatprep.subr.bf16.mxu0 0
      %1596 = vmatpush1.bf16.msra.mxu0 0
      %1597 = vmatprep.subr.bf16.mxu0 0
      %1598 = vmatpush1.bf16.msra.mxu0 0
      %1599 = vmatprep.subr.bf16.mxu0 0
      %1600 = vmatpush1.bf16.msra.mxu0 0
      %1601 = vmatprep.subr.bf16.mxu0 0
      %1602 = vmatpush1.bf16.msra.mxu0 0
      %1603 = vmatprep.subr.bf16.mxu0 0
      %1604 = vmatpush1.bf16.msra.mxu0 0
      %1605 = vmatprep.subr.bf16.mxu0 0
      %1606 = vmatpush1.bf16.msra.mxu0 0
      %1607 = vmatprep.subr.bf16.mxu0 0
      %1608 = vmatpush1.bf16.msra.mxu0 0
      %1609 = vmatprep.subr.bf16.mxu0 0
      %1610 = vmatpush1.bf16.msra.mxu0 0
      %1611 = vmatprep.subr.bf16.mxu0 0
      %1612 = vmatpush1.bf16.msra.mxu0 0
      %1613 = vmatprep.subr.bf16.mxu0 0
      %1614 = vmatpush1.bf16.msra.mxu0 0
      %1615 = vmatprep.subr.bf16.mxu0 0
      %1616 = vmatpush1.bf16.msra.mxu0 0
      %1617 = vmatprep.mubr.bf16.mxu0 0
      %1618 = vmatmul.mubr.bf16.gmra.mrb[0].mxu0 %v1583
      %v1619 = vpop.f32.mrb[0].mxu0
      %v1620 = vadd.f32 0.0, %v1619
      %v1621 = vpop.f32.mrb[0].mxu0
      %v1622 = vpop.f32.mrb[0].mxu0
      %v1623 = vadd.f32 0.0, %v1622
      %v1624 = vpop.f32.mrb[0].mxu0
      %1625 = vdwg.mxu0
      %v1627 = vsel %vm1489, %v1579, 0
      %1629 = vmatprep.subr.bf16.mxu0 0
      %1630 = vmatpush1.bf16.msra.mxu0 %v1297
      %1631 = vmatprep.subr.bf16.mxu0 0
      %1632 = vmatpush1.bf16.msra.mxu0 0
      %1633 = vmatprep.subr.bf16.mxu0 0
      %1634 = vmatpush1.bf16.msra.mxu0 0
      %1635 = vmatprep.subr.bf16.mxu0 0
      %1636 = vmatpush1.bf16.msra.mxu0 0
      %1637 = vmatprep.subr.bf16.mxu0 0
      %1638 = vmatpush1.bf16.msra.mxu0 0
      %1639 = vmatprep.subr.bf16.mxu0 0
      %1640 = vmatpush1.bf16.msra.mxu0 0
      %1641 = vmatprep.subr.bf16.mxu0 0
      %1642 = vmatpush1.bf16.msra.mxu0 0
      %1643 = vmatprep.subr.bf16.mxu0 0
      %1644 = vmatpush1.bf16.msra.mxu0 0
      %1645 = vmatprep.subr.bf16.mxu0 0
      %1646 = vmatpush1.bf16.msra.mxu0 0
      %1647 = vmatprep.subr.bf16.mxu0 0
      %1648 = vmatpush1.bf16.msra.mxu0 0
      %1649 = vmatprep.subr.bf16.mxu0 0
      %1650 = vmatpush1.bf16.msra.mxu0 0
      %1651 = vmatprep.subr.bf16.mxu0 0
      %1652 = vmatpush1.bf16.msra.mxu0 0
      %1653 = vmatprep.subr.bf16.mxu0 0
      %1654 = vmatpush1.bf16.msra.mxu0 0
      %1655 = vmatprep.subr.bf16.mxu0 0
      %1656 = vmatpush1.bf16.msra.mxu0 0
      %1657 = vmatprep.subr.bf16.mxu0 0
      %1658 = vmatpush1.bf16.msra.mxu0 0
      %1659 = vmatprep.subr.bf16.mxu0 0
      %1660 = vmatpush1.bf16.msra.mxu0 0
      %1661 = vmatprep.mubr.bf16.mxu0 0
      %1662 = vmatmul.mubr.bf16.gmra.mrb[0].mxu0 %v1627
      %v1663 = vpop.f32.mrb[0].mxu0
      %v1664 = vadd.f32 0.0, %v1663
      %v1665 = vpop.f32.mrb[0].mxu0
      %v1666 = vpop.f32.mrb[0].mxu0
      %v1667 = vadd.f32 0.0, %v1666
      %v1668 = vpop.f32.mrb[0].mxu0
      %1669 = vdwg.mxu0
      %v1671 = vsel %vm1489, %v1580, 0
      %1673 = vmatprep.subr.bf16.mxu0 0
      %1674 = vmatpush1.bf16.msra.mxu0 %v1298
      %1675 = vmatprep.subr.bf16.mxu0 0
      %1676 = vmatpush1.bf16.msra.mxu0 0
      %1677 = vmatprep.subr.bf16.mxu0 0
      %1678 = vmatpush1.bf16.msra.mxu0 0
      %1679 = vmatprep.subr.bf16.mxu0 0
      %1680 = vmatpush1.bf16.msra.mxu0 0
      %1681 = vmatprep.subr.bf16.mxu0 0
      %1682 = vmatpush1.bf16.msra.mxu0 0
      %1683 = vmatprep.subr.bf16.mxu0 0
      %1684 = vmatpush1.bf16.msra.mxu0 0
      %1685 = vmatprep.subr.bf16.mxu0 0
      %1686 = vmatpush1.bf16.msra.mxu0 0
      %1687 = vmatprep.subr.bf16.mxu0 0
      %1688 = vmatpush1.bf16.msra.mxu0 0
      %1689 = vmatprep.subr.bf16.mxu0 0
      %1690 = vmatpush1.bf16.msra.mxu0 0
      %1691 = vmatprep.subr.bf16.mxu0 0
      %1692 = vmatpush1.bf16.msra.mxu0 0
      %1693 = vmatprep.subr.bf16.mxu0 0
      %1694 = vmatpush1.bf16.msra.mxu0 0
      %1695 = vmatprep.subr.bf16.mxu0 0
      %1696 = vmatpush1.bf16.msra.mxu0 0
      %1697 = vmatprep.subr.bf16.mxu0 0
      %1698 = vmatpush1.bf16.msra.mxu0 0
      %1699 = vmatprep.subr.bf16.mxu0 0
      %1700 = vmatpush1.bf16.msra.mxu0 0
      %1701 = vmatprep.subr.bf16.mxu0 0
      %1702 = vmatpush1.bf16.msra.mxu0 0
      %1703 = vmatprep.subr.bf16.mxu0 0
      %1704 = vmatpush1.bf16.msra.mxu0 0
      %1705 = vmatprep.mubr.bf16.mxu0 0
      %1706 = vmatmul.mubr.bf16.gmra.mrb[0].mxu0 %v1671
      %v1707 = vpop.f32.mrb[0].mxu0
      %v1708 = vadd.f32 0.0, %v1707
      %v1709 = vpop.f32.mrb[0].mxu0
      %v1710 = vpop.f32.mrb[0].mxu0
      %v1711 = vadd.f32 0.0, %v1710
      %v1712 = vpop.f32.mrb[0].mxu0
      %1713 = vdwg.mxu0
      %v1715 = vsel %vm1489, %v1581, 0
      %1717 = vmatprep.subr.bf16.mxu0 0
      %1718 = vmatpush1.bf16.msra.mxu0 %v1299
      %1719 = vmatprep.subr.bf16.mxu0 0
      %1720 = vmatpush1.bf16.msra.mxu0 0
      %1721 = vmatprep.subr.bf16.mxu0 0
      %1722 = vmatpush1.bf16.msra.mxu0 0
      %1723 = vmatprep.subr.bf16.mxu0 0
      %1724 = vmatpush1.bf16.msra.mxu0 0
      %1725 = vmatprep.subr.bf16.mxu0 0
      %1726 = vmatpush1.bf16.msra.mxu0 0
      %1727 = vmatprep.subr.bf16.mxu0 0
      %1728 = vmatpush1.bf16.msra.mxu0 0
      %1729 = vmatprep.subr.bf16.mxu0 0
      %1730 = vmatpush1.bf16.msra.mxu0 0
      %1731 = vmatprep.subr.bf16.mxu0 0
      %1732 = vmatpush1.bf16.msra.mxu0 0
      %1733 = vmatprep.subr.bf16.mxu0 0
      %1734 = vmatpush1.bf16.msra.mxu0 0
      %1735 = vmatprep.subr.bf16.mxu0 0
      %1736 = vmatpush1.bf16.msra.mxu0 0
      %1737 = vmatprep.subr.bf16.mxu0 0
      %1738 = vmatpush1.bf16.msra.mxu0 0
      %1739 = vmatprep.subr.bf16.mxu0 0
      %1740 = vmatpush1.bf16.msra.mxu0 0
      %1741 = vmatprep.subr.bf16.mxu0 0
      %1742 = vmatpush1.bf16.msra.mxu0 0
      %1743 = vmatprep.subr.bf16.mxu0 0
      %1744 = vmatpush1.bf16.msra.mxu0 0
      %1745 = vmatprep.subr.bf16.mxu0 0
      %1746 = vmatpush1.bf16.msra.mxu0 0
      %1747 = vmatprep.subr.bf16.mxu0 0
      %1748 = vmatpush1.bf16.msra.mxu0 0
      %1749 = vmatprep.mubr.bf16.mxu0 0
      %1750 = vmatmul.mubr.bf16.gmra.mrb[0].mxu0 %v1715
      %v1751 = vpop.f32.mrb[0].mxu0
      %v1752 = vadd.f32 0.0, %v1751
      %v1753 = vpop.f32.mrb[0].mxu0
      %v1754 = vpop.f32.mrb[0].mxu0
      %v1755 = vadd.f32 0.0, %v1754
      %v1756 = vpop.f32.mrb[0].mxu0
      %1757 = vdwg.mxu0
      %v1758 = vpack.c.bf16 %v1623, %v1620
      %v1759 = vpack.c.bf16 %v1667, %v1664
      %v1760 = vpack.c.bf16 %v1711, %v1708
      %v1761 = vpack.c.bf16 %v1755, %v1752
      %1763 = vrot.lane.b32.xlu0 %v1288, 120
      %v1764 = vpop.permute.xlu0 %1763
      %1766 = vrot.lane.b32.xlu0 %v1292, 120
      %v1767 = vpop.permute.xlu0 %1766
      %v1769 = vsel %vm1300, %v1764, 0
      %v1772 = vsel %vm1300, %v1767, 0
      %1774 = vmatprep.subr.bf16.mxu0 0
      %1775 = vmatpush1.bf16.xpose.msra.mxu0 %v1772
      %1776 = vmatprep.subr.bf16.mxu0 0
      %1777 = vmatpush1.bf16.xpose.msra.mxu0 0
      %1778 = vmatprep.subr.bf16.mxu0 0
      %1779 = vmatpush1.bf16.xpose.msra.mxu0 0
      %1780 = vmatprep.subr.bf16.mxu0 0
      %1781 = vmatpush1.bf16.xpose.msra.mxu0 0
      %1782 = vmatprep.subr.bf16.mxu0 0
      %1783 = vmatpush1.bf16.xpose.msra.mxu0 0
      %1784 = vmatprep.subr.bf16.mxu0 0
      %1785 = vmatpush1.bf16.xpose.msra.mxu0 0
      %1786 = vmatprep.subr.bf16.mxu0 0
      %1787 = vmatpush1.bf16.xpose.msra.mxu0 0
      %1788 = vmatprep.subr.bf16.mxu0 0
      %1789 = vmatpush1.bf16.xpose.msra.mxu0 0
      %1790 = vmatprep.subr.bf16.mxu0 0
      %1791 = vmatpush1.bf16.xpose.msra.mxu0 0
      %1792 = vmatprep.subr.bf16.mxu0 0
      %1793 = vmatpush1.bf16.xpose.msra.mxu0 0
      %1794 = vmatprep.subr.bf16.mxu0 0
      %1795 = vmatpush1.bf16.xpose.msra.mxu0 0
      %1796 = vmatprep.subr.bf16.mxu0 0
      %1797 = vmatpush1.bf16.xpose.msra.mxu0 0
      %1798 = vmatprep.subr.bf16.mxu0 0
      %1799 = vmatpush1.bf16.xpose.msra.mxu0 0
      %1800 = vmatprep.subr.bf16.mxu0 0
      %1801 = vmatpush1.bf16.xpose.msra.mxu0 0
      %1802 = vmatprep.subr.bf16.mxu0 0
      %1803 = vmatpush1.bf16.xpose.msra.mxu0 0
      %1804 = vmatprep.subr.bf16.mxu0 0
      %1805 = vmatpush1.bf16.xpose.msra.mxu0 0
      %1806 = vmatprep.mubr.bf16.mxu0 0
      %1807 = vmatmul.mubr.bf16.gmra.mrb[0].mxu0 %v1769
      %v1808 = vpop.f32.mrb[0].mxu0
      %v1809 = vadd.f32 0.0, %v1808
      %v1810 = vpop.f32.mrb[0].mxu0
      %v1811 = vpop.f32.mrb[0].mxu0
      %v1812 = vadd.f32 0.0, %v1811
      %v1813 = vpop.f32.mrb[0].mxu0
      %1814 = vdwg.mxu0
      %1816 = vrot.lane.b32.xlu0 %v1289, 120
      %v1817 = vpop.permute.xlu0 %1816
      %1819 = vrot.lane.b32.xlu0 %v1293, 120
      %v1820 = vpop.permute.xlu0 %1819
      %v1822 = vsel %vm1300, %v1817, 0
      %v1825 = vsel %vm1300, %v1820, 0
      %1827 = vmatprep.subr.bf16.mxu0 0
      %1828 = vmatpush1.bf16.xpose.msra.mxu0 %v1825
      %1829 = vmatprep.subr.bf16.mxu0 0
      %1830 = vmatpush1.bf16.xpose.msra.mxu0 0
      %1831 = vmatprep.subr.bf16.mxu0 0
      %1832 = vmatpush1.bf16.xpose.msra.mxu0 0
      %1833 = vmatprep.subr.bf16.mxu0 0
      %1834 = vmatpush1.bf16.xpose.msra.mxu0 0
      %1835 = vmatprep.subr.bf16.mxu0 0
      %1836 = vmatpush1.bf16.xpose.msra.mxu0 0
      %1837 = vmatprep.subr.bf16.mxu0 0
      %1838 = vmatpush1.bf16.xpose.msra.mxu0 0
      %1839 = vmatprep.subr.bf16.mxu0 0
      %1840 = vmatpush1.bf16.xpose.msra.mxu0 0
      %1841 = vmatprep.subr.bf16.mxu0 0
      %1842 = vmatpush1.bf16.xpose.msra.mxu0 0
      %1843 = vmatprep.subr.bf16.mxu0 0
      %1844 = vmatpush1.bf16.xpose.msra.mxu0 0
      %1845 = vmatprep.subr.bf16.mxu0 0
      %1846 = vmatpush1.bf16.xpose.msra.mxu0 0
      %1847 = vmatprep.subr.bf16.mxu0 0
      %1848 = vmatpush1.bf16.xpose.msra.mxu0 0
      %1849 = vmatprep.subr.bf16.mxu0 0
      %1850 = vmatpush1.bf16.xpose.msra.mxu0 0
      %1851 = vmatprep.subr.bf16.mxu0 0
      %1852 = vmatpush1.bf16.xpose.msra.mxu0 0
      %1853 = vmatprep.subr.bf16.mxu0 0
      %1854 = vmatpush1.bf16.xpose.msra.mxu0 0
      %1855 = vmatprep.subr.bf16.mxu0 0
      %1856 = vmatpush1.bf16.xpose.msra.mxu0 0
      %1857 = vmatprep.subr.bf16.mxu0 0
      %1858 = vmatpush1.bf16.xpose.msra.mxu0 0
      %1859 = vmatprep.mubr.bf16.mxu0 0
      %1860 = vmatmul.mubr.bf16.gmra.mrb[0].mxu0 %v1822
      %v1861 = vpop.f32.mrb[0].mxu0
      %v1862 = vadd.f32 0.0, %v1861
      %v1863 = vpop.f32.mrb[0].mxu0
      %v1864 = vpop.f32.mrb[0].mxu0
      %v1865 = vadd.f32 0.0, %v1864
      %v1866 = vpop.f32.mrb[0].mxu0
      %1867 = vdwg.mxu0
      %1869 = vrot.lane.b32.xlu0 %v1290, 120
      %v1870 = vpop.permute.xlu0 %1869
      %1872 = vrot.lane.b32.xlu0 %v1294, 120
      %v1873 = vpop.permute.xlu0 %1872
      %v1875 = vsel %vm1300, %v1870, 0
      %v1878 = vsel %vm1300, %v1873, 0
      %1880 = vmatprep.subr.bf16.mxu0 0
      %1881 = vmatpush1.bf16.xpose.msra.mxu0 %v1878
      %1882 = vmatprep.subr.bf16.mxu0 0
      %1883 = vmatpush1.bf16.xpose.msra.mxu0 0
      %1884 = vmatprep.subr.bf16.mxu0 0
      %1885 = vmatpush1.bf16.xpose.msra.mxu0 0
      %1886 = vmatprep.subr.bf16.mxu0 0
      %1887 = vmatpush1.bf16.xpose.msra.mxu0 0
      %1888 = vmatprep.subr.bf16.mxu0 0
      %1889 = vmatpush1.bf16.xpose.msra.mxu0 0
      %1890 = vmatprep.subr.bf16.mxu0 0
      %1891 = vmatpush1.bf16.xpose.msra.mxu0 0
      %1892 = vmatprep.subr.bf16.mxu0 0
      %1893 = vmatpush1.bf16.xpose.msra.mxu0 0
      %1894 = vmatprep.subr.bf16.mxu0 0
      %1895 = vmatpush1.bf16.xpose.msra.mxu0 0
      %1896 = vmatprep.subr.bf16.mxu0 0
      %1897 = vmatpush1.bf16.xpose.msra.mxu0 0
      %1898 = vmatprep.subr.bf16.mxu0 0
      %1899 = vmatpush1.bf16.xpose.msra.mxu0 0
      %1900 = vmatprep.subr.bf16.mxu0 0
      %1901 = vmatpush1.bf16.xpose.msra.mxu0 0
      %1902 = vmatprep.subr.bf16.mxu0 0
      %1903 = vmatpush1.bf16.xpose.msra.mxu0 0
      %1904 = vmatprep.subr.bf16.mxu0 0
      %1905 = vmatpush1.bf16.xpose.msra.mxu0 0
      %1906 = vmatprep.subr.bf16.mxu0 0
      %1907 = vmatpush1.bf16.xpose.msra.mxu0 0
      %1908 = vmatprep.subr.bf16.mxu0 0
      %1909 = vmatpush1.bf16.xpose.msra.mxu0 0
      %1910 = vmatprep.subr.bf16.mxu0 0
      %1911 = vmatpush1.bf16.xpose.msra.mxu0 0
      %1912 = vmatprep.mubr.bf16.mxu0 0
      %1913 = vmatmul.mubr.bf16.gmra.mrb[0].mxu0 %v1875
      %v1914 = vpop.f32.mrb[0].mxu0
      %v1915 = vadd.f32 0.0, %v1914
      %v1916 = vpop.f32.mrb[0].mxu0
      %v1917 = vpop.f32.mrb[0].mxu0
      %v1918 = vadd.f32 0.0, %v1917
      %v1919 = vpop.f32.mrb[0].mxu0
      %1920 = vdwg.mxu0
      %1922 = vrot.lane.b32.xlu0 %v1291, 120
      %v1923 = vpop.permute.xlu0 %1922
      %1925 = vrot.lane.b32.xlu0 %v1295, 120
      %v1926 = vpop.permute.xlu0 %1925
      %v1928 = vsel %vm1300, %v1923, 0
      %v1931 = vsel %vm1300, %v1926, 0
      %1933 = vmatprep.subr.bf16.mxu0 0
      %1934 = vmatpush1.bf16.xpose.msra.mxu0 %v1931
      %1935 = vmatprep.subr.bf16.mxu0 0
      %1936 = vmatpush1.bf16.xpose.msra.mxu0 0
      %1937 = vmatprep.subr.bf16.mxu0 0
      %1938 = vmatpush1.bf16.xpose.msra.mxu0 0
      %1939 = vmatprep.subr.bf16.mxu0 0
      %1940 = vmatpush1.bf16.xpose.msra.mxu0 0
      %1941 = vmatprep.subr.bf16.mxu0 0
      %1942 = vmatpush1.bf16.xpose.msra.mxu0 0
      %1943 = vmatprep.subr.bf16.mxu0 0
      %1944 = vmatpush1.bf16.xpose.msra.mxu0 0
      %1945 = vmatprep.subr.bf16.mxu0 0
      %1946 = vmatpush1.bf16.xpose.msra.mxu0 0
      %1947 = vmatprep.subr.bf16.mxu0 0
      %1948 = vmatpush1.bf16.xpose.msra.mxu0 0
      %1949 = vmatprep.subr.bf16.mxu0 0
      %1950 = vmatpush1.bf16.xpose.msra.mxu0 0
      %1951 = vmatprep.subr.bf16.mxu0 0
      %1952 = vmatpush1.bf16.xpose.msra.mxu0 0
      %1953 = vmatprep.subr.bf16.mxu0 0
      %1954 = vmatpush1.bf16.xpose.msra.mxu0 0
      %1955 = vmatprep.subr.bf16.mxu0 0
      %1956 = vmatpush1.bf16.xpose.msra.mxu0 0
      %1957 = vmatprep.subr.bf16.mxu0 0
      %1958 = vmatpush1.bf16.xpose.msra.mxu0 0
      %1959 = vmatprep.subr.bf16.mxu0 0
      %1960 = vmatpush1.bf16.xpose.msra.mxu0 0
      %1961 = vmatprep.subr.bf16.mxu0 0
      %1962 = vmatpush1.bf16.xpose.msra.mxu0 0
      %1963 = vmatprep.subr.bf16.mxu0 0
      %1964 = vmatpush1.bf16.xpose.msra.mxu0 0
      %1965 = vmatprep.mubr.bf16.mxu0 0
      %1966 = vmatmul.mubr.bf16.gmra.mrb[0].mxu0 %v1928
      %v1967 = vpop.f32.mrb[0].mxu0
      %v1968 = vadd.f32 0.0, %v1967
      %v1969 = vpop.f32.mrb[0].mxu0
      %v1970 = vpop.f32.mrb[0].mxu0
      %v1971 = vadd.f32 0.0, %v1970
      %v1972 = vpop.f32.mrb[0].mxu0
      %1973 = vdwg.mxu0
      %v1974 = vsel %vm1489, %v1809, -inf
      %1975 = vmax.xlane.f32.xlu0 %v1974
      %v1976 = vpop.xlane.xlu0 %1975
      %v1977 = vsel %vm1489, %v1812, -inf
      %1978 = vmax.xlane.f32.xlu0 %v1977
      %v1979 = vpop.xlane.xlu0 %1978
      %v1980 = vsel %vm1489, %v1862, -inf
      %1981 = vmax.xlane.f32.xlu0 %v1980
      %v1982 = vpop.xlane.xlu0 %1981
      %v1983 = vsel %vm1489, %v1865, -inf
      %1984 = vmax.xlane.f32.xlu0 %v1983
      %v1985 = vpop.xlane.xlu0 %1984
      %v1986 = vsel %vm1489, %v1915, -inf
      %1987 = vmax.xlane.f32.xlu0 %v1986
      %v1988 = vpop.xlane.xlu0 %1987
      %v1989 = vsel %vm1489, %v1918, -inf
      %1990 = vmax.xlane.f32.xlu0 %v1989
      %v1991 = vpop.xlane.xlu0 %1990
      %v1992 = vsel %vm1489, %v1968, -inf
      %1993 = vmax.xlane.f32.xlu0 %v1992
      %v1994 = vpop.xlane.xlu0 %1993
      %v1995 = vsel %vm1489, %v1971, -inf
      %1996 = vmax.xlane.f32.xlu0 %v1995
      %v1997 = vpop.xlane.xlu0 %1996
      %v1998 = vsub.f32 %v1809, %v1976
      %v1999 = vsub.f32 %v1812, %v1979
      %v2000 = vsub.f32 %v1862, %v1982
      %v2001 = vsub.f32 %v1865, %v1985
      %v2002 = vsub.f32 %v1915, %v1988
      %v2003 = vsub.f32 %v1918, %v1991
      %v2004 = vsub.f32 %v1968, %v1994
      %v2005 = vsub.f32 %v1971, %v1997
      %v2006 = vmul.f32 %v1998, 1.442695
      %v2007 = vpow.pop %v2006
      %v2008 = vmul.f32 %v1999, 1.442695
      %v2009 = vpow.pop %v2008
      %v2010 = vmul.f32 %v2000, 1.442695
      %v2011 = vpow.pop %v2010
      %v2012 = vmul.f32 %v2001, 1.442695
      %v2013 = vpow.pop %v2012
      %v2014 = vmul.f32 %v2002, 1.442695
      %v2015 = vpow.pop %v2014
      %v2016 = vmul.f32 %v2003, 1.442695
      %v2017 = vpow.pop %v2016
      %v2018 = vmul.f32 %v2004, 1.442695
      %v2019 = vpow.pop %v2018
      %v2020 = vmul.f32 %v2005, 1.442695
      %v2021 = vpow.pop %v2020
      %v2022 = vsel %vm1489, %v2007, 0.0
      %2023 = vadd.xlane.f32.xlu0 %v2022
      %v2024 = vpop.xlane.xlu0 %2023
      %v2025 = vsel %vm1489, %v2009, 0.0
      %2026 = vadd.xlane.f32.xlu0 %v2025
      %v2027 = vpop.xlane.xlu0 %2026
      %v2028 = vsel %vm1489, %v2011, 0.0
      %2029 = vadd.xlane.f32.xlu0 %v2028
      %v2030 = vpop.xlane.xlu0 %2029
      %v2031 = vsel %vm1489, %v2013, 0.0
      %2032 = vadd.xlane.f32.xlu0 %v2031
      %v2033 = vpop.xlane.xlu0 %2032
      %v2034 = vsel %vm1489, %v2015, 0.0
      %2035 = vadd.xlane.f32.xlu0 %v2034
      %v2036 = vpop.xlane.xlu0 %2035
      %v2037 = vsel %vm1489, %v2017, 0.0
      %2038 = vadd.xlane.f32.xlu0 %v2037
      %v2039 = vpop.xlane.xlu0 %2038
      %v2040 = vsel %vm1489, %v2019, 0.0
      %2041 = vadd.xlane.f32.xlu0 %v2040
      %v2042 = vpop.xlane.xlu0 %2041
      %v2043 = vsel %vm1489, %v2021, 0.0
      %2044 = vadd.xlane.f32.xlu0 %v2043
      %v2045 = vpop.xlane.xlu0 %2044
      %v2046 = vrcp.pop %v2024
      %v2047 = vrcp.pop %v2027
      %v2048 = vrcp.pop %v2030
      %v2049 = vrcp.pop %v2033
      %v2050 = vrcp.pop %v2036
      %v2051 = vrcp.pop %v2039
      %v2052 = vrcp.pop %v2042
      %v2053 = vrcp.pop %v2045
      %v2054 = vmul.f32 %v2007, %v2046
      %v2055 = vmul.f32 %v2009, %v2047
      %v2056 = vmul.f32 %v2011, %v2048
      %v2057 = vmul.f32 %v2013, %v2049
      %v2058 = vmul.f32 %v2015, %v2050
      %v2059 = vmul.f32 %v2017, %v2051
      %v2060 = vmul.f32 %v2019, %v2052
      %v2061 = vmul.f32 %v2021, %v2053
      %v2062 = vpack.c.bf16 %v2055, %v2054
      %v2063 = vpack.c.bf16 %v2057, %v2056
      %v2064 = vpack.c.bf16 %v2059, %v2058
      %v2065 = vpack.c.bf16 %v2061, %v2060
      %2067 = vrot.lane.b32.xlu0 %v1296, 120
      %v2068 = vpop.permute.xlu0 %2067
      %v2071 = vsel %vm1489, %v2062, 0
      %2073 = vmatprep.subr.bf16.mxu0 0
      %2074 = vmatpush1.bf16.msra.mxu0 %v2068
      %2075 = vmatprep.subr.bf16.mxu0 0
      %2076 = vmatpush1.bf16.msra.mxu0 0
      %2077 = vmatprep.subr.bf16.mxu0 0
      %2078 = vmatpush1.bf16.msra.mxu0 0
      %2079 = vmatprep.subr.bf16.mxu0 0
      %2080 = vmatpush1.bf16.msra.mxu0 0
      %2081 = vmatprep.subr.bf16.mxu0 0
      %2082 = vmatpush1.bf16.msra.mxu0 0
      %2083 = vmatprep.subr.bf16.mxu0 0
      %2084 = vmatpush1.bf16.msra.mxu0 0
      %2085 = vmatprep.subr.bf16.mxu0 0
      %2086 = vmatpush1.bf16.msra.mxu0 0
      %2087 = vmatprep.subr.bf16.mxu0 0
      %2088 = vmatpush1.bf16.msra.mxu0 0
      %2089 = vmatprep.subr.bf16.mxu0 0
      %2090 = vmatpush1.bf16.msra.mxu0 0
      %2091 = vmatprep.subr.bf16.mxu0 0
      %2092 = vmatpush1.bf16.msra.mxu0 0
      %2093 = vmatprep.subr.bf16.mxu0 0
      %2094 = vmatpush1.bf16.msra.mxu0 0
      %2095 = vmatprep.subr.bf16.mxu0 0
      %2096 = vmatpush1.bf16.msra.mxu0 0
      %2097 = vmatprep.subr.bf16.mxu0 0
      %2098 = vmatpush1.bf16.msra.mxu0 0
      %2099 = vmatprep.subr.bf16.mxu0 0
      %2100 = vmatpush1.bf16.msra.mxu0 0
      %2101 = vmatprep.subr.bf16.mxu0 0
      %2102 = vmatpush1.bf16.msra.mxu0 0
      %2103 = vmatprep.subr.bf16.mxu0 0
      %2104 = vmatpush1.bf16.msra.mxu0 0
      %2105 = vmatprep.mubr.bf16.mxu0 0
      %2106 = vmatmul.mubr.bf16.gmra.mrb[0].mxu0 %v2071
      %v2107 = vpop.f32.mrb[0].mxu0
      %v2108 = vadd.f32 0.0, %v2107
      %v2109 = vpop.f32.mrb[0].mxu0
      %v2110 = vpop.f32.mrb[0].mxu0
      %v2111 = vadd.f32 0.0, %v2110
      %v2112 = vpop.f32.mrb[0].mxu0
      %2113 = vdwg.mxu0
      %2115 = vrot.lane.b32.xlu0 %v1297, 120
      %v2116 = vpop.permute.xlu0 %2115
      %v2119 = vsel %vm1489, %v2063, 0
      %2121 = vmatprep.subr.bf16.mxu0 0
      %2122 = vmatpush1.bf16.msra.mxu0 %v2116
      %2123 = vmatprep.subr.bf16.mxu0 0
      %2124 = vmatpush1.bf16.msra.mxu0 0
      %2125 = vmatprep.subr.bf16.mxu0 0
      %2126 = vmatpush1.bf16.msra.mxu0 0
      %2127 = vmatprep.subr.bf16.mxu0 0
      %2128 = vmatpush1.bf16.msra.mxu0 0
      %2129 = vmatprep.subr.bf16.mxu0 0
      %2130 = vmatpush1.bf16.msra.mxu0 0
      %2131 = vmatprep.subr.bf16.mxu0 0
      %2132 = vmatpush1.bf16.msra.mxu0 0
      %2133 = vmatprep.subr.bf16.mxu0 0
      %2134 = vmatpush1.bf16.msra.mxu0 0
      %2135 = vmatprep.subr.bf16.mxu0 0
      %2136 = vmatpush1.bf16.msra.mxu0 0
      %2137 = vmatprep.subr.bf16.mxu0 0
      %2138 = vmatpush1.bf16.msra.mxu0 0
      %2139 = vmatprep.subr.bf16.mxu0 0
      %2140 = vmatpush1.bf16.msra.mxu0 0
      %2141 = vmatprep.subr.bf16.mxu0 0
      %2142 = vmatpush1.bf16.msra.mxu0 0
      %2143 = vmatprep.subr.bf16.mxu0 0
      %2144 = vmatpush1.bf16.msra.mxu0 0
      %2145 = vmatprep.subr.bf16.mxu0 0
      %2146 = vmatpush1.bf16.msra.mxu0 0
      %2147 = vmatprep.subr.bf16.mxu0 0
      %2148 = vmatpush1.bf16.msra.mxu0 0
      %2149 = vmatprep.subr.bf16.mxu0 0
      %2150 = vmatpush1.bf16.msra.mxu0 0
      %2151 = vmatprep.subr.bf16.mxu0 0
      %2152 = vmatpush1.bf16.msra.mxu0 0
      %2153 = vmatprep.mubr.bf16.mxu0 0
      %2154 = vmatmul.mubr.bf16.gmra.mrb[0].mxu0 %v2119
      %v2155 = vpop.f32.mrb[0].mxu0
      %v2156 = vadd.f32 0.0, %v2155
      %v2157 = vpop.f32.mrb[0].mxu0
      %v2158 = vpop.f32.mrb[0].mxu0
      %v2159 = vadd.f32 0.0, %v2158
      %v2160 = vpop.f32.mrb[0].mxu0
      %2161 = vdwg.mxu0
      %2163 = vrot.lane.b32.xlu0 %v1298, 120
      %v2164 = vpop.permute.xlu0 %2163
      %v2167 = vsel %vm1489, %v2064, 0
      %2169 = vmatprep.subr.bf16.mxu0 0
      %2170 = vmatpush1.bf16.msra.mxu0 %v2164
      %2171 = vmatprep.subr.bf16.mxu0 0
      %2172 = vmatpush1.bf16.msra.mxu0 0
      %2173 = vmatprep.subr.bf16.mxu0 0
      %2174 = vmatpush1.bf16.msra.mxu0 0
      %2175 = vmatprep.subr.bf16.mxu0 0
      %2176 = vmatpush1.bf16.msra.mxu0 0
      %2177 = vmatprep.subr.bf16.mxu0 0
      %2178 = vmatpush1.bf16.msra.mxu0 0
      %2179 = vmatprep.subr.bf16.mxu0 0
      %2180 = vmatpush1.bf16.msra.mxu0 0
      %2181 = vmatprep.subr.bf16.mxu0 0
      %2182 = vmatpush1.bf16.msra.mxu0 0
      %2183 = vmatprep.subr.bf16.mxu0 0
      %2184 = vmatpush1.bf16.msra.mxu0 0
      %2185 = vmatprep.subr.bf16.mxu0 0
      %2186 = vmatpush1.bf16.msra.mxu0 0
      %2187 = vmatprep.subr.bf16.mxu0 0
      %2188 = vmatpush1.bf16.msra.mxu0 0
      %2189 = vmatprep.subr.bf16.mxu0 0
      %2190 = vmatpush1.bf16.msra.mxu0 0
      %2191 = vmatprep.subr.bf16.mxu0 0
      %2192 = vmatpush1.bf16.msra.mxu0 0
      %2193 = vmatprep.subr.bf16.mxu0 0
      %2194 = vmatpush1.bf16.msra.mxu0 0
      %2195 = vmatprep.subr.bf16.mxu0 0
      %2196 = vmatpush1.bf16.msra.mxu0 0
      %2197 = vmatprep.subr.bf16.mxu0 0
      %2198 = vmatpush1.bf16.msra.mxu0 0
      %2199 = vmatprep.subr.bf16.mxu0 0
      %2200 = vmatpush1.bf16.msra.mxu0 0
      %2201 = vmatprep.mubr.bf16.mxu0 0
      %2202 = vmatmul.mubr.bf16.gmra.mrb[0].mxu0 %v2167
      %v2203 = vpop.f32.mrb[0].mxu0
      %v2204 = vadd.f32 0.0, %v2203
      %v2205 = vpop.f32.mrb[0].mxu0
      %v2206 = vpop.f32.mrb[0].mxu0
      %v2207 = vadd.f32 0.0, %v2206
      %v2208 = vpop.f32.mrb[0].mxu0
      %2209 = vdwg.mxu0
      %2211 = vrot.lane.b32.xlu0 %v1299, 120
      %v2212 = vpop.permute.xlu0 %2211
      %v2215 = vsel %vm1489, %v2065, 0
      %2217 = vmatprep.subr.bf16.mxu0 0
      %2218 = vmatpush1.bf16.msra.mxu0 %v2212
      %2219 = vmatprep.subr.bf16.mxu0 0
      %2220 = vmatpush1.bf16.msra.mxu0 0
      %2221 = vmatprep.subr.bf16.mxu0 0
      %2222 = vmatpush1.bf16.msra.mxu0 0
      %2223 = vmatprep.subr.bf16.mxu0 0
      %2224 = vmatpush1.bf16.msra.mxu0 0
      %2225 = vmatprep.subr.bf16.mxu0 0
      %2226 = vmatpush1.bf16.msra.mxu0 0
      %2227 = vmatprep.subr.bf16.mxu0 0
      %2228 = vmatpush1.bf16.msra.mxu0 0
      %2229 = vmatprep.subr.bf16.mxu0 0
      %2230 = vmatpush1.bf16.msra.mxu0 0
      %2231 = vmatprep.subr.bf16.mxu0 0
      %2232 = vmatpush1.bf16.msra.mxu0 0
      %2233 = vmatprep.subr.bf16.mxu0 0
      %2234 = vmatpush1.bf16.msra.mxu0 0
      %2235 = vmatprep.subr.bf16.mxu0 0
      %2236 = vmatpush1.bf16.msra.mxu0 0
      %2237 = vmatprep.subr.bf16.mxu0 0
      %2238 = vmatpush1.bf16.msra.mxu0 0
      %2239 = vmatprep.subr.bf16.mxu0 0
      %2240 = vmatpush1.bf16.msra.mxu0 0
      %2241 = vmatprep.subr.bf16.mxu0 0
      %2242 = vmatpush1.bf16.msra.mxu0 0
      %2243 = vmatprep.subr.bf16.mxu0 0
      %2244 = vmatpush1.bf16.msra.mxu0 0
      %2245 = vmatprep.subr.bf16.mxu0 0
      %2246 = vmatpush1.bf16.msra.mxu0 0
      %2247 = vmatprep.subr.bf16.mxu0 0
      %2248 = vmatpush1.bf16.msra.mxu0 0
      %2249 = vmatprep.mubr.bf16.mxu0 0
      %2250 = vmatmul.mubr.bf16.gmra.mrb[0].mxu0 %v2215
      %v2251 = vpop.f32.mrb[0].mxu0
      %v2252 = vadd.f32 0.0, %v2251
      %v2253 = vpop.f32.mrb[0].mxu0
      %v2254 = vpop.f32.mrb[0].mxu0
      %v2255 = vadd.f32 0.0, %v2254
      %v2256 = vpop.f32.mrb[0].mxu0
      %2257 = vdwg.mxu0
      %v2258 = vpack.c.bf16 %v2111, %v2108
      %v2259 = vpack.c.bf16 %v2159, %v2156
      %v2260 = vpack.c.bf16 %v2207, %v2204
      %v2261 = vpack.c.bf16 %v2255, %v2252
      %2262 = vrot.lane.b32.xlu0 %v1288, 112
      %v2263 = vpop.permute.xlu0 %2262
      %2264 = vrot.lane.b32.xlu0 %v1292, 112
      %v2265 = vpop.permute.xlu0 %2264
      %v2267 = vsel %vm1300, %v2263, 0
      %v2270 = vsel %vm1300, %v2265, 0
      %2272 = vmatprep.subr.bf16.mxu0 0
      %2273 = vmatpush1.bf16.xpose.msra.mxu0 %v2270
      %2274 = vmatprep.subr.bf16.mxu0 0
      %2275 = vmatpush1.bf16.xpose.msra.mxu0 0
      %2276 = vmatprep.subr.bf16.mxu0 0
      %2277 = vmatpush1.bf16.xpose.msra.mxu0 0
      %2278 = vmatprep.subr.bf16.mxu0 0
      %2279 = vmatpush1.bf16.xpose.msra.mxu0 0
      %2280 = vmatprep.subr.bf16.mxu0 0
      %2281 = vmatpush1.bf16.xpose.msra.mxu0 0
      %2282 = vmatprep.subr.bf16.mxu0 0
      %2283 = vmatpush1.bf16.xpose.msra.mxu0 0
      %2284 = vmatprep.subr.bf16.mxu0 0
      %2285 = vmatpush1.bf16.xpose.msra.mxu0 0
      %2286 = vmatprep.subr.bf16.mxu0 0
      %2287 = vmatpush1.bf16.xpose.msra.mxu0 0
      %2288 = vmatprep.subr.bf16.mxu0 0
      %2289 = vmatpush1.bf16.xpose.msra.mxu0 0
      %2290 = vmatprep.subr.bf16.mxu0 0
      %2291 = vmatpush1.bf16.xpose.msra.mxu0 0
      %2292 = vmatprep.subr.bf16.mxu0 0
      %2293 = vmatpush1.bf16.xpose.msra.mxu0 0
      %2294 = vmatprep.subr.bf16.mxu0 0
      %2295 = vmatpush1.bf16.xpose.msra.mxu0 0
      %2296 = vmatprep.subr.bf16.mxu0 0
      %2297 = vmatpush1.bf16.xpose.msra.mxu0 0
      %2298 = vmatprep.subr.bf16.mxu0 0
      %2299 = vmatpush1.bf16.xpose.msra.mxu0 0
      %2300 = vmatprep.subr.bf16.mxu0 0
      %2301 = vmatpush1.bf16.xpose.msra.mxu0 0
      %2302 = vmatprep.subr.bf16.mxu0 0
      %2303 = vmatpush1.bf16.xpose.msra.mxu0 0
      %2304 = vmatprep.mubr.bf16.mxu0 0
      %2305 = vmatmul.mubr.bf16.gmra.mrb[0].mxu0 %v2267
      %v2306 = vpop.f32.mrb[0].mxu0
      %v2307 = vadd.f32 0.0, %v2306
      %v2308 = vpop.f32.mrb[0].mxu0
      %v2309 = vpop.f32.mrb[0].mxu0
      %v2310 = vadd.f32 0.0, %v2309
      %v2311 = vpop.f32.mrb[0].mxu0
      %2312 = vdwg.mxu0
      %2313 = vrot.lane.b32.xlu0 %v1289, 112
      %v2314 = vpop.permute.xlu0 %2313
      %2315 = vrot.lane.b32.xlu0 %v1293, 112
      %v2316 = vpop.permute.xlu0 %2315
      %v2318 = vsel %vm1300, %v2314, 0
      %v2321 = vsel %vm1300, %v2316, 0
      %2323 = vmatprep.subr.bf16.mxu0 0
      %2324 = vmatpush1.bf16.xpose.msra.mxu0 %v2321
      %2325 = vmatprep.subr.bf16.mxu0 0
      %2326 = vmatpush1.bf16.xpose.msra.mxu0 0
      %2327 = vmatprep.subr.bf16.mxu0 0
      %2328 = vmatpush1.bf16.xpose.msra.mxu0 0
      %2329 = vmatprep.subr.bf16.mxu0 0
      %2330 = vmatpush1.bf16.xpose.msra.mxu0 0
      %2331 = vmatprep.subr.bf16.mxu0 0
      %2332 = vmatpush1.bf16.xpose.msra.mxu0 0
      %2333 = vmatprep.subr.bf16.mxu0 0
      %2334 = vmatpush1.bf16.xpose.msra.mxu0 0
      %2335 = vmatprep.subr.bf16.mxu0 0
      %2336 = vmatpush1.bf16.xpose.msra.mxu0 0
      %2337 = vmatprep.subr.bf16.mxu0 0
      %2338 = vmatpush1.bf16.xpose.msra.mxu0 0
      %2339 = vmatprep.subr.bf16.mxu0 0
      %2340 = vmatpush1.bf16.xpose.msra.mxu0 0
      %2341 = vmatprep.subr.bf16.mxu0 0
      %2342 = vmatpush1.bf16.xpose.msra.mxu0 0
      %2343 = vmatprep.subr.bf16.mxu0 0
      %2344 = vmatpush1.bf16.xpose.msra.mxu0 0
      %2345 = vmatprep.subr.bf16.mxu0 0
      %2346 = vmatpush1.bf16.xpose.msra.mxu0 0
      %2347 = vmatprep.subr.bf16.mxu0 0
      %2348 = vmatpush1.bf16.xpose.msra.mxu0 0
      %2349 = vmatprep.subr.bf16.mxu0 0
      %2350 = vmatpush1.bf16.xpose.msra.mxu0 0
      %2351 = vmatprep.subr.bf16.mxu0 0
      %2352 = vmatpush1.bf16.xpose.msra.mxu0 0
      %2353 = vmatprep.subr.bf16.mxu0 0
      %2354 = vmatpush1.bf16.xpose.msra.mxu0 0
      %2355 = vmatprep.mubr.bf16.mxu0 0
      %2356 = vmatmul.mubr.bf16.gmra.mrb[0].mxu0 %v2318
      %v2357 = vpop.f32.mrb[0].mxu0
      %v2358 = vadd.f32 0.0, %v2357
      %v2359 = vpop.f32.mrb[0].mxu0
      %v2360 = vpop.f32.mrb[0].mxu0
      %v2361 = vadd.f32 0.0, %v2360
      %v2362 = vpop.f32.mrb[0].mxu0
      %2363 = vdwg.mxu0
      %2364 = vrot.lane.b32.xlu0 %v1290, 112
      %v2365 = vpop.permute.xlu0 %2364
      %2366 = vrot.lane.b32.xlu0 %v1294, 112
      %v2367 = vpop.permute.xlu0 %2366
      %v2369 = vsel %vm1300, %v2365, 0
      %v2372 = vsel %vm1300, %v2367, 0
      %2374 = vmatprep.subr.bf16.mxu0 0
      %2375 = vmatpush1.bf16.xpose.msra.mxu0 %v2372
      %2376 = vmatprep.subr.bf16.mxu0 0
      %2377 = vmatpush1.bf16.xpose.msra.mxu0 0
      %2378 = vmatprep.subr.bf16.mxu0 0
      %2379 = vmatpush1.bf16.xpose.msra.mxu0 0
      %2380 = vmatprep.subr.bf16.mxu0 0
      %2381 = vmatpush1.bf16.xpose.msra.mxu0 0
      %2382 = vmatprep.subr.bf16.mxu0 0
      %2383 = vmatpush1.bf16.xpose.msra.mxu0 0
      %2384 = vmatprep.subr.bf16.mxu0 0
      %2385 = vmatpush1.bf16.xpose.msra.mxu0 0
      %2386 = vmatprep.subr.bf16.mxu0 0
      %2387 = vmatpush1.bf16.xpose.msra.mxu0 0
      %2388 = vmatprep.subr.bf16.mxu0 0
      %2389 = vmatpush1.bf16.xpose.msra.mxu0 0
      %2390 = vmatprep.subr.bf16.mxu0 0
      %2391 = vmatpush1.bf16.xpose.msra.mxu0 0
      %2392 = vmatprep.subr.bf16.mxu0 0
      %2393 = vmatpush1.bf16.xpose.msra.mxu0 0
      %2394 = vmatprep.subr.bf16.mxu0 0
      %2395 = vmatpush1.bf16.xpose.msra.mxu0 0
      %2396 = vmatprep.subr.bf16.mxu0 0
      %2397 = vmatpush1.bf16.xpose.msra.mxu0 0
      %2398 = vmatprep.subr.bf16.mxu0 0
      %2399 = vmatpush1.bf16.xpose.msra.mxu0 0
      %2400 = vmatprep.subr.bf16.mxu0 0
      %2401 = vmatpush1.bf16.xpose.msra.mxu0 0
      %2402 = vmatprep.subr.bf16.mxu0 0
      %2403 = vmatpush1.bf16.xpose.msra.mxu0 0
      %2404 = vmatprep.subr.bf16.mxu0 0
      %2405 = vmatpush1.bf16.xpose.msra.mxu0 0
      %2406 = vmatprep.mubr.bf16.mxu0 0
      %2407 = vmatmul.mubr.bf16.gmra.mrb[0].mxu0 %v2369
      %v2408 = vpop.f32.mrb[0].mxu0
      %v2409 = vadd.f32 0.0, %v2408
      %v2410 = vpop.f32.mrb[0].mxu0
      %v2411 = vpop.f32.mrb[0].mxu0
      %v2412 = vadd.f32 0.0, %v2411
      %v2413 = vpop.f32.mrb[0].mxu0
      %2414 = vdwg.mxu0
      %2415 = vrot.lane.b32.xlu0 %v1291, 112
      %v2416 = vpop.permute.xlu0 %2415
      %2417 = vrot.lane.b32.xlu0 %v1295, 112
      %v2418 = vpop.permute.xlu0 %2417
      %v2420 = vsel %vm1300, %v2416, 0
      %v2423 = vsel %vm1300, %v2418, 0
      %2425 = vmatprep.subr.bf16.mxu0 0
      %2426 = vmatpush1.bf16.xpose.msra.mxu0 %v2423
      %2427 = vmatprep.subr.bf16.mxu0 0
      %2428 = vmatpush1.bf16.xpose.msra.mxu0 0
      %2429 = vmatprep.subr.bf16.mxu0 0
      %2430 = vmatpush1.bf16.xpose.msra.mxu0 0
      %2431 = vmatprep.subr.bf16.mxu0 0
      %2432 = vmatpush1.bf16.xpose.msra.mxu0 0
      %2433 = vmatprep.subr.bf16.mxu0 0
      %2434 = vmatpush1.bf16.xpose.msra.mxu0 0
      %2435 = vmatprep.subr.bf16.mxu0 0
      %2436 = vmatpush1.bf16.xpose.msra.mxu0 0
      %2437 = vmatprep.subr.bf16.mxu0 0
      %2438 = vmatpush1.bf16.xpose.msra.mxu0 0
      %2439 = vmatprep.subr.bf16.mxu0 0
      %2440 = vmatpush1.bf16.xpose.msra.mxu0 0
      %2441 = vmatprep.subr.bf16.mxu0 0
      %2442 = vmatpush1.bf16.xpose.msra.mxu0 0
      %2443 = vmatprep.subr.bf16.mxu0 0
      %2444 = vmatpush1.bf16.xpose.msra.mxu0 0
      %2445 = vmatprep.subr.bf16.mxu0 0
      %2446 = vmatpush1.bf16.xpose.msra.mxu0 0
      %2447 = vmatprep.subr.bf16.mxu0 0
      %2448 = vmatpush1.bf16.xpose.msra.mxu0 0
      %2449 = vmatprep.subr.bf16.mxu0 0
      %2450 = vmatpush1.bf16.xpose.msra.mxu0 0
      %2451 = vmatprep.subr.bf16.mxu0 0
      %2452 = vmatpush1.bf16.xpose.msra.mxu0 0
      %2453 = vmatprep.subr.bf16.mxu0 0
      %2454 = vmatpush1.bf16.xpose.msra.mxu0 0
      %2455 = vmatprep.subr.bf16.mxu0 0
      %2456 = vmatpush1.bf16.xpose.msra.mxu0 0
      %2457 = vmatprep.mubr.bf16.mxu0 0
      %2458 = vmatmul.mubr.bf16.gmra.mrb[0].mxu0 %v2420
      %v2459 = vpop.f32.mrb[0].mxu0
      %v2460 = vadd.f32 0.0, %v2459
      %v2461 = vpop.f32.mrb[0].mxu0
      %v2462 = vpop.f32.mrb[0].mxu0
      %v2463 = vadd.f32 0.0, %v2462
      %v2464 = vpop.f32.mrb[0].mxu0
      %2465 = vdwg.mxu0
      %v2466 = vsel %vm1489, %v2307, -inf
      %2467 = vmax.xlane.f32.xlu0 %v2466
      %v2468 = vpop.xlane.xlu0 %2467
      %v2469 = vsel %vm1489, %v2310, -inf
      %2470 = vmax.xlane.f32.xlu0 %v2469
      %v2471 = vpop.xlane.xlu0 %2470
      %v2472 = vsel %vm1489, %v2358, -inf
      %2473 = vmax.xlane.f32.xlu0 %v2472
      %v2474 = vpop.xlane.xlu0 %2473
      %v2475 = vsel %vm1489, %v2361, -inf
      %2476 = vmax.xlane.f32.xlu0 %v2475
      %v2477 = vpop.xlane.xlu0 %2476
      %v2478 = vsel %vm1489, %v2409, -inf
      %2479 = vmax.xlane.f32.xlu0 %v2478
      %v2480 = vpop.xlane.xlu0 %2479
      %v2481 = vsel %vm1489, %v2412, -inf
      %2482 = vmax.xlane.f32.xlu0 %v2481
      %v2483 = vpop.xlane.xlu0 %2482
      %v2484 = vsel %vm1489, %v2460, -inf
      %2485 = vmax.xlane.f32.xlu0 %v2484
      %v2486 = vpop.xlane.xlu0 %2485
      %v2487 = vsel %vm1489, %v2463, -inf
      %2488 = vmax.xlane.f32.xlu0 %v2487
      %v2489 = vpop.xlane.xlu0 %2488
      %v2490 = vsub.f32 %v2307, %v2468
      %v2491 = vsub.f32 %v2310, %v2471
      %v2492 = vsub.f32 %v2358, %v2474
      %v2493 = vsub.f32 %v2361, %v2477
      %v2494 = vsub.f32 %v2409, %v2480
      %v2495 = vsub.f32 %v2412, %v2483
      %v2496 = vsub.f32 %v2460, %v2486
      %v2497 = vsub.f32 %v2463, %v2489
      %v2498 = vmul.f32 %v2490, 1.442695
      %v2499 = vpow.pop %v2498
      %v2500 = vmul.f32 %v2491, 1.442695
      %v2501 = vpow.pop %v2500
      %v2502 = vmul.f32 %v2492, 1.442695
      %v2503 = vpow.pop %v2502
      %v2504 = vmul.f32 %v2493, 1.442695
      %v2505 = vpow.pop %v2504
      %v2506 = vmul.f32 %v2494, 1.442695
      %v2507 = vpow.pop %v2506
      %v2508 = vmul.f32 %v2495, 1.442695
      %v2509 = vpow.pop %v2508
      %v2510 = vmul.f32 %v2496, 1.442695
      %v2511 = vpow.pop %v2510
      %v2512 = vmul.f32 %v2497, 1.442695
      %v2513 = vpow.pop %v2512
      %v2514 = vsel %vm1489, %v2499, 0.0
      %2515 = vadd.xlane.f32.xlu0 %v2514
      %v2516 = vpop.xlane.xlu0 %2515
      %v2517 = vsel %vm1489, %v2501, 0.0
      %2518 = vadd.xlane.f32.xlu0 %v2517
      %v2519 = vpop.xlane.xlu0 %2518
      %v2520 = vsel %vm1489, %v2503, 0.0
      %2521 = vadd.xlane.f32.xlu0 %v2520
      %v2522 = vpop.xlane.xlu0 %2521
      %v2523 = vsel %vm1489, %v2505, 0.0
      %2524 = vadd.xlane.f32.xlu0 %v2523
      %v2525 = vpop.xlane.xlu0 %2524
      %v2526 = vsel %vm1489, %v2507, 0.0
      %2527 = vadd.xlane.f32.xlu0 %v2526
      %v2528 = vpop.xlane.xlu0 %2527
      %v2529 = vsel %vm1489, %v2509, 0.0
      %2530 = vadd.xlane.f32.xlu0 %v2529
      %v2531 = vpop.xlane.xlu0 %2530
      %v2532 = vsel %vm1489, %v2511, 0.0
      %2533 = vadd.xlane.f32.xlu0 %v2532
      %v2534 = vpop.xlane.xlu0 %2533
      %v2535 = vsel %vm1489, %v2513, 0.0
      %2536 = vadd.xlane.f32.xlu0 %v2535
      %v2537 = vpop.xlane.xlu0 %2536
      %v2538 = vrcp.pop %v2516
      %v2539 = vrcp.pop %v2519
      %v2540 = vrcp.pop %v2522
      %v2541 = vrcp.pop %v2525
      %v2542 = vrcp.pop %v2528
      %v2543 = vrcp.pop %v2531
      %v2544 = vrcp.pop %v2534
      %v2545 = vrcp.pop %v2537
      %v2546 = vmul.f32 %v2499, %v2538
      %v2547 = vmul.f32 %v2501, %v2539
      %v2548 = vmul.f32 %v2503, %v2540
      %v2549 = vmul.f32 %v2505, %v2541
      %v2550 = vmul.f32 %v2507, %v2542
      %v2551 = vmul.f32 %v2509, %v2543
      %v2552 = vmul.f32 %v2511, %v2544
      %v2553 = vmul.f32 %v2513, %v2545
      %v2554 = vpack.c.bf16 %v2547, %v2546
      %v2555 = vpack.c.bf16 %v2549, %v2548
      %v2556 = vpack.c.bf16 %v2551, %v2550
      %v2557 = vpack.c.bf16 %v2553, %v2552
      %2558 = vrot.lane.b32.xlu0 %v1296, 112
      %v2559 = vpop.permute.xlu0 %2558
      %v2562 = vsel %vm1489, %v2554, 0
      %2564 = vmatprep.subr.bf16.mxu0 0
      %2565 = vmatpush1.bf16.msra.mxu0 %v2559
      %2566 = vmatprep.subr.bf16.mxu0 0
      %2567 = vmatpush1.bf16.msra.mxu0 0
      %2568 = vmatprep.subr.bf16.mxu0 0
      %2569 = vmatpush1.bf16.msra.mxu0 0
      %2570 = vmatprep.subr.bf16.mxu0 0
      %2571 = vmatpush1.bf16.msra.mxu0 0
      %2572 = vmatprep.subr.bf16.mxu0 0
      %2573 = vmatpush1.bf16.msra.mxu0 0
      %2574 = vmatprep.subr.bf16.mxu0 0
      %2575 = vmatpush1.bf16.msra.mxu0 0
      %2576 = vmatprep.subr.bf16.mxu0 0
      %2577 = vmatpush1.bf16.msra.mxu0 0
      %2578 = vmatprep.subr.bf16.mxu0 0
      %2579 = vmatpush1.bf16.msra.mxu0 0
      %2580 = vmatprep.subr.bf16.mxu0 0
      %2581 = vmatpush1.bf16.msra.mxu0 0
      %2582 = vmatprep.subr.bf16.mxu0 0
      %2583 = vmatpush1.bf16.msra.mxu0 0
      %2584 = vmatprep.subr.bf16.mxu0 0
      %2585 = vmatpush1.bf16.msra.mxu0 0
      %2586 = vmatprep.subr.bf16.mxu0 0
      %2587 = vmatpush1.bf16.msra.mxu0 0
      %2588 = vmatprep.subr.bf16.mxu0 0
      %2589 = vmatpush1.bf16.msra.mxu0 0
      %2590 = vmatprep.subr.bf16.mxu0 0
      %2591 = vmatpush1.bf16.msra.mxu0 0
      %2592 = vmatprep.subr.bf16.mxu0 0
      %2593 = vmatpush1.bf16.msra.mxu0 0
      %2594 = vmatprep.subr.bf16.mxu0 0
      %2595 = vmatpush1.bf16.msra.mxu0 0
      %2596 = vmatprep.mubr.bf16.mxu0 0
      %2597 = vmatmul.mubr.bf16.gmra.mrb[0].mxu0 %v2562
      %v2598 = vpop.f32.mrb[0].mxu0
      %v2599 = vadd.f32 0.0, %v2598
      %v2600 = vpop.f32.mrb[0].mxu0
      %v2601 = vpop.f32.mrb[0].mxu0
      %v2602 = vadd.f32 0.0, %v2601
      %v2603 = vpop.f32.mrb[0].mxu0
      %2604 = vdwg.mxu0
      %2605 = vrot.lane.b32.xlu0 %v1297, 112
      %v2606 = vpop.permute.xlu0 %2605
      %v2609 = vsel %vm1489, %v2555, 0
      %2611 = vmatprep.subr.bf16.mxu0 0
      %2612 = vmatpush1.bf16.msra.mxu0 %v2606
      %2613 = vmatprep.subr.bf16.mxu0 0
      %2614 = vmatpush1.bf16.msra.mxu0 0
      %2615 = vmatprep.subr.bf16.mxu0 0
      %2616 = vmatpush1.bf16.msra.mxu0 0
      %2617 = vmatprep.subr.bf16.mxu0 0
      %2618 = vmatpush1.bf16.msra.mxu0 0
      %2619 = vmatprep.subr.bf16.mxu0 0
      %2620 = vmatpush1.bf16.msra.mxu0 0
      %2621 = vmatprep.subr.bf16.mxu0 0
      %2622 = vmatpush1.bf16.msra.mxu0 0
      %2623 = vmatprep.subr.bf16.mxu0 0
      %2624 = vmatpush1.bf16.msra.mxu0 0
      %2625 = vmatprep.subr.bf16.mxu0 0
      %2626 = vmatpush1.bf16.msra.mxu0 0
      %2627 = vmatprep.subr.bf16.mxu0 0
      %2628 = vmatpush1.bf16.msra.mxu0 0
      %2629 = vmatprep.subr.bf16.mxu0 0
      %2630 = vmatpush1.bf16.msra.mxu0 0
      %2631 = vmatprep.subr.bf16.mxu0 0
      %2632 = vmatpush1.bf16.msra.mxu0 0
      %2633 = vmatprep.subr.bf16.mxu0 0
      %2634 = vmatpush1.bf16.msra.mxu0 0
      %2635 = vmatprep.subr.bf16.mxu0 0
      %2636 = vmatpush1.bf16.msra.mxu0 0
      %2637 = vmatprep.subr.bf16.mxu0 0
      %2638 = vmatpush1.bf16.msra.mxu0 0
      %2639 = vmatprep.subr.bf16.mxu0 0
      %2640 = vmatpush1.bf16.msra.mxu0 0
      %2641 = vmatprep.subr.bf16.mxu0 0
      %2642 = vmatpush1.bf16.msra.mxu0 0
      %2643 = vmatprep.mubr.bf16.mxu0 0
      %2644 = vmatmul.mubr.bf16.gmra.mrb[0].mxu0 %v2609
      %v2645 = vpop.f32.mrb[0].mxu0
      %v2646 = vadd.f32 0.0, %v2645
      %v2647 = vpop.f32.mrb[0].mxu0
      %v2648 = vpop.f32.mrb[0].mxu0
      %v2649 = vadd.f32 0.0, %v2648
      %v2650 = vpop.f32.mrb[0].mxu0
      %2651 = vdwg.mxu0
      %2652 = vrot.lane.b32.xlu0 %v1298, 112
      %v2653 = vpop.permute.xlu0 %2652
      %v2656 = vsel %vm1489, %v2556, 0
      %2658 = vmatprep.subr.bf16.mxu0 0
      %2659 = vmatpush1.bf16.msra.mxu0 %v2653
      %2660 = vmatprep.subr.bf16.mxu0 0
      %2661 = vmatpush1.bf16.msra.mxu0 0
      %2662 = vmatprep.subr.bf16.mxu0 0
      %2663 = vmatpush1.bf16.msra.mxu0 0
      %2664 = vmatprep.subr.bf16.mxu0 0
      %2665 = vmatpush1.bf16.msra.mxu0 0
      %2666 = vmatprep.subr.bf16.mxu0 0
      %2667 = vmatpush1.bf16.msra.mxu0 0
      %2668 = vmatprep.subr.bf16.mxu0 0
      %2669 = vmatpush1.bf16.msra.mxu0 0
      %2670 = vmatprep.subr.bf16.mxu0 0
      %2671 = vmatpush1.bf16.msra.mxu0 0
      %2672 = vmatprep.subr.bf16.mxu0 0
      %2673 = vmatpush1.bf16.msra.mxu0 0
      %2674 = vmatprep.subr.bf16.mxu0 0
      %2675 = vmatpush1.bf16.msra.mxu0 0
      %2676 = vmatprep.subr.bf16.mxu0 0
      %2677 = vmatpush1.bf16.msra.mxu0 0
      %2678 = vmatprep.subr.bf16.mxu0 0
      %2679 = vmatpush1.bf16.msra.mxu0 0
      %2680 = vmatprep.subr.bf16.mxu0 0
      %2681 = vmatpush1.bf16.msra.mxu0 0
      %2682 = vmatprep.subr.bf16.mxu0 0
      %2683 = vmatpush1.bf16.msra.mxu0 0
      %2684 = vmatprep.subr.bf16.mxu0 0
      %2685 = vmatpush1.bf16.msra.mxu0 0
      %2686 = vmatprep.subr.bf16.mxu0 0
      %2687 = vmatpush1.bf16.msra.mxu0 0
      %2688 = vmatprep.subr.bf16.mxu0 0
      %2689 = vmatpush1.bf16.msra.mxu0 0
      %2690 = vmatprep.mubr.bf16.mxu0 0
      %2691 = vmatmul.mubr.bf16.gmra.mrb[0].mxu0 %v2656
      %v2692 = vpop.f32.mrb[0].mxu0
      %v2693 = vadd.f32 0.0, %v2692
      %v2694 = vpop.f32.mrb[0].mxu0
      %v2695 = vpop.f32.mrb[0].mxu0
      %v2696 = vadd.f32 0.0, %v2695
      %v2697 = vpop.f32.mrb[0].mxu0
      %2698 = vdwg.mxu0
      %2699 = vrot.lane.b32.xlu0 %v1299, 112
      %v2700 = vpop.permute.xlu0 %2699
      %v2703 = vsel %vm1489, %v2557, 0
      %2705 = vmatprep.subr.bf16.mxu0 0
      %2706 = vmatpush1.bf16.msra.mxu0 %v2700
      %2707 = vmatprep.subr.bf16.mxu0 0
      %2708 = vmatpush1.bf16.msra.mxu0 0
      %2709 = vmatprep.subr.bf16.mxu0 0
      %2710 = vmatpush1.bf16.msra.mxu0 0
      %2711 = vmatprep.subr.bf16.mxu0 0
      %2712 = vmatpush1.bf16.msra.mxu0 0
      %2713 = vmatprep.subr.bf16.mxu0 0
      %2714 = vmatpush1.bf16.msra.mxu0 0
      %2715 = vmatprep.subr.bf16.mxu0 0
      %2716 = vmatpush1.bf16.msra.mxu0 0
      %2717 = vmatprep.subr.bf16.mxu0 0
      %2718 = vmatpush1.bf16.msra.mxu0 0
      %2719 = vmatprep.subr.bf16.mxu0 0
      %2720 = vmatpush1.bf16.msra.mxu0 0
      %2721 = vmatprep.subr.bf16.mxu0 0
      %2722 = vmatpush1.bf16.msra.mxu0 0
      %2723 = vmatprep.subr.bf16.mxu0 0
      %2724 = vmatpush1.bf16.msra.mxu0 0
      %2725 = vmatprep.subr.bf16.mxu0 0
      %2726 = vmatpush1.bf16.msra.mxu0 0
      %2727 = vmatprep.subr.bf16.mxu0 0
      %2728 = vmatpush1.bf16.msra.mxu0 0
      %2729 = vmatprep.subr.bf16.mxu0 0
      %2730 = vmatpush1.bf16.msra.mxu0 0
      %2731 = vmatprep.subr.bf16.mxu0 0
      %2732 = vmatpush1.bf16.msra.mxu0 0
      %2733 = vmatprep.subr.bf16.mxu0 0
      %2734 = vmatpush1.bf16.msra.mxu0 0
      %2735 = vmatprep.subr.bf16.mxu0 0
      %2736 = vmatpush1.bf16.msra.mxu0 0
      %2737 = vmatprep.mubr.bf16.mxu0 0
      %2738 = vmatmul.mubr.bf16.gmra.mrb[0].mxu0 %v2703
      %v2739 = vpop.f32.mrb[0].mxu0
      %v2740 = vadd.f32 0.0, %v2739
      %v2741 = vpop.f32.mrb[0].mxu0
      %v2742 = vpop.f32.mrb[0].mxu0
      %v2743 = vadd.f32 0.0, %v2742
      %v2744 = vpop.f32.mrb[0].mxu0
      %2745 = vdwg.mxu0
      %v2746 = vpack.c.bf16 %v2602, %v2599
      %v2747 = vpack.c.bf16 %v2649, %v2646
      %v2748 = vpack.c.bf16 %v2696, %v2693
      %v2749 = vpack.c.bf16 %v2743, %v2740
      %2750 = vrot.lane.b32.xlu0 %v1288, 104
      %v2751 = vpop.permute.xlu0 %2750
      %2752 = vrot.lane.b32.xlu0 %v1292, 104
      %v2753 = vpop.permute.xlu0 %2752
      %v2755 = vsel %vm1300, %v2751, 0
      %v2758 = vsel %vm1300, %v2753, 0
      %2760 = vmatprep.subr.bf16.mxu0 0
      %2761 = vmatpush1.bf16.xpose.msra.mxu0 %v2758
      %2762 = vmatprep.subr.bf16.mxu0 0
      %2763 = vmatpush1.bf16.xpose.msra.mxu0 0
      %2764 = vmatprep.subr.bf16.mxu0 0
      %2765 = vmatpush1.bf16.xpose.msra.mxu0 0
      %2766 = vmatprep.subr.bf16.mxu0 0
      %2767 = vmatpush1.bf16.xpose.msra.mxu0 0
      %2768 = vmatprep.subr.bf16.mxu0 0
      %2769 = vmatpush1.bf16.xpose.msra.mxu0 0
      %2770 = vmatprep.subr.bf16.mxu0 0
      %2771 = vmatpush1.bf16.xpose.msra.mxu0 0
      %2772 = vmatprep.subr.bf16.mxu0 0
      %2773 = vmatpush1.bf16.xpose.msra.mxu0 0
      %2774 = vmatprep.subr.bf16.mxu0 0
      %2775 = vmatpush1.bf16.xpose.msra.mxu0 0
      %2776 = vmatprep.subr.bf16.mxu0 0
      %2777 = vmatpush1.bf16.xpose.msra.mxu0 0
      %2778 = vmatprep.subr.bf16.mxu0 0
      %2779 = vmatpush1.bf16.xpose.msra.mxu0 0
      %2780 = vmatprep.subr.bf16.mxu0 0
      %2781 = vmatpush1.bf16.xpose.msra.mxu0 0
      %2782 = vmatprep.subr.bf16.mxu0 0
      %2783 = vmatpush1.bf16.xpose.msra.mxu0 0
      %2784 = vmatprep.subr.bf16.mxu0 0
      %2785 = vmatpush1.bf16.xpose.msra.mxu0 0
      %2786 = vmatprep.subr.bf16.mxu0 0
      %2787 = vmatpush1.bf16.xpose.msra.mxu0 0
      %2788 = vmatprep.subr.bf16.mxu0 0
      %2789 = vmatpush1.bf16.xpose.msra.mxu0 0
      %2790 = vmatprep.subr.bf16.mxu0 0
      %2791 = vmatpush1.bf16.xpose.msra.mxu0 0
      %2792 = vmatprep.mubr.bf16.mxu0 0
      %2793 = vmatmul.mubr.bf16.gmra.mrb[0].mxu0 %v2755
      %v2794 = vpop.f32.mrb[0].mxu0
      %v2795 = vadd.f32 0.0, %v2794
      %v2796 = vpop.f32.mrb[0].mxu0
      %v2797 = vpop.f32.mrb[0].mxu0
      %v2798 = vadd.f32 0.0, %v2797
      %v2799 = vpop.f32.mrb[0].mxu0
      %2800 = vdwg.mxu0
      %2801 = vrot.lane.b32.xlu0 %v1289, 104
      %v2802 = vpop.permute.xlu0 %2801
      %2803 = vrot.lane.b32.xlu0 %v1293, 104
      %v2804 = vpop.permute.xlu0 %2803
      %v2806 = vsel %vm1300, %v2802, 0
      %v2809 = vsel %vm1300, %v2804, 0
      %2811 = vmatprep.subr.bf16.mxu0 0
      %2812 = vmatpush1.bf16.xpose.msra.mxu0 %v2809
      %2813 = vmatprep.subr.bf16.mxu0 0
      %2814 = vmatpush1.bf16.xpose.msra.mxu0 0
      %2815 = vmatprep.subr.bf16.mxu0 0
      %2816 = vmatpush1.bf16.xpose.msra.mxu0 0
      %2817 = vmatprep.subr.bf16.mxu0 0
      %2818 = vmatpush1.bf16.xpose.msra.mxu0 0
      %2819 = vmatprep.subr.bf16.mxu0 0
      %2820 = vmatpush1.bf16.xpose.msra.mxu0 0
      %2821 = vmatprep.subr.bf16.mxu0 0
      %2822 = vmatpush1.bf16.xpose.msra.mxu0 0
      %2823 = vmatprep.subr.bf16.mxu0 0
      %2824 = vmatpush1.bf16.xpose.msra.mxu0 0
      %2825 = vmatprep.subr.bf16.mxu0 0
      %2826 = vmatpush1.bf16.xpose.msra.mxu0 0
      %2827 = vmatprep.subr.bf16.mxu0 0
      %2828 = vmatpush1.bf16.xpose.msra.mxu0 0
      %2829 = vmatprep.subr.bf16.mxu0 0
      %2830 = vmatpush1.bf16.xpose.msra.mxu0 0
      %2831 = vmatprep.subr.bf16.mxu0 0
      %2832 = vmatpush1.bf16.xpose.msra.mxu0 0
      %2833 = vmatprep.subr.bf16.mxu0 0
      %2834 = vmatpush1.bf16.xpose.msra.mxu0 0
      %2835 = vmatprep.subr.bf16.mxu0 0
      %2836 = vmatpush1.bf16.xpose.msra.mxu0 0
      %2837 = vmatprep.subr.bf16.mxu0 0
      %2838 = vmatpush1.bf16.xpose.msra.mxu0 0
      %2839 = vmatprep.subr.bf16.mxu0 0
      %2840 = vmatpush1.bf16.xpose.msra.mxu0 0
      %2841 = vmatprep.subr.bf16.mxu0 0
      %2842 = vmatpush1.bf16.xpose.msra.mxu0 0
      %2843 = vmatprep.mubr.bf16.mxu0 0
      %2844 = vmatmul.mubr.bf16.gmra.mrb[0].mxu0 %v2806
      %v2845 = vpop.f32.mrb[0].mxu0
      %v2846 = vadd.f32 0.0, %v2845
      %v2847 = vpop.f32.mrb[0].mxu0
      %v2848 = vpop.f32.mrb[0].mxu0
      %v2849 = vadd.f32 0.0, %v2848
      %v2850 = vpop.f32.mrb[0].mxu0
      %2851 = vdwg.mxu0
      %2852 = vrot.lane.b32.xlu0 %v1290, 104
      %v2853 = vpop.permute.xlu0 %2852
      %2854 = vrot.lane.b32.xlu0 %v1294, 104
      %v2855 = vpop.permute.xlu0 %2854
      %v2857 = vsel %vm1300, %v2853, 0
      %v2860 = vsel %vm1300, %v2855, 0
      %2862 = vmatprep.subr.bf16.mxu0 0
      %2863 = vmatpush1.bf16.xpose.msra.mxu0 %v2860
      %2864 = vmatprep.subr.bf16.mxu0 0
      %2865 = vmatpush1.bf16.xpose.msra.mxu0 0
      %2866 = vmatprep.subr.bf16.mxu0 0
      %2867 = vmatpush1.bf16.xpose.msra.mxu0 0
      %2868 = vmatprep.subr.bf16.mxu0 0
      %2869 = vmatpush1.bf16.xpose.msra.mxu0 0
      %2870 = vmatprep.subr.bf16.mxu0 0
      %2871 = vmatpush1.bf16.xpose.msra.mxu0 0
      %2872 = vmatprep.subr.bf16.mxu0 0
      %2873 = vmatpush1.bf16.xpose.msra.mxu0 0
      %2874 = vmatprep.subr.bf16.mxu0 0
      %2875 = vmatpush1.bf16.xpose.msra.mxu0 0
      %2876 = vmatprep.subr.bf16.mxu0 0
      %2877 = vmatpush1.bf16.xpose.msra.mxu0 0
      %2878 = vmatprep.subr.bf16.mxu0 0
      %2879 = vmatpush1.bf16.xpose.msra.mxu0 0
      %2880 = vmatprep.subr.bf16.mxu0 0
      %2881 = vmatpush1.bf16.xpose.msra.mxu0 0
      %2882 = vmatprep.subr.bf16.mxu0 0
      %2883 = vmatpush1.bf16.xpose.msra.mxu0 0
      %2884 = vmatprep.subr.bf16.mxu0 0
      %2885 = vmatpush1.bf16.xpose.msra.mxu0 0
      %2886 = vmatprep.subr.bf16.mxu0 0
      %2887 = vmatpush1.bf16.xpose.msra.mxu0 0
      %2888 = vmatprep.subr.bf16.mxu0 0
      %2889 = vmatpush1.bf16.xpose.msra.mxu0 0
      %2890 = vmatprep.subr.bf16.mxu0 0
      %2891 = vmatpush1.bf16.xpose.msra.mxu0 0
      %2892 = vmatprep.subr.bf16.mxu0 0
      %2893 = vmatpush1.bf16.xpose.msra.mxu0 0
      %2894 = vmatprep.mubr.bf16.mxu0 0
      %2895 = vmatmul.mubr.bf16.gmra.mrb[0].mxu0 %v2857
      %v2896 = vpop.f32.mrb[0].mxu0
      %v2897 = vadd.f32 0.0, %v2896
      %v2898 = vpop.f32.mrb[0].mxu0
      %v2899 = vpop.f32.mrb[0].mxu0
      %v2900 = vadd.f32 0.0, %v2899
      %v2901 = vpop.f32.mrb[0].mxu0
      %2902 = vdwg.mxu0
      %2903 = vrot.lane.b32.xlu0 %v1291, 104
      %v2904 = vpop.permute.xlu0 %2903
      %2905 = vrot.lane.b32.xlu0 %v1295, 104
      %v2906 = vpop.permute.xlu0 %2905
      %v2908 = vsel %vm1300, %v2904, 0
      %v2911 = vsel %vm1300, %v2906, 0
      %2913 = vmatprep.subr.bf16.mxu0 0
      %2914 = vmatpush1.bf16.xpose.msra.mxu0 %v2911
      %2915 = vmatprep.subr.bf16.mxu0 0
      %2916 = vmatpush1.bf16.xpose.msra.mxu0 0
      %2917 = vmatprep.subr.bf16.mxu0 0
      %2918 = vmatpush1.bf16.xpose.msra.mxu0 0
      %2919 = vmatprep.subr.bf16.mxu0 0
      %2920 = vmatpush1.bf16.xpose.msra.mxu0 0
      %2921 = vmatprep.subr.bf16.mxu0 0
      %2922 = vmatpush1.bf16.xpose.msra.mxu0 0
      %2923 = vmatprep.subr.bf16.mxu0 0
      %2924 = vmatpush1.bf16.xpose.msra.mxu0 0
      %2925 = vmatprep.subr.bf16.mxu0 0
      %2926 = vmatpush1.bf16.xpose.msra.mxu0 0
      %2927 = vmatprep.subr.bf16.mxu0 0
      %2928 = vmatpush1.bf16.xpose.msra.mxu0 0
      %2929 = vmatprep.subr.bf16.mxu0 0
      %2930 = vmatpush1.bf16.xpose.msra.mxu0 0
      %2931 = vmatprep.subr.bf16.mxu0 0
      %2932 = vmatpush1.bf16.xpose.msra.mxu0 0
      %2933 = vmatprep.subr.bf16.mxu0 0
      %2934 = vmatpush1.bf16.xpose.msra.mxu0 0
      %2935 = vmatprep.subr.bf16.mxu0 0
      %2936 = vmatpush1.bf16.xpose.msra.mxu0 0
      %2937 = vmatprep.subr.bf16.mxu0 0
      %2938 = vmatpush1.bf16.xpose.msra.mxu0 0
      %2939 = vmatprep.subr.bf16.mxu0 0
      %2940 = vmatpush1.bf16.xpose.msra.mxu0 0
      %2941 = vmatprep.subr.bf16.mxu0 0
      %2942 = vmatpush1.bf16.xpose.msra.mxu0 0
      %2943 = vmatprep.subr.bf16.mxu0 0
      %2944 = vmatpush1.bf16.xpose.msra.mxu0 0
      %2945 = vmatprep.mubr.bf16.mxu0 0
      %2946 = vmatmul.mubr.bf16.gmra.mrb[0].mxu0 %v2908
      %v2947 = vpop.f32.mrb[0].mxu0
      %v2948 = vadd.f32 0.0, %v2947
      %v2949 = vpop.f32.mrb[0].mxu0
      %v2950 = vpop.f32.mrb[0].mxu0
      %v2951 = vadd.f32 0.0, %v2950
      %v2952 = vpop.f32.mrb[0].mxu0
      %2953 = vdwg.mxu0
      %v2954 = vsel %vm1489, %v2795, -inf
      %2955 = vmax.xlane.f32.xlu0 %v2954
      %v2956 = vpop.xlane.xlu0 %2955
      %v2957 = vsel %vm1489, %v2798, -inf
      %2958 = vmax.xlane.f32.xlu0 %v2957
      %v2959 = vpop.xlane.xlu0 %2958
      %v2960 = vsel %vm1489, %v2846, -inf
      %2961 = vmax.xlane.f32.xlu0 %v2960
      %v2962 = vpop.xlane.xlu0 %2961
      %v2963 = vsel %vm1489, %v2849, -inf
      %2964 = vmax.xlane.f32.xlu0 %v2963
      %v2965 = vpop.xlane.xlu0 %2964
      %v2966 = vsel %vm1489, %v2897, -inf
      %2967 = vmax.xlane.f32.xlu0 %v2966
      %v2968 = vpop.xlane.xlu0 %2967
      %v2969 = vsel %vm1489, %v2900, -inf
      %2970 = vmax.xlane.f32.xlu0 %v2969
      %v2971 = vpop.xlane.xlu0 %2970
      %v2972 = vsel %vm1489, %v2948, -inf
      %2973 = vmax.xlane.f32.xlu0 %v2972
      %v2974 = vpop.xlane.xlu0 %2973
      %v2975 = vsel %vm1489, %v2951, -inf
      %2976 = vmax.xlane.f32.xlu0 %v2975
      %v2977 = vpop.xlane.xlu0 %2976
      %v2978 = vsub.f32 %v2795, %v2956
      %v2979 = vsub.f32 %v2798, %v2959
      %v2980 = vsub.f32 %v2846, %v2962
      %v2981 = vsub.f32 %v2849, %v2965
      %v2982 = vsub.f32 %v2897, %v2968
      %v2983 = vsub.f32 %v2900, %v2971
      %v2984 = vsub.f32 %v2948, %v2974
      %v2985 = vsub.f32 %v2951, %v2977
      %v2986 = vmul.f32 %v2978, 1.442695
      %v2987 = vpow.pop %v2986
      %v2988 = vmul.f32 %v2979, 1.442695
      %v2989 = vpow.pop %v2988
      %v2990 = vmul.f32 %v2980, 1.442695
      %v2991 = vpow.pop %v2990
      %v2992 = vmul.f32 %v2981, 1.442695
      %v2993 = vpow.pop %v2992
      %v2994 = vmul.f32 %v2982, 1.442695
      %v2995 = vpow.pop %v2994
      %v2996 = vmul.f32 %v2983, 1.442695
      %v2997 = vpow.pop %v2996
      %v2998 = vmul.f32 %v2984, 1.442695
      %v2999 = vpow.pop %v2998
      %v3000 = vmul.f32 %v2985, 1.442695
      %v3001 = vpow.pop %v3000
      %v3002 = vsel %vm1489, %v2987, 0.0
      %3003 = vadd.xlane.f32.xlu0 %v3002
      %v3004 = vpop.xlane.xlu0 %3003
      %v3005 = vsel %vm1489, %v2989, 0.0
      %3006 = vadd.xlane.f32.xlu0 %v3005
      %v3007 = vpop.xlane.xlu0 %3006
      %v3008 = vsel %vm1489, %v2991, 0.0
      %3009 = vadd.xlane.f32.xlu0 %v3008
      %v3010 = vpop.xlane.xlu0 %3009
      %v3011 = vsel %vm1489, %v2993, 0.0
      %3012 = vadd.xlane.f32.xlu0 %v3011
      %v3013 = vpop.xlane.xlu0 %3012
      %v3014 = vsel %vm1489, %v2995, 0.0
      %3015 = vadd.xlane.f32.xlu0 %v3014
      %v3016 = vpop.xlane.xlu0 %3015
      %v3017 = vsel %vm1489, %v2997, 0.0
      %3018 = vadd.xlane.f32.xlu0 %v3017
      %v3019 = vpop.xlane.xlu0 %3018
      %v3020 = vsel %vm1489, %v2999, 0.0
      %3021 = vadd.xlane.f32.xlu0 %v3020
      %v3022 = vpop.xlane.xlu0 %3021
      %v3023 = vsel %vm1489, %v3001, 0.0
      %3024 = vadd.xlane.f32.xlu0 %v3023
      %v3025 = vpop.xlane.xlu0 %3024
      %v3026 = vrcp.pop %v3004
      %v3027 = vrcp.pop %v3007
      %v3028 = vrcp.pop %v3010
      %v3029 = vrcp.pop %v3013
      %v3030 = vrcp.pop %v3016
      %v3031 = vrcp.pop %v3019
      %v3032 = vrcp.pop %v3022
      %v3033 = vrcp.pop %v3025
      %v3034 = vmul.f32 %v2987, %v3026
      %v3035 = vmul.f32 %v2989, %v3027
      %v3036 = vmul.f32 %v2991, %v3028
      %v3037 = vmul.f32 %v2993, %v3029
      %v3038 = vmul.f32 %v2995, %v3030
      %v3039 = vmul.f32 %v2997, %v3031
      %v3040 = vmul.f32 %v2999, %v3032
      %v3041 = vmul.f32 %v3001, %v3033
      %v3042 = vpack.c.bf16 %v3035, %v3034
      %v3043 = vpack.c.bf16 %v3037, %v3036
      %v3044 = vpack.c.bf16 %v3039, %v3038
      %v3045 = vpack.c.bf16 %v3041, %v3040
      %3046 = vrot.lane.b32.xlu0 %v1296, 104
      %v3047 = vpop.permute.xlu0 %3046
      %v3050 = vsel %vm1489, %v3042, 0
      %3052 = vmatprep.subr.bf16.mxu0 0
      %3053 = vmatpush1.bf16.msra.mxu0 %v3047
      %3054 = vmatprep.subr.bf16.mxu0 0
      %3055 = vmatpush1.bf16.msra.mxu0 0
      %3056 = vmatprep.subr.bf16.mxu0 0
      %3057 = vmatpush1.bf16.msra.mxu0 0
      %3058 = vmatprep.subr.bf16.mxu0 0
      %3059 = vmatpush1.bf16.msra.mxu0 0
      %3060 = vmatprep.subr.bf16.mxu0 0
      %3061 = vmatpush1.bf16.msra.mxu0 0
      %3062 = vmatprep.subr.bf16.mxu0 0
      %3063 = vmatpush1.bf16.msra.mxu0 0
      %3064 = vmatprep.subr.bf16.mxu0 0
      %3065 = vmatpush1.bf16.msra.mxu0 0
      %3066 = vmatprep.subr.bf16.mxu0 0
      %3067 = vmatpush1.bf16.msra.mxu0 0
      %3068 = vmatprep.subr.bf16.mxu0 0
      %3069 = vmatpush1.bf16.msra.mxu0 0
      %3070 = vmatprep.subr.bf16.mxu0 0
      %3071 = vmatpush1.bf16.msra.mxu0 0
      %3072 = vmatprep.subr.bf16.mxu0 0
      %3073 = vmatpush1.bf16.msra.mxu0 0
      %3074 = vmatprep.subr.bf16.mxu0 0
      %3075 = vmatpush1.bf16.msra.mxu0 0
      %3076 = vmatprep.subr.bf16.mxu0 0
      %3077 = vmatpush1.bf16.msra.mxu0 0
      %3078 = vmatprep.subr.bf16.mxu0 0
      %3079 = vmatpush1.bf16.msra.mxu0 0
      %3080 = vmatprep.subr.bf16.mxu0 0
      %3081 = vmatpush1.bf16.msra.mxu0 0
      %3082 = vmatprep.subr.bf16.mxu0 0
      %3083 = vmatpush1.bf16.msra.mxu0 0
      %3084 = vmatprep.mubr.bf16.mxu0 0
      %3085 = vmatmul.mubr.bf16.gmra.mrb[0].mxu0 %v3050
      %v3086 = vpop.f32.mrb[0].mxu0
      %v3087 = vadd.f32 0.0, %v3086
      %v3088 = vpop.f32.mrb[0].mxu0
      %v3089 = vpop.f32.mrb[0].mxu0
      %v3090 = vadd.f32 0.0, %v3089
      %v3091 = vpop.f32.mrb[0].mxu0
      %3092 = vdwg.mxu0
      %3093 = vrot.lane.b32.xlu0 %v1297, 104
      %v3094 = vpop.permute.xlu0 %3093
      %v3097 = vsel %vm1489, %v3043, 0
      %3099 = vmatprep.subr.bf16.mxu0 0
      %3100 = vmatpush1.bf16.msra.mxu0 %v3094
      %3101 = vmatprep.subr.bf16.mxu0 0
      %3102 = vmatpush1.bf16.msra.mxu0 0
      %3103 = vmatprep.subr.bf16.mxu0 0
      %3104 = vmatpush1.bf16.msra.mxu0 0
      %3105 = vmatprep.subr.bf16.mxu0 0
      %3106 = vmatpush1.bf16.msra.mxu0 0
      %3107 = vmatprep.subr.bf16.mxu0 0
      %3108 = vmatpush1.bf16.msra.mxu0 0
      %3109 = vmatprep.subr.bf16.mxu0 0
      %3110 = vmatpush1.bf16.msra.mxu0 0
      %3111 = vmatprep.subr.bf16.mxu0 0
      %3112 = vmatpush1.bf16.msra.mxu0 0
      %3113 = vmatprep.subr.bf16.mxu0 0
      %3114 = vmatpush1.bf16.msra.mxu0 0
      %3115 = vmatprep.subr.bf16.mxu0 0
      %3116 = vmatpush1.bf16.msra.mxu0 0
      %3117 = vmatprep.subr.bf16.mxu0 0
      %3118 = vmatpush1.bf16.msra.mxu0 0
      %3119 = vmatprep.subr.bf16.mxu0 0
      %3120 = vmatpush1.bf16.msra.mxu0 0
      %3121 = vmatprep.subr.bf16.mxu0 0
      %3122 = vmatpush1.bf16.msra.mxu0 0
      %3123 = vmatprep.subr.bf16.mxu0 0
      %3124 = vmatpush1.bf16.msra.mxu0 0
      %3125 = vmatprep.subr.bf16.mxu0 0
      %3126 = vmatpush1.bf16.msra.mxu0 0
      %3127 = vmatprep.subr.bf16.mxu0 0
      %3128 = vmatpush1.bf16.msra.mxu0 0
      %3129 = vmatprep.subr.bf16.mxu0 0
      %3130 = vmatpush1.bf16.msra.mxu0 0
      %3131 = vmatprep.mubr.bf16.mxu0 0
      %3132 = vmatmul.mubr.bf16.gmra.mrb[0].mxu0 %v3097
      %v3133 = vpop.f32.mrb[0].mxu0
      %v3134 = vadd.f32 0.0, %v3133
      %v3135 = vpop.f32.mrb[0].mxu0
      %v3136 = vpop.f32.mrb[0].mxu0
      %v3137 = vadd.f32 0.0, %v3136
      %v3138 = vpop.f32.mrb[0].mxu0
      %3139 = vdwg.mxu0
      %3140 = vrot.lane.b32.xlu0 %v1298, 104
      %v3141 = vpop.permute.xlu0 %3140
      %v3144 = vsel %vm1489, %v3044, 0
      %3146 = vmatprep.subr.bf16.mxu0 0
      %3147 = vmatpush1.bf16.msra.mxu0 %v3141
      %3148 = vmatprep.subr.bf16.mxu0 0
      %3149 = vmatpush1.bf16.msra.mxu0 0
      %3150 = vmatprep.subr.bf16.mxu0 0
      %3151 = vmatpush1.bf16.msra.mxu0 0
      %3152 = vmatprep.subr.bf16.mxu0 0
      %3153 = vmatpush1.bf16.msra.mxu0 0
      %3154 = vmatprep.subr.bf16.mxu0 0
      %3155 = vmatpush1.bf16.msra.mxu0 0
      %3156 = vmatprep.subr.bf16.mxu0 0
      %3157 = vmatpush1.bf16.msra.mxu0 0
      %3158 = vmatprep.subr.bf16.mxu0 0
      %3159 = vmatpush1.bf16.msra.mxu0 0
      %3160 = vmatprep.subr.bf16.mxu0 0
      %3161 = vmatpush1.bf16.msra.mxu0 0
      %3162 = vmatprep.subr.bf16.mxu0 0
      %3163 = vmatpush1.bf16.msra.mxu0 0
      %3164 = vmatprep.subr.bf16.mxu0 0
      %3165 = vmatpush1.bf16.msra.mxu0 0
      %3166 = vmatprep.subr.bf16.mxu0 0
      %3167 = vmatpush1.bf16.msra.mxu0 0
      %3168 = vmatprep.subr.bf16.mxu0 0
      %3169 = vmatpush1.bf16.msra.mxu0 0
      %3170 = vmatprep.subr.bf16.mxu0 0
      %3171 = vmatpush1.bf16.msra.mxu0 0
      %3172 = vmatprep.subr.bf16.mxu0 0
      %3173 = vmatpush1.bf16.msra.mxu0 0
      %3174 = vmatprep.subr.bf16.mxu0 0
      %3175 = vmatpush1.bf16.msra.mxu0 0
      %3176 = vmatprep.subr.bf16.mxu0 0
      %3177 = vmatpush1.bf16.msra.mxu0 0
      %3178 = vmatprep.mubr.bf16.mxu0 0
      %3179 = vmatmul.mubr.bf16.gmra.mrb[0].mxu0 %v3144
      %v3180 = vpop.f32.mrb[0].mxu0
      %v3181 = vadd.f32 0.0, %v3180
      %v3182 = vpop.f32.mrb[0].mxu0
      %v3183 = vpop.f32.mrb[0].mxu0
      %v3184 = vadd.f32 0.0, %v3183
      %v3185 = vpop.f32.mrb[0].mxu0
      %3186 = vdwg.mxu0
      %3187 = vrot.lane.b32.xlu0 %v1299, 104
      %v3188 = vpop.permute.xlu0 %3187
      %v3191 = vsel %vm1489, %v3045, 0
      %3193 = vmatprep.subr.bf16.mxu0 0
      %3194 = vmatpush1.bf16.msra.mxu0 %v3188
      %3195 = vmatprep.subr.bf16.mxu0 0
      %3196 = vmatpush1.bf16.msra.mxu0 0
      %3197 = vmatprep.subr.bf16.mxu0 0
      %3198 = vmatpush1.bf16.msra.mxu0 0
      %3199 = vmatprep.subr.bf16.mxu0 0
      %3200 = vmatpush1.bf16.msra.mxu0 0
      %3201 = vmatprep.subr.bf16.mxu0 0
      %3202 = vmatpush1.bf16.msra.mxu0 0
      %3203 = vmatprep.subr.bf16.mxu0 0
      %3204 = vmatpush1.bf16.msra.mxu0 0
      %3205 = vmatprep.subr.bf16.mxu0 0
      %3206 = vmatpush1.bf16.msra.mxu0 0
      %3207 = vmatprep.subr.bf16.mxu0 0
      %3208 = vmatpush1.bf16.msra.mxu0 0
      %3209 = vmatprep.subr.bf16.mxu0 0
      %3210 = vmatpush1.bf16.msra.mxu0 0
      %3211 = vmatprep.subr.bf16.mxu0 0
      %3212 = vmatpush1.bf16.msra.mxu0 0
      %3213 = vmatprep.subr.bf16.mxu0 0
      %3214 = vmatpush1.bf16.msra.mxu0 0
      %3215 = vmatprep.subr.bf16.mxu0 0
      %3216 = vmatpush1.bf16.msra.mxu0 0
      %3217 = vmatprep.subr.bf16.mxu0 0
      %3218 = vmatpush1.bf16.msra.mxu0 0
      %3219 = vmatprep.subr.bf16.mxu0 0
      %3220 = vmatpush1.bf16.msra.mxu0 0
      %3221 = vmatprep.subr.bf16.mxu0 0
      %3222 = vmatpush1.bf16.msra.mxu0 0
      %3223 = vmatprep.subr.bf16.mxu0 0
      %3224 = vmatpush1.bf16.msra.mxu0 0
      %3225 = vmatprep.mubr.bf16.mxu0 0
      %3226 = vmatmul.mubr.bf16.gmra.mrb[0].mxu0 %v3191
      %v3227 = vpop.f32.mrb[0].mxu0
      %v3228 = vadd.f32 0.0, %v3227
      %v3229 = vpop.f32.mrb[0].mxu0
      %v3230 = vpop.f32.mrb[0].mxu0
      %v3231 = vadd.f32 0.0, %v3230
      %v3232 = vpop.f32.mrb[0].mxu0
      %3233 = vdwg.mxu0
      %v3234 = vpack.c.bf16 %v3090, %v3087
      %v3235 = vpack.c.bf16 %v3137, %v3134
      %v3236 = vpack.c.bf16 %v3184, %v3181
      %v3237 = vpack.c.bf16 %v3231, %v3228
      %3242 = vrot.lane.b32.xlu0 %v2258, 8
      %v3243 = vpop.permute.xlu0 %3242
      %3244 = vrot.lane.b32.xlu0 %v2259, 8
      %v3245 = vpop.permute.xlu0 %3244
      %3246 = vrot.lane.b32.xlu0 %v2260, 8
      %v3247 = vpop.permute.xlu0 %3246
      %3248 = vrot.lane.b32.xlu0 %v2261, 8
      %v3249 = vpop.permute.xlu0 %3248
      %3254 = vrot.lane.b32.xlu0 %v2746, 16
      %v3255 = vpop.permute.xlu0 %3254
      %3256 = vrot.lane.b32.xlu0 %v2747, 16
      %v3257 = vpop.permute.xlu0 %3256
      %3258 = vrot.lane.b32.xlu0 %v2748, 16
      %v3259 = vpop.permute.xlu0 %3258
      %3260 = vrot.lane.b32.xlu0 %v2749, 16
      %v3261 = vpop.permute.xlu0 %3260
      %3266 = vrot.lane.b32.xlu0 %v3234, 24
      %v3267 = vpop.permute.xlu0 %3266
      %3268 = vrot.lane.b32.xlu0 %v3235, 24
      %v3269 = vpop.permute.xlu0 %3268
      %3270 = vrot.lane.b32.xlu0 %v3236, 24
      %v3271 = vpop.permute.xlu0 %3270
      %3272 = vrot.lane.b32.xlu0 %v3237, 24
      %v3273 = vpop.permute.xlu0 %3272
      %v3276 = vsel %vm1300, %v1758, %v3243
      %v3279 = vsel %vm1300, %v1759, %v3245
      %v3282 = vsel %vm1300, %v1760, %v3247
      %v3285 = vsel %vm1300, %v1761, %v3249
      %v3287 = vsel %vm1489, %v3276, %v3255
      %v3289 = vsel %vm1489, %v3279, %v3257
      %v3291 = vsel %vm1489, %v3282, %v3259
      %v3293 = vsel %vm1489, %v3285, %v3261
      %vm3294 = vcmask 195584
      %v3296 = vsel %vm3294, %v3287, %v3267
      %v3298 = vsel %vm3294, %v3289, %v3269
      %v3300 = vsel %vm3294, %v3291, %v3271
      %v3302 = vsel %vm3294, %v3293, %v3273
      %v3303 = vld [vmem:[%s10] sm:$0xf]
      %v3304 = vld [vmem:[%s10 + $0x4] sm:$0xf]
      %v3305 = vld [vmem:[%s10 + $0x8] sm:$0xf]
      %v3306 = vld [vmem:[%s10 + $0xc] sm:$0xf]
      %v3311 = vunpack.c.l.b16 %v3303
      %v3312 = vunpack.c.l.b16 %v3304
      %v3313 = vunpack.c.l.b16 %v3305
      %v3314 = vunpack.c.l.b16 %v3306
      %v3315 = vpack.c.b16 %v3312, %v3311
      %v3316 = vpack.c.b16 %v3314, %v3313
      %v3319 = vsel %vm721, %v3296, 0
      %v3321 = vsel %vm721, %v3298, 0
      %v3323 = vsel %vm721, %v3300, 0
      %v3325 = vsel %vm721, %v3302, 0
      %3327 = vmatprep.subr.bf16.mxu0 0
      %3328 = vmatpush1.bf16.msra.mxu0 %v3315
      %3329 = vmatprep.subr.bf16.mxu0 0
      %3330 = vmatpush1.bf16.msra.mxu0 %v3316
      %3331 = vmatprep.subr.bf16.mxu0 0
      %3332 = vmatpush1.bf16.msra.mxu0 0
      %3333 = vmatprep.subr.bf16.mxu0 0
      %3334 = vmatpush1.bf16.msra.mxu0 0
      %3335 = vmatprep.subr.bf16.mxu0 0
      %3336 = vmatpush1.bf16.msra.mxu0 0
      %3337 = vmatprep.subr.bf16.mxu0 0
      %3338 = vmatpush1.bf16.msra.mxu0 0
      %3339 = vmatprep.subr.bf16.mxu0 0
      %3340 = vmatpush1.bf16.msra.mxu0 0
      %3341 = vmatprep.subr.bf16.mxu0 0
      %3342 = vmatpush1.bf16.msra.mxu0 0
      %3343 = vmatprep.subr.bf16.mxu0 0
      %3344 = vmatpush1.bf16.msra.mxu0 0
      %3345 = vmatprep.subr.bf16.mxu0 0
      %3346 = vmatpush1.bf16.msra.mxu0 0
      %3347 = vmatprep.subr.bf16.mxu0 0
      %3348 = vmatpush1.bf16.msra.mxu0 0
      %3349 = vmatprep.subr.bf16.mxu0 0
      %3350 = vmatpush1.bf16.msra.mxu0 0
      %3351 = vmatprep.subr.bf16.mxu0 0
      %3352 = vmatpush1.bf16.msra.mxu0 0
      %3353 = vmatprep.subr.bf16.mxu0 0
      %3354 = vmatpush1.bf16.msra.mxu0 0
      %3355 = vmatprep.subr.bf16.mxu0 0
      %3356 = vmatpush1.bf16.msra.mxu0 0
      %3357 = vmatprep.subr.bf16.mxu0 0
      %3358 = vmatpush1.bf16.msra.mxu0 0
      %3359 = vmatprep.mubr.bf16.mxu0 0
      %3360 = vmatmul.mubr.bf16.gmra.mrb[0].mxu0 %v3319
      %v3361 = vpop.f32.mrb[0].mxu0
      %v3362 = vadd.f32 %v596, %v3361
      %v3363 = vpop.f32.mrb[0].mxu0
      %v3364 = vpop.f32.mrb[0].mxu0
      %v3365 = vadd.f32 %v599, %v3364
      %v3366 = vpop.f32.mrb[0].mxu0
      %3367 = vmatprep.mubr.bf16.mxu0 0
      %3368 = vmatmul.mubr.bf16.gmra.mrb[0].mxu0 %v3321
      %v3369 = vpop.f32.mrb[0].mxu0
      %v3370 = vadd.f32 %v604, %v3369
      %v3371 = vpop.f32.mrb[0].mxu0
      %v3372 = vpop.f32.mrb[0].mxu0
      %v3373 = vadd.f32 %v607, %v3372
      %v3374 = vpop.f32.mrb[0].mxu0
      %3375 = vmatprep.mubr.bf16.mxu0 0
      %3376 = vmatmul.mubr.bf16.gmra.mrb[0].mxu0 %v3323
      %v3377 = vpop.f32.mrb[0].mxu0
      %v3378 = vadd.f32 %v612, %v3377
      %v3379 = vpop.f32.mrb[0].mxu0
      %v3380 = vpop.f32.mrb[0].mxu0
      %v3381 = vadd.f32 %v615, %v3380
      %v3382 = vpop.f32.mrb[0].mxu0
      %3383 = vmatprep.mubr.bf16.mxu0 0
      %3384 = vmatmul.mubr.bf16.gmra.mrb[0].mxu0 %v3325
      %v3385 = vpop.f32.mrb[0].mxu0
      %v3386 = vadd.f32 %v620, %v3385
      %v3387 = vpop.f32.mrb[0].mxu0
      %v3388 = vpop.f32.mrb[0].mxu0
      %v3389 = vadd.f32 %v623, %v3388
      %v3390 = vpop.f32.mrb[0].mxu0
      %3391 = vdwg.mxu0
      %v3392 = vld [vmem:[%s11] sm:$0x1]
      %v3393 = vld [vmem:[%s12] sm:$0x1]
      %v3394 = vsel %vm721, %v3362, 0.0
      %3395 = vadd.xlane.f32.xlu0 %v3394
      %v3396 = vpop.xlane.xlu0 %3395
      %v3397 = vsel %vm721, %v3365, 0.0
      %3398 = vadd.xlane.f32.xlu0 %v3397
      %v3399 = vpop.xlane.xlu0 %3398
      %v3400 = vsel %vm721, %v3370, 0.0
      %3401 = vadd.xlane.f32.xlu0 %v3400
      %v3402 = vpop.xlane.xlu0 %3401
      %v3403 = vsel %vm721, %v3373, 0.0
      %3404 = vadd.xlane.f32.xlu0 %v3403
      %v3405 = vpop.xlane.xlu0 %3404
      %v3406 = vsel %vm721, %v3378, 0.0
      %3407 = vadd.xlane.f32.xlu0 %v3406
      %v3408 = vpop.xlane.xlu0 %3407
      %v3409 = vsel %vm721, %v3381, 0.0
      %3410 = vadd.xlane.f32.xlu0 %v3409
      %v3411 = vpop.xlane.xlu0 %3410
      %v3412 = vsel %vm721, %v3386, 0.0
      %3413 = vadd.xlane.f32.xlu0 %v3412
      %v3414 = vpop.xlane.xlu0 %3413
      %v3415 = vsel %vm721, %v3389, 0.0
      %3416 = vadd.xlane.f32.xlu0 %v3415
      %v3417 = vpop.xlane.xlu0 %3416
      %v3418 = vmul.f32 %v3396, %v746
      %v3419 = vmul.f32 %v3399, %v746
      %v3420 = vmul.f32 %v3402, %v746
      %v3421 = vmul.f32 %v3405, %v746
      %v3422 = vmul.f32 %v3408, %v746
      %v3423 = vmul.f32 %v3411, %v746
      %v3424 = vmul.f32 %v3414, %v746
      %v3425 = vmul.f32 %v3417, %v746
      %v3426 = vsub.f32 %v3362, %v3418
      %v3427 = vsub.f32 %v3365, %v3419
      %v3428 = vsub.f32 %v3370, %v3420
      %v3429 = vsub.f32 %v3373, %v3421
      %v3430 = vsub.f32 %v3378, %v3422
      %v3431 = vsub.f32 %v3381, %v3423
      %v3432 = vsub.f32 %v3386, %v3424
      %v3433 = vsub.f32 %v3389, %v3425
      %v3434 = vmul.f32 %v3426, %v3426
      %v3435 = vmul.f32 %v3427, %v3427
      %v3436 = vmul.f32 %v3428, %v3428
      %v3437 = vmul.f32 %v3429, %v3429
      %v3438 = vmul.f32 %v3430, %v3430
      %v3439 = vmul.f32 %v3431, %v3431
      %v3440 = vmul.f32 %v3432, %v3432
      %v3441 = vmul.f32 %v3433, %v3433
      %v3442 = vsel %vm721, %v3434, 0.0
      %3443 = vadd.xlane.f32.xlu0 %v3442
      %v3444 = vpop.xlane.xlu0 %3443
      %v3445 = vsel %vm721, %v3435, 0.0
      %3446 = vadd.xlane.f32.xlu0 %v3445
      %v3447 = vpop.xlane.xlu0 %3446
      %v3448 = vsel %vm721, %v3436, 0.0
      %3449 = vadd.xlane.f32.xlu0 %v3448
      %v3450 = vpop.xlane.xlu0 %3449
      %v3451 = vsel %vm721, %v3437, 0.0
      %3452 = vadd.xlane.f32.xlu0 %v3451
      %v3453 = vpop.xlane.xlu0 %3452
      %v3454 = vsel %vm721, %v3438, 0.0
      %3455 = vadd.xlane.f32.xlu0 %v3454
      %v3456 = vpop.xlane.xlu0 %3455
      %v3457 = vsel %vm721, %v3439, 0.0
      %3458 = vadd.xlane.f32.xlu0 %v3457
      %v3459 = vpop.xlane.xlu0 %3458
      %v3460 = vsel %vm721, %v3440, 0.0
      %3461 = vadd.xlane.f32.xlu0 %v3460
      %v3462 = vpop.xlane.xlu0 %3461
      %v3463 = vsel %vm721, %v3441, 0.0
      %3464 = vadd.xlane.f32.xlu0 %v3463
      %v3465 = vpop.xlane.xlu0 %3464
      %v3466 = vmul.f32 %v3444, %v746
      %v3467 = vmul.f32 %v3447, %v746
      %v3468 = vmul.f32 %v3450, %v746
      %v3469 = vmul.f32 %v3453, %v746
      %v3470 = vmul.f32 %v3456, %v746
      %v3471 = vmul.f32 %v3459, %v746
      %v3472 = vmul.f32 %v3462, %v746
      %v3473 = vmul.f32 %v3465, %v746
      %v3474 = vadd.f32 %v3466, 1e-05
      %v3475 = vadd.f32 %v3467, 1e-05
      %v3476 = vadd.f32 %v3468, 1e-05
      %v3477 = vadd.f32 %v3469, 1e-05
      %v3478 = vadd.f32 %v3470, 1e-05
      %v3479 = vadd.f32 %v3471, 1e-05
      %v3480 = vadd.f32 %v3472, 1e-05
      %v3481 = vadd.f32 %v3473, 1e-05
      %v3482 = vrsqrt.pop %v3474
      %v3483 = vrsqrt.pop %v3475
      %v3484 = vrsqrt.pop %v3476
      %v3485 = vrsqrt.pop %v3477
      %v3486 = vrsqrt.pop %v3478
      %v3487 = vrsqrt.pop %v3479
      %v3488 = vrsqrt.pop %v3480
      %v3489 = vrsqrt.pop %v3481
      %v3490 = vmul.f32 %v3426, %v3482
      %v3491 = vmul.f32 %v3427, %v3483
      %v3492 = vmul.f32 %v3428, %v3484
      %v3493 = vmul.f32 %v3429, %v3485
      %v3494 = vmul.f32 %v3430, %v3486
      %v3495 = vmul.f32 %v3431, %v3487
      %v3496 = vmul.f32 %v3432, %v3488
      %v3497 = vmul.f32 %v3433, %v3489
      %v3499 = vlaneseq
      %v3500 = vshrl.u32 %v3499, 7
      %v3501 = vsub.s32 0, %v3500
      %v3502 = vrot.slane %v3392, %v3501
      %v3504 = vmul.f32 %v3490, %v3502
      %v3505 = vmul.f32 %v3491, %v3502
      %v3506 = vmul.f32 %v3492, %v3502
      %v3507 = vmul.f32 %v3493, %v3502
      %v3508 = vmul.f32 %v3494, %v3502
      %v3509 = vmul.f32 %v3495, %v3502
      %v3510 = vmul.f32 %v3496, %v3502
      %v3511 = vmul.f32 %v3497, %v3502
      %v3513 = vlaneseq
      %v3514 = vshrl.u32 %v3513, 7
      %v3515 = vsub.s32 0, %v3514
      %v3516 = vrot.slane %v3393, %v3515
      %v3518 = vadd.f32 %v3504, %v3516
      %v3519 = vadd.f32 %v3505, %v3516
      %v3520 = vadd.f32 %v3506, %v3516
      %v3521 = vadd.f32 %v3507, %v3516
      %v3522 = vadd.f32 %v3508, %v3516
      %v3523 = vadd.f32 %v3509, %v3516
      %v3524 = vadd.f32 %v3510, %v3516
      %v3525 = vadd.f32 %v3511, %v3516
      %v3526 = vpack.c.bf16 %v3519, %v3518
      %v3527 = vpack.c.bf16 %v3521, %v3520
      %v3528 = vpack.c.bf16 %v3523, %v3522
      %v3529 = vpack.c.bf16 %v3525, %v3524
      %v3530 = vld [vmem:[%s13] sm:$0xf]
      %v3531 = vld [vmem:[%s13 + $0x4] sm:$0xf]
      %v3532 = vld [vmem:[%s13 + $0x8] sm:$0xf]
      %v3533 = vld [vmem:[%s13 + $0xc] sm:$0xf]
      %v3538 = vunpack.c.l.b16 %v3530
      %v3539 = vunpack.c.l.b16 %v3531
      %v3540 = vunpack.c.l.b16 %v3532
      %v3541 = vunpack.c.l.b16 %v3533
      %v3542 = vpack.c.b16 %v3539, %v3538
      %v3543 = vpack.c.b16 %v3541, %v3540
      %v3547 = vsel %vm721, %v3526, 0
      %v3550 = vsel %vm721, %v3527, 0
      %v3553 = vsel %vm721, %v3528, 0
      %v3556 = vsel %vm721, %v3529, 0
      %3558 = vmatprep.subr.bf16.mxu0 0
      %3559 = vmatpush1.bf16.msra.mxu0 %v3542
      %3560 = vmatprep.subr.bf16.mxu0 0
      %3561 = vmatpush1.bf16.msra.mxu0 %v3543
      %3562 = vmatprep.subr.bf16.mxu0 0
      %3563 = vmatpush1.bf16.msra.mxu0 0
      %3564 = vmatprep.subr.bf16.mxu0 0
      %3565 = vmatpush1.bf16.msra.mxu0 0
      %3566 = vmatprep.subr.bf16.mxu0 0
      %3567 = vmatpush1.bf16.msra.mxu0 0
      %3568 = vmatprep.subr.bf16.mxu0 0
      %3569 = vmatpush1.bf16.msra.mxu0 0
      %3570 = vmatprep.subr.bf16.mxu0 0
      %3571 = vmatpush1.bf16.msra.mxu0 0
      %3572 = vmatprep.subr.bf16.mxu0 0
      %3573 = vmatpush1.bf16.msra.mxu0 0
      %3574 = vmatprep.subr.bf16.mxu0 0
      %3575 = vmatpush1.bf16.msra.mxu0 0
      %3576 = vmatprep.subr.bf16.mxu0 0
      %3577 = vmatpush1.bf16.msra.mxu0 0
      %3578 = vmatprep.subr.bf16.mxu0 0
      %3579 = vmatpush1.bf16.msra.mxu0 0
      %3580 = vmatprep.subr.bf16.mxu0 0
      %3581 = vmatpush1.bf16.msra.mxu0 0
      %3582 = vmatprep.subr.bf16.mxu0 0
      %3583 = vmatpush1.bf16.msra.mxu0 0
      %3584 = vmatprep.subr.bf16.mxu0 0
      %3585 = vmatpush1.bf16.msra.mxu0 0
      %3586 = vmatprep.subr.bf16.mxu0 0
      %3587 = vmatpush1.bf16.msra.mxu0 0
      %3588 = vmatprep.subr.bf16.mxu0 0
      %3589 = vmatpush1.bf16.msra.mxu0 0
      %3590 = vmatprep.mubr.bf16.mxu0 0
      %3591 = vmatmul.mubr.bf16.gmra.mrb[0].mxu0 %v3547
      %v3592 = vpop.f32.mrb[0].mxu0
      %v3593 = vadd.f32 0.0, %v3592
      %v3594 = vpop.f32.mrb[0].mxu0
      %v3595 = vpop.f32.mrb[0].mxu0
      %v3596 = vadd.f32 0.0, %v3595
      %v3597 = vpop.f32.mrb[0].mxu0
      %3598 = vmatprep.mubr.bf16.mxu0 0
      %3599 = vmatmul.mubr.bf16.gmra.mrb[0].mxu0 %v3550
      %v3600 = vpop.f32.mrb[0].mxu0
      %v3601 = vadd.f32 0.0, %v3600
      %v3602 = vpop.f32.mrb[0].mxu0
      %v3603 = vpop.f32.mrb[0].mxu0
      %v3604 = vadd.f32 0.0, %v3603
      %v3605 = vpop.f32.mrb[0].mxu0
      %3606 = vmatprep.mubr.bf16.mxu0 0
      %3607 = vmatmul.mubr.bf16.gmra.mrb[0].mxu0 %v3553
      %v3608 = vpop.f32.mrb[0].mxu0
      %v3609 = vadd.f32 0.0, %v3608
      %v3610 = vpop.f32.mrb[0].mxu0
      %v3611 = vpop.f32.mrb[0].mxu0
      %v3612 = vadd.f32 0.0, %v3611
      %v3613 = vpop.f32.mrb[0].mxu0
      %3614 = vmatprep.mubr.bf16.mxu0 0
      %3615 = vmatmul.mubr.bf16.gmra.mrb[0].mxu0 %v3556
      %v3616 = vpop.f32.mrb[0].mxu0
      %v3617 = vadd.f32 0.0, %v3616
      %v3618 = vpop.f32.mrb[0].mxu0
      %v3619 = vpop.f32.mrb[0].mxu0
      %v3620 = vadd.f32 0.0, %v3619
      %v3621 = vpop.f32.mrb[0].mxu0
      %3622 = vdwg.mxu0
      %v3623 = vmax.f32 %v3593, 0.0
      %v3624 = vmax.f32 %v3596, 0.0
      %v3625 = vmax.f32 %v3601, 0.0
      %v3626 = vmax.f32 %v3604, 0.0
      %v3627 = vmax.f32 %v3609, 0.0
      %v3628 = vmax.f32 %v3612, 0.0
      %v3629 = vmax.f32 %v3617, 0.0
      %v3630 = vmax.f32 %v3620, 0.0
      %v3631 = vpack.c.bf16 %v3624, %v3623
      %v3632 = vpack.c.bf16 %v3626, %v3625
      %v3633 = vpack.c.bf16 %v3628, %v3627
      %v3634 = vpack.c.bf16 %v3630, %v3629
      %v3635 = vld [vmem:[%s14] sm:$0xf]
      %v3636 = vld [vmem:[%s14 + $0x4] sm:$0xf]
      %v3637 = vld [vmem:[%s14 + $0x8] sm:$0xf]
      %v3638 = vld [vmem:[%s14 + $0xc] sm:$0xf]
      %v3639 = vld [vmem:[%s14 + $0x10] sm:$0xf]
      %v3640 = vld [vmem:[%s14 + $0x14] sm:$0xf]
      %v3641 = vld [vmem:[%s14 + $0x18] sm:$0xf]
      %v3642 = vld [vmem:[%s14 + $0x1c] sm:$0xf]
      %v3651 = vunpack.c.l.b16 %v3635
      %v3652 = vunpack.c.l.b16 %v3636
      %v3653 = vunpack.c.l.b16 %v3637
      %v3654 = vunpack.c.l.b16 %v3638
      %v3655 = vunpack.c.l.b16 %v3639
      %v3656 = vunpack.c.l.b16 %v3640
      %v3657 = vunpack.c.l.b16 %v3641
      %v3658 = vunpack.c.l.b16 %v3642
      %v3659 = vpack.c.b16 %v3652, %v3651
      %v3660 = vpack.c.b16 %v3654, %v3653
      %v3661 = vpack.c.b16 %v3656, %v3655
      %v3662 = vpack.c.b16 %v3658, %v3657
      %vm3667 = vcmask 523264
      %v3669 = vsel %vm3667, %v3631, 0
      %v3672 = vsel %vm3667, %v3632, 0
      %v3675 = vsel %vm3667, %v3633, 0
      %v3678 = vsel %vm3667, %v3634, 0
      %3680 = vmatprep.subr.bf16.mxu0 0
      %3681 = vmatpush1.bf16.msra.mxu0 %v3659
      %3682 = vmatprep.subr.bf16.mxu0 0
      %3683 = vmatpush1.bf16.msra.mxu0 %v3660
      %3684 = vmatprep.subr.bf16.mxu0 0
      %3685 = vmatpush1.bf16.msra.mxu0 %v3661
      %3686 = vmatprep.subr.bf16.mxu0 0
      %3687 = vmatpush1.bf16.msra.mxu0 %v3662
      %3688 = vmatprep.subr.bf16.mxu0 0
      %3689 = vmatpush1.bf16.msra.mxu0 0
      %3690 = vmatprep.subr.bf16.mxu0 0
      %3691 = vmatpush1.bf16.msra.mxu0 0
      %3692 = vmatprep.subr.bf16.mxu0 0
      %3693 = vmatpush1.bf16.msra.mxu0 0
      %3694 = vmatprep.subr.bf16.mxu0 0
      %3695 = vmatpush1.bf16.msra.mxu0 0
      %3696 = vmatprep.subr.bf16.mxu0 0
      %3697 = vmatpush1.bf16.msra.mxu0 0
      %3698 = vmatprep.subr.bf16.mxu0 0
      %3699 = vmatpush1.bf16.msra.mxu0 0
      %3700 = vmatprep.subr.bf16.mxu0 0
      %3701 = vmatpush1.bf16.msra.mxu0 0
      %3702 = vmatprep.subr.bf16.mxu0 0
      %3703 = vmatpush1.bf16.msra.mxu0 0
      %3704 = vmatprep.subr.bf16.mxu0 0
      %3705 = vmatpush1.bf16.msra.mxu0 0
      %3706 = vmatprep.subr.bf16.mxu0 0
      %3707 = vmatpush1.bf16.msra.mxu0 0
      %3708 = vmatprep.subr.bf16.mxu0 0
      %3709 = vmatpush1.bf16.msra.mxu0 0
      %3710 = vmatprep.subr.bf16.mxu0 0
      %3711 = vmatpush1.bf16.msra.mxu0 0
      %3712 = vmatprep.mubr.bf16.mxu0 0
      %3713 = vmatmul.mubr.bf16.gmra.mrb[0].mxu0 %v3669
      %v3714 = vpop.f32.mrb[0].mxu0
      %v3715 = vadd.f32 %v3362, %v3714
      %v3716 = vpop.f32.mrb[0].mxu0
      %v3717 = vpop.f32.mrb[0].mxu0
      %v3718 = vadd.f32 %v3365, %v3717
      %v3719 = vpop.f32.mrb[0].mxu0
      %3720 = vmatprep.mubr.bf16.mxu0 0
      %3721 = vmatmul.mubr.bf16.gmra.mrb[0].mxu0 %v3672
      %v3722 = vpop.f32.mrb[0].mxu0
      %v3723 = vadd.f32 %v3370, %v3722
      %v3724 = vpop.f32.mrb[0].mxu0
      %v3725 = vpop.f32.mrb[0].mxu0
      %v3726 = vadd.f32 %v3373, %v3725
      %v3727 = vpop.f32.mrb[0].mxu0
      %3728 = vmatprep.mubr.bf16.mxu0 0
      %3729 = vmatmul.mubr.bf16.gmra.mrb[0].mxu0 %v3675
      %v3730 = vpop.f32.mrb[0].mxu0
      %v3731 = vadd.f32 %v3378, %v3730
      %v3732 = vpop.f32.mrb[0].mxu0
      %v3733 = vpop.f32.mrb[0].mxu0
      %v3734 = vadd.f32 %v3381, %v3733
      %v3735 = vpop.f32.mrb[0].mxu0
      %3736 = vmatprep.mubr.bf16.mxu0 0
      %3737 = vmatmul.mubr.bf16.gmra.mrb[0].mxu0 %v3678
      %v3738 = vpop.f32.mrb[0].mxu0
      %v3739 = vadd.f32 %v3386, %v3738
      %v3740 = vpop.f32.mrb[0].mxu0
      %v3741 = vpop.f32.mrb[0].mxu0
      %v3742 = vadd.f32 %v3389, %v3741
      %v3743 = vpop.f32.mrb[0].mxu0
      %3744 = vdwg.mxu0
      %v3745 = vpack.c.bf16 %v3718, %v3715
      %v3746 = vpack.c.bf16 %v3726, %v3723
      %v3747 = vpack.c.bf16 %v3734, %v3731
      %v3748 = vpack.c.bf16 %v3742, %v3739
      %v3749 = vld [vmem:[%s15] sm:$0xf]
      %v3750 = vld [vmem:[%s15 + $0x4] sm:$0xf]
      %v3751 = vld [vmem:[%s15 + $0x8] sm:$0xf]
      %v3752 = vld [vmem:[%s15 + $0xc] sm:$0xf]
      %v3757 = vunpack.c.l.b16 %v3749
      %v3758 = vunpack.c.l.b16 %v3750
      %v3759 = vunpack.c.l.b16 %v3751
      %v3760 = vunpack.c.l.b16 %v3752
      %v3761 = vpack.c.b16 %v3758, %v3757
      %v3762 = vpack.c.b16 %v3760, %v3759
      %v3766 = vsel %vm721, %v3745, 0
      %v3769 = vsel %vm721, %v3746, 0
      %v3772 = vsel %vm721, %v3747, 0
      %v3775 = vsel %vm721, %v3748, 0
      %3777 = vmatprep.subr.bf16.mxu0 0
      %3778 = vmatpush1.bf16.msra.mxu0 %v3761
      %3779 = vmatprep.subr.bf16.mxu0 0
      %3780 = vmatpush1.bf16.msra.mxu0 %v3762
      %3781 = vmatprep.subr.bf16.mxu0 0
      %3782 = vmatpush1.bf16.msra.mxu0 0
      %3783 = vmatprep.subr.bf16.mxu0 0
      %3784 = vmatpush1.bf16.msra.mxu0 0
      %3785 = vmatprep.subr.bf16.mxu0 0
      %3786 = vmatpush1.bf16.msra.mxu0 0
      %3787 = vmatprep.subr.bf16.mxu0 0
      %3788 = vmatpush1.bf16.msra.mxu0 0
      %3789 = vmatprep.subr.bf16.mxu0 0
      %3790 = vmatpush1.bf16.msra.mxu0 0
      %3791 = vmatprep.subr.bf16.mxu0 0
      %3792 = vmatpush1.bf16.msra.mxu0 0
      %3793 = vmatprep.subr.bf16.mxu0 0
      %3794 = vmatpush1.bf16.msra.mxu0 0
      %3795 = vmatprep.subr.bf16.mxu0 0
      %3796 = vmatpush1.bf16.msra.mxu0 0
      %3797 = vmatprep.subr.bf16.mxu0 0
      %3798 = vmatpush1.bf16.msra.mxu0 0
      %3799 = vmatprep.subr.bf16.mxu0 0
      %3800 = vmatpush1.bf16.msra.mxu0 0
      %3801 = vmatprep.subr.bf16.mxu0 0
      %3802 = vmatpush1.bf16.msra.mxu0 0
      %3803 = vmatprep.subr.bf16.mxu0 0
      %3804 = vmatpush1.bf16.msra.mxu0 0
      %3805 = vmatprep.subr.bf16.mxu0 0
      %3806 = vmatpush1.bf16.msra.mxu0 0
      %3807 = vmatprep.subr.bf16.mxu0 0
      %3808 = vmatpush1.bf16.msra.mxu0 0
      %3809 = vmatprep.mubr.bf16.mxu0 0
      %3810 = vmatmul.mubr.bf16.gmra.mrb[0].mxu0 %v3766
      %v3811 = vpop.f32.mrb[0].mxu0
      %v3812 = vadd.f32 0.0, %v3811
      %v3813 = vpop.f32.mrb[0].mxu0
      %v3814 = vpop.f32.mrb[0].mxu0
      %v3815 = vadd.f32 0.0, %v3814
      %v3816 = vpop.f32.mrb[0].mxu0
      %3817 = vmatprep.mubr.bf16.mxu0 0
      %3818 = vmatmul.mubr.bf16.gmra.mrb[0].mxu0 %v3769
      %v3819 = vpop.f32.mrb[0].mxu0
      %v3820 = vadd.f32 0.0, %v3819
      %v3821 = vpop.f32.mrb[0].mxu0
      %v3822 = vpop.f32.mrb[0].mxu0
      %v3823 = vadd.f32 0.0, %v3822
      %v3824 = vpop.f32.mrb[0].mxu0
      %3825 = vmatprep.mubr.bf16.mxu0 0
      %3826 = vmatmul.mubr.bf16.gmra.mrb[0].mxu0 %v3772
      %v3827 = vpop.f32.mrb[0].mxu0
      %v3828 = vadd.f32 0.0, %v3827
      %v3829 = vpop.f32.mrb[0].mxu0
      %v3830 = vpop.f32.mrb[0].mxu0
      %v3831 = vadd.f32 0.0, %v3830
      %v3832 = vpop.f32.mrb[0].mxu0
      %3833 = vmatprep.mubr.bf16.mxu0 0
      %3834 = vmatmul.mubr.bf16.gmra.mrb[0].mxu0 %v3775
      %v3835 = vpop.f32.mrb[0].mxu0
      %v3836 = vadd.f32 0.0, %v3835
      %v3837 = vpop.f32.mrb[0].mxu0
      %v3838 = vpop.f32.mrb[0].mxu0
      %v3839 = vadd.f32 0.0, %v3838
      %v3840 = vpop.f32.mrb[0].mxu0
      %3841 = vdwg.mxu0
      %v3842 = vsel %vm544, %v3812, %v531
      %v3843 = vsel %vm544, %v3815, %v532
      %v3844 = vsel %vm544, %v3820, %v533
      %v3845 = vsel %vm544, %v3823, %v534
      %v3846 = vsel %vm544, %v3828, %v535
      %v3847 = vsel %vm544, %v3831, %v536
      %v3848 = vsel %vm544, %v3836, %v537
      %v3849 = vsel %vm544, %v3839, %v538
      %3850 = vst.msk [vmem:[%s528] sm:$0xff] %vm1300, %v3842
      %3851 = vst.msk [vmem:[%s528 + $0x8] sm:$0xff] %vm1300, %v3843
      %3852 = vst.msk [vmem:[%s528 + $0x10] sm:$0xff] %vm1300, %v3844
      %3853 = vst.msk [vmem:[%s528 + $0x18] sm:$0xff] %vm1300, %v3845
      %3854 = vst.msk [vmem:[%s528 + $0x20] sm:$0xff] %vm1300, %v3846
      %3855 = vst.msk [vmem:[%s528 + $0x28] sm:$0xff] %vm1300, %v3847
      %3856 = vst.msk [vmem:[%s528 + $0x30] sm:$0xff] %vm1300, %v3848
      %3857 = vst.msk [vmem:[%s528 + $0x38] sm:$0xff] %vm1300, %v3849
      %s3858 = smul.u32 4, %s27
      %p3859 = scmp.lt.s32.totalorder %s3858, 7
      %s3860 = scalar_select %p3859, %s3858, 7
      %s3861 = smul.addr %s3860, 2
      %s3862 = smul.addr %s3861, 8
      %s3863 = scalar_lea.vmem %s16, %s3862
      // Predicated region
      $region85: #{sa_epi_cross_attention_trans.1} parent=83 // pred_check
        %p3864 = pneg %p386
      $region86: #{sa_epi_cross_attention_trans.1} parent=83 // pred_check_branch
        %3866 = sbr.rel (%p3864) target = $region88
      $region87: #{sa_epi_cross_attention_trans.1} parent=83 // pred_region
        %s3867 = smul.u32 4, %s27
      $region88: #{sa_epi_cross_attention_trans.1} parent=83 // pred_fallthru
        _
    $region84: #{sa_epi_cross_attention_trans.1} parent=5 // pred_fallthru
      _
    %p3868 = scmp.le.s32.totalorder 2, %s22
    // Predicated region
    $region89: #{sa_epi_cross_attention_trans.1} parent=5 // pred_check
      %p3869 = pneg %p3868
    $region90: #{sa_epi_cross_attention_trans.1} parent=5 // pred_check_branch
      %3871 = sbr.rel (%p3869) target = $region92
    $region91: #{sa_epi_cross_attention_trans.1} parent=5 // pred_region
      %s3872 = ssub.s32 %s22, 2
      // Predicated region
      $region93: #{sa_epi_cross_attention_trans.1} parent=91 // pred_check
        %p3873 = pneg %p392
      $region94: #{sa_epi_cross_attention_trans.1} parent=91 // pred_check_branch
        %3875 = sbr.rel (%p3873) target = $region96
      $region95: #{sa_epi_cross_attention_trans.1} parent=91 // pred_region
        %s3876 = smul.u32 4, %s28
        %p3877 = scmp.lt.s32.totalorder %s3876, 7
        %s3878 = scalar_select %p3877, %s3876, 7
        %s3879 = smul.addr %s3878, 2
        %s3880 = smul.addr %s3879, 8
        %s3881 = scalar_lea.vmem %s16, %s3880
      $region96: #{sa_epi_cross_attention_trans.1} parent=91 // pred_fallthru
        _
    $region92: #{sa_epi_cross_attention_trans.1} parent=5 // pred_fallthru
      _
  $region6: #{sa_epi_cross_attention_trans.1} parent=0 // loop_footer
    %s26 = sadd.s32 1, %s22
  $region7: #{sa_epi_cross_attention_trans.1} parent=0 // loop_footer_branch
    %21 = sbr.rel target = $region3
  $region8: #{sa_epi_cross_attention_trans.1} parent=0 // loop_exit
    _

</llo_original>
